<compile_context>
chip_gen: v6e
topology: v6e:2x2x1
jax: 0.10.0
libtpu: 0.0.40
codegen_flags: <defaults>
</compile_context>

<pallas_src>
from functools import partial

import jax
import jax.numpy as jnp
from jax.experimental import pallas as pl
from jax.experimental.pallas import tpu as pltpu

LANE = 128


def _round_up(x, m):
    return ((x + m - 1) // m) * m


def _pick_tile(M, cap=512, mult=16):
    """Largest multiple-of-`mult` divisor of M <= cap that leaves >=2 grid steps
    (v7x megacore / pipelining).  Graceful fallbacks; never an illegal block."""
    hi = min(cap, M // 2)
    hi -= hi % mult
    for t in range(hi, mult - 1, -mult):
        if M % t == 0:
            return t
    hi = min(cap, M)
    hi -= hi % 8
    for t in range(hi, 7, -8):
        if M % t == 0:
            return t
    return M


def _pick_group_tile(G, rows_per_group, cap_rows=512):
    """Divisor tg of G: prefer >=2 grid steps with an output tile of tg*rows_per_group rows
    that is a multiple of 8 (sublane-aligned stores), as large as possible under cap."""
    best = None
    for tg in range(1, G + 1):
        if G % tg:
            continue
        rows = tg * rows_per_group
        if rows > cap_rows:
            break
        if G // tg >= 2 and rows % 8 == 0:
            best = tg
    return best if best is not None else G   # full extent: always a legal block


_GRID_PARAMS = pltpu.CompilerParams(
    dimension_semantics=("parallel",),          # shard the M axis across TCs (v7x)
    vmem_limit_bytes=32 * 1024 * 1024,
)


# ---------------------------------------------------------------------------
# Kernel bodies
# ---------------------------------------------------------------------------
def _dag_nodes(n_nodes, window, alpha_ref, h0,
               nw_ref, ns_ref, nb_ref, lw_ref, ls_ref, lb_ref):
    """Unrolled big-DAG stand-in: mixed edge (alpha-weighted sum over the sliding
    window of states) -> ReLU -> 1x1 conv (MXU, bf16 in / f32 acc) -> folded BN.
    The LAST node's weights emit its channels pre-shifted into the packed-concat
    lane range (and carry the concat weight wc[1] folded into its BN scale/bias).
    All states stay resident in VMEM/vregs; nothing round-trips to HBM."""
    states = [h0, h0]
    for j in range(n_nodes):
        k = j + 2
        lo = max(0, k - window)
        acc = alpha_ref[j, lo] * states[lo]
        for s in range(lo + 1, k):
            acc = acc + alpha_ref[j, s] * states[s]
        a = jnp.maximum(acc, 0.0).astype(jnp.bfloat16)
        if j < n_nodes - 1:
            node = (jnp.dot(a, nw_ref[j], preferred_element_type=jnp.float32)
                    * ns_ref[j] + nb_ref[j])
        else:
            node = (jnp.dot(a, lw_ref[...], preferred_element_type=jnp.float32)
                    * ls_ref[...] + lb_ref[...])
        states.append(node)
    return states


def _store_packed_concat(o_ref, wc0, s_a, s_b):
    """Packed concat: s_b already carries its channels at lanes [c:2c] (and wc[1] folded),
    s_a carries channels at [0:c] with zeros above, so the concat is one FMA + lane-dense store."""
    cp = s_a.shape[-1]
    cp_out = o_ref.shape[-1]
    if cp_out == cp:
        o_ref[...] = (wc0 * s_a + s_b).astype(o_ref.dtype)
    else:
        o_ref[:, :cp] = (wc0 * s_a + s_b[:, :cp]).astype(o_ref.dtype)
        o_ref[:, cp:] = s_b[:, cp:].astype(o_ref.dtype)


def _stem_dag_kernel(n_nodes, window,
                     alpha_ref, wc_ref,
                     x_ref, pw_ref, ps_ref, pb_ref,
                     nw_ref, ns_ref, nb_ref, lw_ref, ls_ref, lb_ref, o_ref):
    # stem0: Conv2d(3x3, via im2col matmul) + folded BatchNorm (no ReLU).
    h = (jnp.dot(x_ref[...], pw_ref[...], preferred_element_type=jnp.float32)
         * ps_ref[...] + pb_ref[...])
    states = _dag_nodes(n_nodes, window, alpha_ref, h,
                        nw_ref, ns_ref, nb_ref, lw_ref, ls_ref, lb_ref)
    _store_packed_concat(o_ref, wc_ref[0], states[-2], states[-1])


def _reduce_dag_kernel(n_nodes, window,
                       alpha_ref, wc_ref,
                       q_ref, pw_ref, ps_ref, pb_ref,
                       nw_ref, ns_ref, nb_ref, lw_ref, ls_ref, lb_ref, o_ref):
    # Reduction cell stand-in: ReLU -> 2x2 avg-pool -> 1x1 conv -> folded BN.
    # q_ref is (tg, 2, W/2, 2, C) -- a free wrapper reshape of the previous stage's flat
    # activation; the 2x2 window sum is pure elementwise/sublane work (no HBM transpose).
    # The 0.25 average factor is pre-folded into ps.
    q = jnp.maximum(q_ref[...].astype(jnp.float32), 0.0)
    p = (q[:, 0, :, 0, :] + q[:, 0, :, 1, :]
         + q[:, 1, :, 0, :] + q[:, 1, :, 1, :])                 # (tg, W/2, C)
    p = p.reshape(p.shape[0] * p.shape[1], p.shape[2])
    h = (jnp.dot(p.astype(jnp.bfloat16), pw_ref[...], preferred_element_type=jnp.float32)
         * ps_ref[...] + pb_ref[...])
    states = _dag_nodes(n_nodes, window, alpha_ref, h,
                        nw_ref, ns_ref, nb_ref, lw_ref, ls_ref, lb_ref)
    _store_packed_concat(o_ref, wc_ref[0], states[-2], states[-1])


# ---------------------------------------------------------------------------
# Pallas wrapper: one pallas_call per stage
# ---------------------------------------------------------------------------
def fused_stage(stage_in, proj_w, proj_s, proj_b, dag, alpha, wc, window, reduce_input):
    """One pallas_call for a whole stage: input projection (stem conv+BN, or in-kernel
    ReLU->2x2avgpool->conv->BN) followed by every big-DAG node and the packed weighted
    concat output.  Gridded over M with double-buffered pipelining."""
    nw, ns, nb = dag["nw"], dag["ns"], dag["nb"]
    lw = dag["lw"]
    # Fold the concat weight of the LAST state into its BN scale/bias (tiny XLA multiply).
    ls = dag["ls"] * wc[1]
    lb = dag["lb"] * wc[1]
    wc0 = wc[:1]                                 # remaining concat weight: one SMEM scalar

    n_nodes = nw.shape[0] + 1
    Cp = proj_w.shape[1]
    Cp_out = lw.shape[1]

    if reduce_input:
        G, _, Wh, _, Cin = stage_in.shape
        tg = _pick_group_tile(G, Wh)
        tm_out = tg * Wh
        M_out = G * Wh
        grid = (G // tg,)
        x_spec = pl.BlockSpec((tg, 2, Wh, 2, Cin), lambda i: (i, 0, 0, 0, 0))
        body = partial(_reduce_dag_kernel, n_nodes, window)
    else:
        M, K = stage_in.shape
        tm_out = _pick_tile(M)
        M_out = M
        grid = (M // tm_out,)
        x_spec = pl.BlockSpec((tm_out, K), lambda i: (i, 0))
        body = partial(_stem_dag_kernel, n_nodes, window)

    smem = pl.BlockSpec(memory_space=pltpu.MemorySpace.SMEM)

    def cnst(*shape):
        return pl.BlockSpec(shape, lambda i: (0,) * len(shape))

    return pl.pallas_call(
        body,
        out_shape=jax.ShapeDtypeStruct((M_out, Cp_out), jnp.bfloat16),
        grid=grid,
        in_specs=[
            smem,                                    # alpha (n_nodes, n_nodes+2)
            smem,                                    # wc0 (1,)
            x_spec,                                  # activations / patches
            cnst(*proj_w.shape),                     # projection weight (bf16)
            cnst(1, Cp), cnst(1, Cp),                # folded-BN scale / bias
            cnst(n_nodes - 1, Cp, Cp),               # node conv weights (stacked, bf16)
            cnst(n_nodes - 1, 1, Cp),                # node BN scales
            cnst(n_nodes - 1, 1, Cp),                # node BN biases
            cnst(Cp, Cp_out),                        # last-node weight (packed-concat cols)
            cnst(1, Cp_out), cnst(1, Cp_out),        # last-node BN scale / bias (wc1 folded)
        ],
        out_specs=pl.BlockSpec((tm_out, Cp_out), lambda i: (i, 0)),
        compiler_params=_GRID_PARAMS,
    )(alpha, wc0, stage_in, proj_w, proj_s, proj_b, nw, ns, nb, lw, ls, lb)


# ---------------------------------------------------------------------------
# Glue helpers (plain JAX, outside the hot loop)
# ---------------------------------------------------------------------------
def im2col3x3(x_nhwc):
    """3x3, stride 1, pad 1 patch extraction. (N,H,W,Cin) -> (N*H*W, 9*Cin)."""
    # TODO(synk): for ImageNet-sized stems, build the 3x3 patches in-kernel from an NHWC
    #             block with shifted reads instead of materializing im2col in HBM.
    N, H, W, Cin = x_nhwc.shape
    xp = jnp.pad(x_nhwc, ((0, 0), (1, 1), (1, 1), (0, 0)))
    cols = [xp[:, dy:dy + H, dx:dx + W, :] for dy in range(3) for dx in range(3)]
    return jnp.concatenate(cols, axis=-1).reshape(N * H * W, 9 * Cin)


def fold_bn(gamma, beta, mean, var, eps=1e-5):
    scale = gamma / jnp.sqrt(var + eps)
    bias = beta - mean * scale
    return scale, bias


# ---------------------------------------------------------------------------
# Forward pass (controller semantics: softmax alphas, then the search net)
# ---------------------------------------------------------------------------
def search_distribution_forward(x_nchw, alpha_dag, alpha_concat, params,
                                n_big_nodes, window, n_classes):
    # Controller: continuous relaxation of the architecture parameters.
    weights_dag = [jax.nn.softmax(a, axis=-1) for a in alpha_dag]
    weights_concat = [jax.nn.softmax(b, axis=0) for b in alpha_concat]

    # TODO(synk): gt.PRIMITIVES2 mixed-op set not provided; stand-in edge uses the
    #             softmax probability of op-0 as its single-op mixing coefficient.
    def stage_alpha(stage):
        A = jnp.zeros((n_big_nodes, n_big_nodes + 2), jnp.float32)
        for j in range(n_big_nodes):
            row = weights_dag[stage * n_big_nodes + j][:, 0]
            k = row.shape[0]                    # min(j+2, window)
            lo = (j + 2) - k
            A = A.at[j, lo:lo + k].set(row)
        return A

    def stage_wc(stage):
        # TODO(synk): SearchBigDAG_CS source not provided; stand-in weights the two
        #             concatenated output states with the first two concat probabilities.
        return weights_concat[stage][:2, 0]

    N, Cin, H, W = x_nchw.shape
    x = jnp.transpose(x_nchw, (0, 2, 3, 1)).astype(jnp.float32)        # NCHW -> NHWC

    # stem patches: pad K (9*Cin) only to a sublane multiple (16), cast bf16 for the MXU.
    patches = im2col3x3(x)
    Kp = params["stem_w"].shape[0]
    patches = jnp.pad(patches, ((0, 0), (0, Kp - patches.shape[1]))).astype(jnp.bfloat16)

    # stage 1: stem (Conv+BN) + bigDAG1 fused
    h = fused_stage(patches, params["stem_w"], params["stem_s"], params["stem_b"],
                    params["dag1"], stage_alpha(0), stage_wc(0), window,
                    reduce_input=False)

    # reduction cell 1 (in-kernel ReLU->avgpool2->conv->BN) + bigDAG2 fused.
    # The reshape is free (contiguous): rows are (n, y, x) row-major.
    q = h.reshape(N * (H // 2), 2, W // 2, 2, h.shape[-1])
    H, W = H // 2, W // 2
    h = fused_stage(q, params["red1_w"], params["red1_s"], params["red1_b"],
                    params["dag2"], stage_alpha(1), stage_wc(1), window,
                    reduce_input=True)

    # reduction cell 2 + bigDAG3 fused
    q = h.reshape(N * (H // 2), 2, W // 2, 2, h.shape[-1])
    H, W = H // 2, W // 2
    h = fused_stage(q, params["red2_w"], params["red2_s"], params["red2_b"],
                    params["dag3"], stage_alpha(2), stage_wc(2), window,
                    reduce_input=True)

    # Global average pool + linear(32C -> n_classes) left to XLA (N rows of work only;
    # a dedicated pallas_call's fixed overhead would exceed the compute).
    pooled = h.reshape(N, H * W, h.shape[-1]).astype(jnp.float32).mean(axis=1)
    logits = pooled @ params["lin_w"] + params["lin_b"]
    return logits[:, :n_classes]


# ---------------------------------------------------------------------------
# Deterministic parameter initialization (padded / pallas-ready)
# NOTE: all padded lanes / rows / cols are EXACTLY zero -- the packed-concat layout
#       relies on this to keep padded activation lanes at 0 through the whole net.
# ---------------------------------------------------------------------------
def init_params(key, C_in, C, n_classes, n_big_nodes):
    assert n_big_nodes >= 2, "stand-in DAG expects at least two nodes per stage"
    C4, C8, C16, C32 = 4 * C, 8 * C, 16 * C, 32 * C
    Cp4, Cp8, Cp16 = (_round_up(c, LANE) for c in (C4, C8, C16))
    CpO1, CpO2, CpO3 = (_round_up(2 * c, LANE) for c in (C4, C8, C16))
    Kp = _round_up(9 * C_in, 16)             # bf16 sublane multiple, NOT 128 (HBM savings)
    ks = iter(jax.random.split(key, 128))

    def conv(shape, scale=0.1):
        return scale * jax.random.normal(next(ks), shape, jnp.float32)

    def bn_vec(c):
        gamma = 1.0 + 0.1 * jax.random.normal(next(ks), (c,), jnp.float32)
        beta = 0.1 * jax.random.normal(next(ks), (c,), jnp.float32)
        mean = 0.1 * jax.random.normal(next(ks), (c,), jnp.float32)
        var = jnp.abs(1.0 + 0.1 * jax.random.normal(next(ks), (c,), jnp.float32))
        return fold_bn(gamma, beta, mean, var)

    def place_vec(v, cp, off=0):
        return jnp.zeros((1, cp), jnp.float32).at[0, off:off + v.shape[0]].set(v)

    def place_w(w, rp, cp, roff=0, coff=0):
        out = jnp.zeros((rp, cp), jnp.float32)
        out = out.at[roff:roff + w.shape[0], coff:coff + w.shape[1]].set(w)
        return out.astype(jnp.bfloat16)

    def dag_params(c, cp, cp_out):
        ws, ss, bs = [], [], []
        for _ in range(n_big_nodes - 1):
            ws.append(place_w(conv((c, c)), cp, cp))
            s, b = bn_vec(c)
            ss.append(place_vec(s, cp))
            bs.append(place_vec(b, cp))
        # Last node: output channels land directly at lanes [c:2c] of the packed concat
        # slab, so the stage store needs no lane shuffles.
        s, b = bn_vec(c)
        return dict(
            nw=jnp.stack(ws), ns=jnp.stack(ss), nb=jnp.stack(bs),
            lw=place_w(conv((c, c)), cp, cp_out, roff=0, coff=c),
            ls=place_vec(s, cp_out, off=c), lb=place_vec(b, cp_out, off=c),
        )

    stem_s, stem_b = bn_vec(C4)
    r1s, r1b = bn_vec(C8)
    r2s, r2b = bn_vec(C16)
    lin_w = jnp.zeros((CpO3, n_classes), jnp.float32).at[:C32, :].set(conv((C32, n_classes)))

    params = {
        "stem_w": place_w(conv((9 * C_in, C4)), Kp, Cp4),
        "stem_s": place_vec(stem_s, Cp4), "stem_b": place_vec(stem_b, Cp4),
        "dag1": dag_params(C4, Cp4, CpO1),
        # Reduce projections read the PACKED concat (real channels contiguous at [0:2*C_prev]);
        # the 0.25 (2x2 avg-pool) factor is folded into the BN scale.
        "red1_w": place_w(conv((C8, C8)), CpO1, Cp8),
        "red1_s": 0.25 * place_vec(r1s, Cp8), "red1_b": place_vec(r1b, Cp8),
        "dag2": dag_params(C8, Cp8, CpO2),
        "red2_w": place_w(conv((C16, C16)), CpO2, Cp16),
        "red2_s": 0.25 * place_vec(r2s, Cp16), "red2_b": place_vec(r2b, Cp16),
        "dag3": dag_params(C16, Cp16, CpO3),
        "lin_w": lin_w,
        "lin_b": 0.1 * jax.random.normal(next(ks), (n_classes,), jnp.float32),
    }
    return params


# ---------------------------------------------------------------------------
if __name__ == "__main__":
    # Small shapes consistent with the module (non-ImageNet branch).
    batch, C_in, input_size = 2, 3, 16
    C, n_classes = 4, 10
    n_layers = 6
    n_big_nodes = n_layers // 3          # as in SearchStageController
    window = 3                           # slide_window
    n_ops = 8                            # stand-in for len(gt.PRIMITIVES2)

    key = jax.random.PRNGKey(0)
    k_x, k_a, k_c, k_p = jax.random.split(key, 4)

    x = jax.random.normal(k_x, (batch, C_in, input_size, input_size), jnp.float32)

    # Architecture parameters exactly as the controller allocates them.
    alpha_dag = []
    ka = iter(jax.random.split(k_a, 3 * n_big_nodes))
    for _ in range(3):
        for i in range(n_big_nodes):
            rows = i + 2 if i + 2 < window else window
            alpha_dag.append(0.001 * jax.random.normal(next(ka), (rows, n_ops), jnp.float32))
    kc = iter(jax.random.split(k_c, 3))
    alpha_concat = [0.001 * jax.random.normal(next(kc), (5, 1), jnp.float32) for _ in range(3)]

    params = init_params(k_p, C_in, C, n_classes, n_big_nodes)

    fwd = jax.jit(lambda xx, ad, ac, pp: search_distribution_forward(
        xx, ad, ac, pp, n_big_nodes, window, n_classes))
    logits = fwd(x, alpha_dag, alpha_concat, params)
    logits = jax.block_until_ready(logits)
    assert logits.shape == (batch, n_classes)
    assert bool(jnp.all(jnp.isfinite(logits)))
    print("KERNEL_OK")
</pallas_src>

<mosaic_0001>
module attributes {stable_mosaic.version = 11 : i64} {
  func.func @_reduce_dag_kernel(%arg0: i32, %arg1: memref<2x4xf32, #tpu.memory_space<smem>>, %arg2: memref<1xf32, #tpu.memory_space<smem>>, %arg3: memref<8x2x8x2x128xbf16, #tpu.memory_space<vmem>>, %arg4: memref<128x128xbf16, #tpu.memory_space<vmem>>, %arg5: memref<1x128xf32, #tpu.memory_space<vmem>>, %arg6: memref<1x128xf32, #tpu.memory_space<vmem>>, %arg7: memref<1x128x128xbf16, #tpu.memory_space<vmem>>, %arg8: memref<1x1x128xf32, #tpu.memory_space<vmem>>, %arg9: memref<1x1x128xf32, #tpu.memory_space<vmem>>, %arg10: memref<128x128xbf16, #tpu.memory_space<vmem>>, %arg11: memref<1x128xf32, #tpu.memory_space<vmem>>, %arg12: memref<1x128xf32, #tpu.memory_space<vmem>>, %arg13: memref<64x128xbf16, #tpu.memory_space<vmem>>) attributes {dimension_semantics = [#tpu.dimension_semantics<parallel>], iteration_bounds = array<i64: 2>, scalar_prefetch = 0 : i64, scratch_operands = 0 : i64, tpu.core_type = #tpu.core_type<tc>, window_params = [{transform_indices = @transform_0, window_bounds = array<i64: 2, 4>}, {transform_indices = @transform_1, window_bounds = array<i64: 1>}, {transform_indices = @transform_2, window_bounds = array<i64: 8, 2, 8, 2, 128>}, {pipeline_mode = #tpu.pipeline_mode<synchronous>, transform_indices = @transform_3, window_bounds = array<i64: 128, 128>}, {pipeline_mode = #tpu.pipeline_mode<synchronous>, transform_indices = @transform_4, window_bounds = array<i64: 1, 128>}, {pipeline_mode = #tpu.pipeline_mode<synchronous>, transform_indices = @transform_5, window_bounds = array<i64: 1, 128>}, {pipeline_mode = #tpu.pipeline_mode<synchronous>, transform_indices = @transform_6, window_bounds = array<i64: 1, 128, 128>}, {pipeline_mode = #tpu.pipeline_mode<synchronous>, transform_indices = @transform_7, window_bounds = array<i64: 1, 1, 128>}, {pipeline_mode = #tpu.pipeline_mode<synchronous>, transform_indices = @transform_8, window_bounds = array<i64: 1, 1, 128>}, {pipeline_mode = #tpu.pipeline_mode<synchronous>, transform_indices = @transform_9, window_bounds = array<i64: 128, 128>}, {pipeline_mode = #tpu.pipeline_mode<synchronous>, transform_indices = @transform_10, window_bounds = array<i64: 1, 128>}, {pipeline_mode = #tpu.pipeline_mode<synchronous>, transform_indices = @transform_11, window_bounds = array<i64: 1, 128>}, {transform_indices = @transform_12, window_bounds = array<i64: 64, 128>}]} {
    %c0 = arith.constant 0 : index
    %c0_0 = arith.constant 0 : index
    %c0_1 = arith.constant 0 : index
    %c0_2 = arith.constant 0 : index
    %c0_3 = arith.constant 0 : index
    %0 = vector.load %arg3[%c0, %c0_0, %c0_1, %c0_2, %c0_3] : memref<8x2x8x2x128xbf16, #tpu.memory_space<vmem>>, vector<8x2x8x2x128xbf16>
    %1 = arith.extf %0 : vector<8x2x8x2x128xbf16> to vector<8x2x8x2x128xf32>
    %cst = arith.constant 0.000000e+00 : f32
    %2 = vector.broadcast %cst : f32 to vector<8x2x8x2x128xf32>
    %3 = arith.maximumf %1, %2 : vector<8x2x8x2x128xf32>
    %4 = vector.extract_strided_slice %3 {offsets = [0, 0, 0, 0, 0], sizes = [8, 1, 8, 1, 128], strides = [1, 1, 1, 1, 1]} : vector<8x2x8x2x128xf32> to vector<8x1x8x1x128xf32>
    %5 = vector.shape_cast %4 : vector<8x1x8x1x128xf32> to vector<8x8x128xf32>
    %6 = vector.extract_strided_slice %3 {offsets = [0, 0, 0, 1, 0], sizes = [8, 1, 8, 1, 128], strides = [1, 1, 1, 1, 1]} : vector<8x2x8x2x128xf32> to vector<8x1x8x1x128xf32>
    %7 = vector.shape_cast %6 : vector<8x1x8x1x128xf32> to vector<8x8x128xf32>
    %8 = arith.addf %5, %7 : vector<8x8x128xf32>
    %9 = vector.extract_strided_slice %3 {offsets = [0, 1, 0, 0, 0], sizes = [8, 1, 8, 1, 128], strides = [1, 1, 1, 1, 1]} : vector<8x2x8x2x128xf32> to vector<8x1x8x1x128xf32>
    %10 = vector.shape_cast %9 : vector<8x1x8x1x128xf32> to vector<8x8x128xf32>
    %11 = arith.addf %8, %10 : vector<8x8x128xf32>
    %12 = vector.extract_strided_slice %3 {offsets = [0, 1, 0, 1, 0], sizes = [8, 1, 8, 1, 128], strides = [1, 1, 1, 1, 1]} : vector<8x2x8x2x128xf32> to vector<8x1x8x1x128xf32>
    %13 = vector.shape_cast %12 : vector<8x1x8x1x128xf32> to vector<8x8x128xf32>
    %14 = arith.addf %11, %13 : vector<8x8x128xf32>
    %15 = vector.shape_cast %14 : vector<8x8x128xf32> to vector<64x128xf32>
    %16 = arith.truncf %15 : vector<64x128xf32> to vector<64x128xbf16>
    %c0_4 = arith.constant 0 : index
    %c0_5 = arith.constant 0 : index
    %17 = vector.load %arg4[%c0_4, %c0_5] : memref<128x128xbf16, #tpu.memory_space<vmem>>, vector<128x128xbf16>
    %cst_6 = arith.constant dense<0.000000e+00> : vector<64x128xf32>
    %18 = tpu.matmul %16, %17, %cst_6 {dimension_numbers = #tpu.dot_dimension_numbers<[1], [0], [0], [1], [0, 0, 1, 1], [], []>} : vector<64x128xbf16>, vector<128x128xbf16>, vector<64x128xf32> -> vector<64x128xf32>
    %c0_7 = arith.constant 0 : index
    %c0_8 = arith.constant 0 : index
    %19 = vector.load %arg5[%c0_7, %c0_8] : memref<1x128xf32, #tpu.memory_space<vmem>>, vector<1x128xf32>
    %20 = vector.broadcast %19 : vector<1x128xf32> to vector<64x128xf32>
    %21 = arith.mulf %18, %20 : vector<64x128xf32>
    %c0_9 = arith.constant 0 : index
    %c0_10 = arith.constant 0 : index
    %22 = vector.load %arg6[%c0_9, %c0_10] : memref<1x128xf32, #tpu.memory_space<vmem>>, vector<1x128xf32>
    %23 = vector.broadcast %22 : vector<1x128xf32> to vector<64x128xf32>
    %24 = arith.addf %21, %23 : vector<64x128xf32>
    %c0_11 = arith.constant 0 : index
    %c0_12 = arith.constant 0 : index
    %25 = memref.load %arg1[%c0_11, %c0_12] : memref<2x4xf32, #tpu.memory_space<smem>>
    %26 = vector.broadcast %25 : f32 to vector<64x128xf32>
    %27 = arith.mulf %26, %24 : vector<64x128xf32>
    %c0_13 = arith.constant 0 : index
    %c1 = arith.constant 1 : index
    %28 = memref.load %arg1[%c0_13, %c1] : memref<2x4xf32, #tpu.memory_space<smem>>
    %29 = vector.broadcast %28 : f32 to vector<64x128xf32>
    %30 = arith.mulf %29, %24 : vector<64x128xf32>
    %31 = arith.addf %27, %30 : vector<64x128xf32>
    %cst_14 = arith.constant 0.000000e+00 : f32
    %32 = vector.broadcast %cst_14 : f32 to vector<64x128xf32>
    %33 = arith.maximumf %31, %32 : vector<64x128xf32>
    %34 = arith.truncf %33 : vector<64x128xf32> to vector<64x128xbf16>
    %c0_15 = arith.constant 0 : index
    %c0_16 = arith.constant 0 : index
    %c0_17 = arith.constant 0 : index
    %35 = vector.load %arg7[%c0_15, %c0_16, %c0_17] : memref<1x128x128xbf16, #tpu.memory_space<vmem>>, vector<1x128x128xbf16>
    %36 = vector.shape_cast %35 : vector<1x128x128xbf16> to vector<128x128xbf16>
    %cst_18 = arith.constant dense<0.000000e+00> : vector<64x128xf32>
    %37 = tpu.matmul %34, %36, %cst_18 {dimension_numbers = #tpu.dot_dimension_numbers<[1], [0], [0], [1], [0, 0, 1, 1], [], []>} : vector<64x128xbf16>, vector<128x128xbf16>, vector<64x128xf32> -> vector<64x128xf32>
    %c0_19 = arith.constant 0 : index
    %c0_20 = arith.constant 0 : index
    %c0_21 = arith.constant 0 : index
    %38 = vector.load %arg8[%c0_19, %c0_20, %c0_21] : memref<1x1x128xf32, #tpu.memory_space<vmem>>, vector<1x1x128xf32>
    %39 = vector.shape_cast %38 : vector<1x1x128xf32> to vector<1x128xf32>
    %40 = vector.broadcast %39 : vector<1x128xf32> to vector<64x128xf32>
    %41 = arith.mulf %37, %40 : vector<64x128xf32>
    %c0_22 = arith.constant 0 : index
    %c0_23 = arith.constant 0 : index
    %c0_24 = arith.constant 0 : index
    %42 = vector.load %arg9[%c0_22, %c0_23, %c0_24] : memref<1x1x128xf32, #tpu.memory_space<vmem>>, vector<1x1x128xf32>
    %43 = vector.shape_cast %42 : vector<1x1x128xf32> to vector<1x128xf32>
    %44 = vector.broadcast %43 : vector<1x128xf32> to vector<64x128xf32>
    %45 = arith.addf %41, %44 : vector<64x128xf32>
    %c1_25 = arith.constant 1 : index
    %c0_26 = arith.constant 0 : index
    %46 = memref.load %arg1[%c1_25, %c0_26] : memref<2x4xf32, #tpu.memory_space<smem>>
    %47 = vector.broadcast %46 : f32 to vector<64x128xf32>
    %48 = arith.mulf %47, %24 : vector<64x128xf32>
    %c1_27 = arith.constant 1 : index
    %c1_28 = arith.constant 1 : index
    %49 = memref.load %arg1[%c1_27, %c1_28] : memref<2x4xf32, #tpu.memory_space<smem>>
    %50 = vector.broadcast %49 : f32 to vector<64x128xf32>
    %51 = arith.mulf %50, %24 : vector<64x128xf32>
    %52 = arith.addf %48, %51 : vector<64x128xf32>
    %c1_29 = arith.constant 1 : index
    %c2 = arith.constant 2 : index
    %53 = memref.load %arg1[%c1_29, %c2] : memref<2x4xf32, #tpu.memory_space<smem>>
    %54 = vector.broadcast %53 : f32 to vector<64x128xf32>
    %55 = arith.mulf %54, %45 : vector<64x128xf32>
    %56 = arith.addf %52, %55 : vector<64x128xf32>
    %cst_30 = arith.constant 0.000000e+00 : f32
    %57 = vector.broadcast %cst_30 : f32 to vector<64x128xf32>
    %58 = arith.maximumf %56, %57 : vector<64x128xf32>
    %59 = arith.truncf %58 : vector<64x128xf32> to vector<64x128xbf16>
    %c0_31 = arith.constant 0 : index
    %c0_32 = arith.constant 0 : index
    %60 = vector.load %arg10[%c0_31, %c0_32] : memref<128x128xbf16, #tpu.memory_space<vmem>>, vector<128x128xbf16>
    %cst_33 = arith.constant dense<0.000000e+00> : vector<64x128xf32>
    %61 = tpu.matmul %59, %60, %cst_33 {dimension_numbers = #tpu.dot_dimension_numbers<[1], [0], [0], [1], [0, 0, 1, 1], [], []>} : vector<64x128xbf16>, vector<128x128xbf16>, vector<64x128xf32> -> vector<64x128xf32>
    %c0_34 = arith.constant 0 : index
    %c0_35 = arith.constant 0 : index
    %62 = vector.load %arg11[%c0_34, %c0_35] : memref<1x128xf32, #tpu.memory_space<vmem>>, vector<1x128xf32>
    %63 = vector.broadcast %62 : vector<1x128xf32> to vector<64x128xf32>
    %64 = arith.mulf %61, %63 : vector<64x128xf32>
    %c0_36 = arith.constant 0 : index
    %c0_37 = arith.constant 0 : index
    %65 = vector.load %arg12[%c0_36, %c0_37] : memref<1x128xf32, #tpu.memory_space<vmem>>, vector<1x128xf32>
    %66 = vector.broadcast %65 : vector<1x128xf32> to vector<64x128xf32>
    %67 = arith.addf %64, %66 : vector<64x128xf32>
    %c0_38 = arith.constant 0 : index
    %68 = memref.load %arg2[%c0_38] : memref<1xf32, #tpu.memory_space<smem>>
    %69 = vector.broadcast %68 : f32 to vector<64x128xf32>
    %70 = arith.mulf %69, %45 : vector<64x128xf32>
    %71 = arith.addf %70, %67 : vector<64x128xf32>
    %72 = arith.truncf %71 : vector<64x128xf32> to vector<64x128xbf16>
    %c0_39 = arith.constant 0 : index
    %c0_40 = arith.constant 0 : index
    %73 = vector.load %arg13[%c0_39, %c0_40] : memref<64x128xbf16, #tpu.memory_space<vmem>>, vector<64x128xbf16>
    tpu.vector_store %arg13[%c0_39, %c0_40], %72 {strides = array<i32>} : memref<64x128xbf16, #tpu.memory_space<vmem>>, vector<64x128xbf16>,
    return
  }
  func.func @transform_0(%arg0: i32) -> (i32, i32) {
    %c0_i32 = arith.constant 0 : i32
    %c0_i32_0 = arith.constant 0 : i32
    %c0_i32_1 = arith.constant 0 : i32
    return %c0_i32, %c0_i32_0 : i32, i32
  }
  func.func @transform_1(%arg0: i32) -> i32 {
    %c0_i32 = arith.constant 0 : i32
    %c0_i32_0 = arith.constant 0 : i32
    return %c0_i32 : i32
  }
  func.func @transform_2(%arg0: i32) -> (i32, i32, i32, i32, i32) {
    %c0_i32 = arith.constant 0 : i32
    %c0_i32_0 = arith.constant 0 : i32
    %c0_i32_1 = arith.constant 0 : i32
    %c0_i32_2 = arith.constant 0 : i32
    %c0_i32_3 = arith.constant 0 : i32
    return %arg0, %c0_i32, %c0_i32_0, %c0_i32_1, %c0_i32_2 : i32, i32, i32, i32, i32
  }
  func.func @transform_3(%arg0: i32) -> (i32, i32) {
    %c0_i32 = arith.constant 0 : i32
    %c0_i32_0 = arith.constant 0 : i32
    %c0_i32_1 = arith.constant 0 : i32
    return %c0_i32, %c0_i32_0 : i32, i32
  }
  func.func @transform_4(%arg0: i32) -> (i32, i32) {
    %c0_i32 = arith.constant 0 : i32
    %c0_i32_0 = arith.constant 0 : i32
    %c0_i32_1 = arith.constant 0 : i32
    return %c0_i32, %c0_i32_0 : i32, i32
  }
  func.func @transform_5(%arg0: i32) -> (i32, i32) {
    %c0_i32 = arith.constant 0 : i32
    %c0_i32_0 = arith.constant 0 : i32
    %c0_i32_1 = arith.constant 0 : i32
    return %c0_i32, %c0_i32_0 : i32, i32
  }
  func.func @transform_6(%arg0: i32) -> (i32, i32, i32) {
    %c0_i32 = arith.constant 0 : i32
    %c0_i32_0 = arith.constant 0 : i32
    %c0_i32_1 = arith.constant 0 : i32
    %c0_i32_2 = arith.constant 0 : i32
    return %c0_i32, %c0_i32_0, %c0_i32_1 : i32, i32, i32
  }
  func.func @transform_7(%arg0: i32) -> (i32, i32, i32) {
    %c0_i32 = arith.constant 0 : i32
    %c0_i32_0 = arith.constant 0 : i32
    %c0_i32_1 = arith.constant 0 : i32
    %c0_i32_2 = arith.constant 0 : i32
    return %c0_i32, %c0_i32_0, %c0_i32_1 : i32, i32, i32
  }
  func.func @transform_8(%arg0: i32) -> (i32, i32, i32) {
    %c0_i32 = arith.constant 0 : i32
    %c0_i32_0 = arith.constant 0 : i32
    %c0_i32_1 = arith.constant 0 : i32
    %c0_i32_2 = arith.constant 0 : i32
    return %c0_i32, %c0_i32_0, %c0_i32_1 : i32, i32, i32
  }
  func.func @transform_9(%arg0: i32) -> (i32, i32) {
    %c0_i32 = arith.constant 0 : i32
    %c0_i32_0 = arith.constant 0 : i32
    %c0_i32_1 = arith.constant 0 : i32
    return %c0_i32, %c0_i32_0 : i32, i32
  }
  func.func @transform_10(%arg0: i32) -> (i32, i32) {
    %c0_i32 = arith.constant 0 : i32
    %c0_i32_0 = arith.constant 0 : i32
    %c0_i32_1 = arith.constant 0 : i32
    return %c0_i32, %c0_i32_0 : i32, i32
  }
  func.func @transform_11(%arg0: i32) -> (i32, i32) {
    %c0_i32 = arith.constant 0 : i32
    %c0_i32_0 = arith.constant 0 : i32
    %c0_i32_1 = arith.constant 0 : i32
    return %c0_i32, %c0_i32_0 : i32, i32
  }
  func.func @transform_12(%arg0: i32) -> (i32, i32) {
    %c0_i32 = arith.constant 0 : i32
    %c0_i32_0 = arith.constant 0 : i32
    return %arg0, %c0_i32 : i32, i32
  }
}

module attributes {stable_mosaic.version = 11 : i64} {
  func.func @_stem_dag_kernel(%arg0: i32, %arg1: memref<2x4xf32, #tpu.memory_space<smem>>, %arg2: memref<1xf32, #tpu.memory_space<smem>>, %arg3: memref<256x32xbf16, #tpu.memory_space<vmem>>, %arg4: memref<32x128xbf16, #tpu.memory_space<vmem>>, %arg5: memref<1x128xf32, #tpu.memory_space<vmem>>, %arg6: memref<1x128xf32, #tpu.memory_space<vmem>>, %arg7: memref<1x128x128xbf16, #tpu.memory_space<vmem>>, %arg8: memref<1x1x128xf32, #tpu.memory_space<vmem>>, %arg9: memref<1x1x128xf32, #tpu.memory_space<vmem>>, %arg10: memref<128x128xbf16, #tpu.memory_space<vmem>>, %arg11: memref<1x128xf32, #tpu.memory_space<vmem>>, %arg12: memref<1x128xf32, #tpu.memory_space<vmem>>, %arg13: memref<256x128xbf16, #tpu.memory_space<vmem>>) attributes {dimension_semantics = [#tpu.dimension_semantics<parallel>], iteration_bounds = array<i64: 2>, scalar_prefetch = 0 : i64, scratch_operands = 0 : i64, tpu.core_type = #tpu.core_type<tc>, window_params = [{transform_indices = @transform_0, window_bounds = array<i64: 2, 4>}, {transform_indices = @transform_1, window_bounds = array<i64: 1>}, {transform_indices = @transform_2, window_bounds = array<i64: 256, 32>}, {pipeline_mode = #tpu.pipeline_mode<synchronous>, transform_indices = @transform_3, window_bounds = array<i64: 32, 128>}, {pipeline_mode = #tpu.pipeline_mode<synchronous>, transform_indices = @transform_4, window_bounds = array<i64: 1, 128>}, {pipeline_mode = #tpu.pipeline_mode<synchronous>, transform_indices = @transform_5, window_bounds = array<i64: 1, 128>}, {pipeline_mode = #tpu.pipeline_mode<synchronous>, transform_indices = @transform_6, window_bounds = array<i64: 1, 128, 128>}, {pipeline_mode = #tpu.pipeline_mode<synchronous>, transform_indices = @transform_7, window_bounds = array<i64: 1, 1, 128>}, {pipeline_mode = #tpu.pipeline_mode<synchronous>, transform_indices = @transform_8, window_bounds = array<i64: 1, 1, 128>}, {pipeline_mode = #tpu.pipeline_mode<synchronous>, transform_indices = @transform_9, window_bounds = array<i64: 128, 128>}, {pipeline_mode = #tpu.pipeline_mode<synchronous>, transform_indices = @transform_10, window_bounds = array<i64: 1, 128>}, {pipeline_mode = #tpu.pipeline_mode<synchronous>, transform_indices = @transform_11, window_bounds = array<i64: 1, 128>}, {transform_indices = @transform_12, window_bounds = array<i64: 256, 128>}]} {
    %c0 = arith.constant 0 : index
    %c0_0 = arith.constant 0 : index
    %0 = vector.load %arg3[%c0, %c0_0] : memref<256x32xbf16, #tpu.memory_space<vmem>>, vector<256x32xbf16>
    %c0_1 = arith.constant 0 : index
    %c0_2 = arith.constant 0 : index
    %1 = vector.load %arg4[%c0_1, %c0_2] : memref<32x128xbf16, #tpu.memory_space<vmem>>, vector<32x128xbf16>
    %cst = arith.constant dense<0.000000e+00> : vector<256x128xf32>
    %2 = tpu.matmul %0, %1, %cst {dimension_numbers = #tpu.dot_dimension_numbers<[1], [0], [0], [1], [0, 0, 1, 1], [], []>} : vector<256x32xbf16>, vector<32x128xbf16>, vector<256x128xf32> -> vector<256x128xf32>
    %c0_3 = arith.constant 0 : index
    %c0_4 = arith.constant 0 : index
    %3 = vector.load %arg5[%c0_3, %c0_4] : memref<1x128xf32, #tpu.memory_space<vmem>>, vector<1x128xf32>
    %4 = vector.broadcast %3 : vector<1x128xf32> to vector<256x128xf32>
    %5 = arith.mulf %2, %4 : vector<256x128xf32>
    %c0_5 = arith.constant 0 : index
    %c0_6 = arith.constant 0 : index
    %6 = vector.load %arg6[%c0_5, %c0_6] : memref<1x128xf32, #tpu.memory_space<vmem>>, vector<1x128xf32>
    %7 = vector.broadcast %6 : vector<1x128xf32> to vector<256x128xf32>
    %8 = arith.addf %5, %7 : vector<256x128xf32>
    %c0_7 = arith.constant 0 : index
    %c0_8 = arith.constant 0 : index
    %9 = memref.load %arg1[%c0_7, %c0_8] : memref<2x4xf32, #tpu.memory_space<smem>>
    %10 = vector.broadcast %9 : f32 to vector<256x128xf32>
    %11 = arith.mulf %10, %8 : vector<256x128xf32>
    %c0_9 = arith.constant 0 : index
    %c1 = arith.constant 1 : index
    %12 = memref.load %arg1[%c0_9, %c1] : memref<2x4xf32, #tpu.memory_space<smem>>
    %13 = vector.broadcast %12 : f32 to vector<256x128xf32>
    %14 = arith.mulf %13, %8 : vector<256x128xf32>
    %15 = arith.addf %11, %14 : vector<256x128xf32>
    %cst_10 = arith.constant 0.000000e+00 : f32
    %16 = vector.broadcast %cst_10 : f32 to vector<256x128xf32>
    %17 = arith.maximumf %15, %16 : vector<256x128xf32>
    %18 = arith.truncf %17 : vector<256x128xf32> to vector<256x128xbf16>
    %c0_11 = arith.constant 0 : index
    %c0_12 = arith.constant 0 : index
    %c0_13 = arith.constant 0 : index
    %19 = vector.load %arg7[%c0_11, %c0_12, %c0_13] : memref<1x128x128xbf16, #tpu.memory_space<vmem>>, vector<1x128x128xbf16>
    %20 = vector.shape_cast %19 : vector<1x128x128xbf16> to vector<128x128xbf16>
    %cst_14 = arith.constant dense<0.000000e+00> : vector<256x128xf32>
    %21 = tpu.matmul %18, %20, %cst_14 {dimension_numbers = #tpu.dot_dimension_numbers<[1], [0], [0], [1], [0, 0, 1, 1], [], []>} : vector<256x128xbf16>, vector<128x128xbf16>, vector<256x128xf32> -> vector<256x128xf32>
    %c0_15 = arith.constant 0 : index
    %c0_16 = arith.constant 0 : index
    %c0_17 = arith.constant 0 : index
    %22 = vector.load %arg8[%c0_15, %c0_16, %c0_17] : memref<1x1x128xf32, #tpu.memory_space<vmem>>, vector<1x1x128xf32>
    %23 = vector.shape_cast %22 : vector<1x1x128xf32> to vector<1x128xf32>
    %24 = vector.broadcast %23 : vector<1x128xf32> to vector<256x128xf32>
    %25 = arith.mulf %21, %24 : vector<256x128xf32>
    %c0_18 = arith.constant 0 : index
    %c0_19 = arith.constant 0 : index
    %c0_20 = arith.constant 0 : index
    %26 = vector.load %arg9[%c0_18, %c0_19, %c0_20] : memref<1x1x128xf32, #tpu.memory_space<vmem>>, vector<1x1x128xf32>
    %27 = vector.shape_cast %26 : vector<1x1x128xf32> to vector<1x128xf32>
    %28 = vector.broadcast %27 : vector<1x128xf32> to vector<256x128xf32>
    %29 = arith.addf %25, %28 : vector<256x128xf32>
    %c1_21 = arith.constant 1 : index
    %c0_22 = arith.constant 0 : index
    %30 = memref.load %arg1[%c1_21, %c0_22] : memref<2x4xf32, #tpu.memory_space<smem>>
    %31 = vector.broadcast %30 : f32 to vector<256x128xf32>
    %32 = arith.mulf %31, %8 : vector<256x128xf32>
    %c1_23 = arith.constant 1 : index
    %c1_24 = arith.constant 1 : index
    %33 = memref.load %arg1[%c1_23, %c1_24] : memref<2x4xf32, #tpu.memory_space<smem>>
    %34 = vector.broadcast %33 : f32 to vector<256x128xf32>
    %35 = arith.mulf %34, %8 : vector<256x128xf32>
    %36 = arith.addf %32, %35 : vector<256x128xf32>
    %c1_25 = arith.constant 1 : index
    %c2 = arith.constant 2 : index
    %37 = memref.load %arg1[%c1_25, %c2] : memref<2x4xf32, #tpu.memory_space<smem>>
    %38 = vector.broadcast %37 : f32 to vector<256x128xf32>
    %39 = arith.mulf %38, %29 : vector<256x128xf32>
    %40 = arith.addf %36, %39 : vector<256x128xf32>
    %cst_26 = arith.constant 0.000000e+00 : f32
    %41 = vector.broadcast %cst_26 : f32 to vector<256x128xf32>
    %42 = arith.maximumf %40, %41 : vector<256x128xf32>
    %43 = arith.truncf %42 : vector<256x128xf32> to vector<256x128xbf16>
    %c0_27 = arith.constant 0 : index
    %c0_28 = arith.constant 0 : index
    %44 = vector.load %arg10[%c0_27, %c0_28] : memref<128x128xbf16, #tpu.memory_space<vmem>>, vector<128x128xbf16>
    %cst_29 = arith.constant dense<0.000000e+00> : vector<256x128xf32>
    %45 = tpu.matmul %43, %44, %cst_29 {dimension_numbers = #tpu.dot_dimension_numbers<[1], [0], [0], [1], [0, 0, 1, 1], [], []>} : vector<256x128xbf16>, vector<128x128xbf16>, vector<256x128xf32> -> vector<256x128xf32>
    %c0_30 = arith.constant 0 : index
    %c0_31 = arith.constant 0 : index
    %46 = vector.load %arg11[%c0_30, %c0_31] : memref<1x128xf32, #tpu.memory_space<vmem>>, vector<1x128xf32>
    %47 = vector.broadcast %46 : vector<1x128xf32> to vector<256x128xf32>
    %48 = arith.mulf %45, %47 : vector<256x128xf32>
    %c0_32 = arith.constant 0 : index
    %c0_33 = arith.constant 0 : index
    %49 = vector.load %arg12[%c0_32, %c0_33] : memref<1x128xf32, #tpu.memory_space<vmem>>, vector<1x128xf32>
    %50 = vector.broadcast %49 : vector<1x128xf32> to vector<256x128xf32>
    %51 = arith.addf %48, %50 : vector<256x128xf32>
    %c0_34 = arith.constant 0 : index
    %52 = memref.load %arg2[%c0_34] : memref<1xf32, #tpu.memory_space<smem>>
    %53 = vector.broadcast %52 : f32 to vector<256x128xf32>
    %54 = arith.mulf %53, %29 : vector<256x128xf32>
    %55 = arith.addf %54, %51 : vector<256x128xf32>
    %56 = arith.truncf %55 : vector<256x128xf32> to vector<256x128xbf16>
    %c0_35 = arith.constant 0 : index
    %c0_36 = arith.constant 0 : index
    %57 = vector.load %arg13[%c0_35, %c0_36] : memref<256x128xbf16, #tpu.memory_space<vmem>>, vector<256x128xbf16>
    tpu.vector_store %arg13[%c0_35, %c0_36], %56 {strides = array<i32>} : memref<256x128xbf16, #tpu.memory_space<vmem>>, vector<256x128xbf16>,
    return
  }
  func.func @transform_0(%arg0: i32) -> (i32, i32) {
    %c0_i32 = arith.constant 0 : i32
    %c0_i32_0 = arith.constant 0 : i32
    %c0_i32_1 = arith.constant 0 : i32
    return %c0_i32, %c0_i32_0 : i32, i32
  }
  func.func @transform_1(%arg0: i32) -> i32 {
    %c0_i32 = arith.constant 0 : i32
    %c0_i32_0 = arith.constant 0 : i32
    return %c0_i32 : i32
  }
  func.func @transform_2(%arg0: i32) -> (i32, i32) {
    %c0_i32 = arith.constant 0 : i32
    %c0_i32_0 = arith.constant 0 : i32
    return %arg0, %c0_i32 : i32, i32
  }
  func.func @transform_3(%arg0: i32) -> (i32, i32) {
    %c0_i32 = arith.constant 0 : i32
    %c0_i32_0 = arith.constant 0 : i32
    %c0_i32_1 = arith.constant 0 : i32
    return %c0_i32, %c0_i32_0 : i32, i32
  }
  func.func @transform_4(%arg0: i32) -> (i32, i32) {
    %c0_i32 = arith.constant 0 : i32
    %c0_i32_0 = arith.constant 0 : i32
    %c0_i32_1 = arith.constant 0 : i32
    return %c0_i32, %c0_i32_0 : i32, i32
  }
  func.func @transform_5(%arg0: i32) -> (i32, i32) {
    %c0_i32 = arith.constant 0 : i32
    %c0_i32_0 = arith.constant 0 : i32
    %c0_i32_1 = arith.constant 0 : i32
    return %c0_i32, %c0_i32_0 : i32, i32
  }
  func.func @transform_6(%arg0: i32) -> (i32, i32, i32) {
    %c0_i32 = arith.constant 0 : i32
    %c0_i32_0 = arith.constant 0 : i32
    %c0_i32_1 = arith.constant 0 : i32
    %c0_i32_2 = arith.constant 0 : i32
    return %c0_i32, %c0_i32_0, %c0_i32_1 : i32, i32, i32
  }
  func.func @transform_7(%arg0: i32) -> (i32, i32, i32) {
    %c0_i32 = arith.constant 0 : i32
    %c0_i32_0 = arith.constant 0 : i32
    %c0_i32_1 = arith.constant 0 : i32
    %c0_i32_2 = arith.constant 0 : i32
    return %c0_i32, %c0_i32_0, %c0_i32_1 : i32, i32, i32
  }
  func.func @transform_8(%arg0: i32) -> (i32, i32, i32) {
    %c0_i32 = arith.constant 0 : i32
    %c0_i32_0 = arith.constant 0 : i32
    %c0_i32_1 = arith.constant 0 : i32
    %c0_i32_2 = arith.constant 0 : i32
    return %c0_i32, %c0_i32_0, %c0_i32_1 : i32, i32, i32
  }
  func.func @transform_9(%arg0: i32) -> (i32, i32) {
    %c0_i32 = arith.constant 0 : i32
    %c0_i32_0 = arith.constant 0 : i32
    %c0_i32_1 = arith.constant 0 : i32
    return %c0_i32, %c0_i32_0 : i32, i32
  }
  func.func @transform_10(%arg0: i32) -> (i32, i32) {
    %c0_i32 = arith.constant 0 : i32
    %c0_i32_0 = arith.constant 0 : i32
    %c0_i32_1 = arith.constant 0 : i32
    return %c0_i32, %c0_i32_0 : i32, i32
  }
  func.func @transform_11(%arg0: i32) -> (i32, i32) {
    %c0_i32 = arith.constant 0 : i32
    %c0_i32_0 = arith.constant 0 : i32
    %c0_i32_1 = arith.constant 0 : i32
    return %c0_i32, %c0_i32_0 : i32, i32
  }
  func.func @transform_12(%arg0: i32) -> (i32, i32) {
    %c0_i32 = arith.constant 0 : i32
    %c0_i32_0 = arith.constant 0 : i32
    return %arg0, %c0_i32 : i32, i32
  }
}

module attributes {stable_mosaic.version = 11 : i64} {
  func.func @_reduce_dag_kernel(%arg0: i32, %arg1: memref<2x4xf32, #tpu.memory_space<smem>>, %arg2: memref<1xf32, #tpu.memory_space<smem>>, %arg3: memref<4x2x4x2x128xbf16, #tpu.memory_space<vmem>>, %arg4: memref<128x128xbf16, #tpu.memory_space<vmem>>, %arg5: memref<1x128xf32, #tpu.memory_space<vmem>>, %arg6: memref<1x128xf32, #tpu.memory_space<vmem>>, %arg7: memref<1x128x128xbf16, #tpu.memory_space<vmem>>, %arg8: memref<1x1x128xf32, #tpu.memory_space<vmem>>, %arg9: memref<1x1x128xf32, #tpu.memory_space<vmem>>, %arg10: memref<128x128xbf16, #tpu.memory_space<vmem>>, %arg11: memref<1x128xf32, #tpu.memory_space<vmem>>, %arg12: memref<1x128xf32, #tpu.memory_space<vmem>>, %arg13: memref<16x128xbf16, #tpu.memory_space<vmem>>) attributes {dimension_semantics = [#tpu.dimension_semantics<parallel>], iteration_bounds = array<i64: 2>, scalar_prefetch = 0 : i64, scratch_operands = 0 : i64, tpu.core_type = #tpu.core_type<tc>, window_params = [{transform_indices = @transform_0, window_bounds = array<i64: 2, 4>}, {transform_indices = @transform_1, window_bounds = array<i64: 1>}, {transform_indices = @transform_2, window_bounds = array<i64: 4, 2, 4, 2, 128>}, {pipeline_mode = #tpu.pipeline_mode<synchronous>, transform_indices = @transform_3, window_bounds = array<i64: 128, 128>}, {pipeline_mode = #tpu.pipeline_mode<synchronous>, transform_indices = @transform_4, window_bounds = array<i64: 1, 128>}, {pipeline_mode = #tpu.pipeline_mode<synchronous>, transform_indices = @transform_5, window_bounds = array<i64: 1, 128>}, {pipeline_mode = #tpu.pipeline_mode<synchronous>, transform_indices = @transform_6, window_bounds = array<i64: 1, 128, 128>}, {pipeline_mode = #tpu.pipeline_mode<synchronous>, transform_indices = @transform_7, window_bounds = array<i64: 1, 1, 128>}, {pipeline_mode = #tpu.pipeline_mode<synchronous>, transform_indices = @transform_8, window_bounds = array<i64: 1, 1, 128>}, {pipeline_mode = #tpu.pipeline_mode<synchronous>, transform_indices = @transform_9, window_bounds = array<i64: 128, 128>}, {pipeline_mode = #tpu.pipeline_mode<synchronous>, transform_indices = @transform_10, window_bounds = array<i64: 1, 128>}, {pipeline_mode = #tpu.pipeline_mode<synchronous>, transform_indices = @transform_11, window_bounds = array<i64: 1, 128>}, {transform_indices = @transform_12, window_bounds = array<i64: 16, 128>}]} {
    %c0 = arith.constant 0 : index
    %c0_0 = arith.constant 0 : index
    %c0_1 = arith.constant 0 : index
    %c0_2 = arith.constant 0 : index
    %c0_3 = arith.constant 0 : index
    %0 = vector.load %arg3[%c0, %c0_0, %c0_1, %c0_2, %c0_3] : memref<4x2x4x2x128xbf16, #tpu.memory_space<vmem>>, vector<4x2x4x2x128xbf16>
    %1 = arith.extf %0 : vector<4x2x4x2x128xbf16> to vector<4x2x4x2x128xf32>
    %cst = arith.constant 0.000000e+00 : f32
    %2 = vector.broadcast %cst : f32 to vector<4x2x4x2x128xf32>
    %3 = arith.maximumf %1, %2 : vector<4x2x4x2x128xf32>
    %4 = vector.extract_strided_slice %3 {offsets = [0, 0, 0, 0, 0], sizes = [4, 1, 4, 1, 128], strides = [1, 1, 1, 1, 1]} : vector<4x2x4x2x128xf32> to vector<4x1x4x1x128xf32>
    %5 = vector.shape_cast %4 : vector<4x1x4x1x128xf32> to vector<4x4x128xf32>
    %6 = vector.extract_strided_slice %3 {offsets = [0, 0, 0, 1, 0], sizes = [4, 1, 4, 1, 128], strides = [1, 1, 1, 1, 1]} : vector<4x2x4x2x128xf32> to vector<4x1x4x1x128xf32>
    %7 = vector.shape_cast %6 : vector<4x1x4x1x128xf32> to vector<4x4x128xf32>
    %8 = arith.addf %5, %7 : vector<4x4x128xf32>
    %9 = vector.extract_strided_slice %3 {offsets = [0, 1, 0, 0, 0], sizes = [4, 1, 4, 1, 128], strides = [1, 1, 1, 1, 1]} : vector<4x2x4x2x128xf32> to vector<4x1x4x1x128xf32>
    %10 = vector.shape_cast %9 : vector<4x1x4x1x128xf32> to vector<4x4x128xf32>
    %11 = arith.addf %8, %10 : vector<4x4x128xf32>
    %12 = vector.extract_strided_slice %3 {offsets = [0, 1, 0, 1, 0], sizes = [4, 1, 4, 1, 128], strides = [1, 1, 1, 1, 1]} : vector<4x2x4x2x128xf32> to vector<4x1x4x1x128xf32>
    %13 = vector.shape_cast %12 : vector<4x1x4x1x128xf32> to vector<4x4x128xf32>
    %14 = arith.addf %11, %13 : vector<4x4x128xf32>
    %15 = vector.shape_cast %14 : vector<4x4x128xf32> to vector<16x128xf32>
    %16 = arith.truncf %15 : vector<16x128xf32> to vector<16x128xbf16>
    %c0_4 = arith.constant 0 : index
    %c0_5 = arith.constant 0 : index
    %17 = vector.load %arg4[%c0_4, %c0_5] : memref<128x128xbf16, #tpu.memory_space<vmem>>, vector<128x128xbf16>
    %cst_6 = arith.constant dense<0.000000e+00> : vector<16x128xf32>
    %18 = tpu.matmul %16, %17, %cst_6 {dimension_numbers = #tpu.dot_dimension_numbers<[1], [0], [0], [1], [0, 0, 1, 1], [], []>} : vector<16x128xbf16>, vector<128x128xbf16>, vector<16x128xf32> -> vector<16x128xf32>
    %c0_7 = arith.constant 0 : index
    %c0_8 = arith.constant 0 : index
    %19 = vector.load %arg5[%c0_7, %c0_8] : memref<1x128xf32, #tpu.memory_space<vmem>>, vector<1x128xf32>
    %20 = vector.broadcast %19 : vector<1x128xf32> to vector<16x128xf32>
    %21 = arith.mulf %18, %20 : vector<16x128xf32>
    %c0_9 = arith.constant 0 : index
    %c0_10 = arith.constant 0 : index
    %22 = vector.load %arg6[%c0_9, %c0_10] : memref<1x128xf32, #tpu.memory_space<vmem>>, vector<1x128xf32>
    %23 = vector.broadcast %22 : vector<1x128xf32> to vector<16x128xf32>
    %24 = arith.addf %21, %23 : vector<16x128xf32>
    %c0_11 = arith.constant 0 : index
    %c0_12 = arith.constant 0 : index
    %25 = memref.load %arg1[%c0_11, %c0_12] : memref<2x4xf32, #tpu.memory_space<smem>>
    %26 = vector.broadcast %25 : f32 to vector<16x128xf32>
    %27 = arith.mulf %26, %24 : vector<16x128xf32>
    %c0_13 = arith.constant 0 : index
    %c1 = arith.constant 1 : index
    %28 = memref.load %arg1[%c0_13, %c1] : memref<2x4xf32, #tpu.memory_space<smem>>
    %29 = vector.broadcast %28 : f32 to vector<16x128xf32>
    %30 = arith.mulf %29, %24 : vector<16x128xf32>
    %31 = arith.addf %27, %30 : vector<16x128xf32>
    %cst_14 = arith.constant 0.000000e+00 : f32
    %32 = vector.broadcast %cst_14 : f32 to vector<16x128xf32>
    %33 = arith.maximumf %31, %32 : vector<16x128xf32>
    %34 = arith.truncf %33 : vector<16x128xf32> to vector<16x128xbf16>
    %c0_15 = arith.constant 0 : index
    %c0_16 = arith.constant 0 : index
    %c0_17 = arith.constant 0 : index
    %35 = vector.load %arg7[%c0_15, %c0_16, %c0_17] : memref<1x128x128xbf16, #tpu.memory_space<vmem>>, vector<1x128x128xbf16>
    %36 = vector.shape_cast %35 : vector<1x128x128xbf16> to vector<128x128xbf16>
    %cst_18 = arith.constant dense<0.000000e+00> : vector<16x128xf32>
    %37 = tpu.matmul %34, %36, %cst_18 {dimension_numbers = #tpu.dot_dimension_numbers<[1], [0], [0], [1], [0, 0, 1, 1], [], []>} : vector<16x128xbf16>, vector<128x128xbf16>, vector<16x128xf32> -> vector<16x128xf32>
    %c0_19 = arith.constant 0 : index
    %c0_20 = arith.constant 0 : index
    %c0_21 = arith.constant 0 : index
    %38 = vector.load %arg8[%c0_19, %c0_20, %c0_21] : memref<1x1x128xf32, #tpu.memory_space<vmem>>, vector<1x1x128xf32>
    %39 = vector.shape_cast %38 : vector<1x1x128xf32> to vector<1x128xf32>
    %40 = vector.broadcast %39 : vector<1x128xf32> to vector<16x128xf32>
    %41 = arith.mulf %37, %40 : vector<16x128xf32>
    %c0_22 = arith.constant 0 : index
    %c0_23 = arith.constant 0 : index
    %c0_24 = arith.constant 0 : index
    %42 = vector.load %arg9[%c0_22, %c0_23, %c0_24] : memref<1x1x128xf32, #tpu.memory_space<vmem>>, vector<1x1x128xf32>
    %43 = vector.shape_cast %42 : vector<1x1x128xf32> to vector<1x128xf32>
    %44 = vector.broadcast %43 : vector<1x128xf32> to vector<16x128xf32>
    %45 = arith.addf %41, %44 : vector<16x128xf32>
    %c1_25 = arith.constant 1 : index
    %c0_26 = arith.constant 0 : index
    %46 = memref.load %arg1[%c1_25, %c0_26] : memref<2x4xf32, #tpu.memory_space<smem>>
    %47 = vector.broadcast %46 : f32 to vector<16x128xf32>
    %48 = arith.mulf %47, %24 : vector<16x128xf32>
    %c1_27 = arith.constant 1 : index
    %c1_28 = arith.constant 1 : index
    %49 = memref.load %arg1[%c1_27, %c1_28] : memref<2x4xf32, #tpu.memory_space<smem>>
    %50 = vector.broadcast %49 : f32 to vector<16x128xf32>
    %51 = arith.mulf %50, %24 : vector<16x128xf32>
    %52 = arith.addf %48, %51 : vector<16x128xf32>
    %c1_29 = arith.constant 1 : index
    %c2 = arith.constant 2 : index
    %53 = memref.load %arg1[%c1_29, %c2] : memref<2x4xf32, #tpu.memory_space<smem>>
    %54 = vector.broadcast %53 : f32 to vector<16x128xf32>
    %55 = arith.mulf %54, %45 : vector<16x128xf32>
    %56 = arith.addf %52, %55 : vector<16x128xf32>
    %cst_30 = arith.constant 0.000000e+00 : f32
    %57 = vector.broadcast %cst_30 : f32 to vector<16x128xf32>
    %58 = arith.maximumf %56, %57 : vector<16x128xf32>
    %59 = arith.truncf %58 : vector<16x128xf32> to vector<16x128xbf16>
    %c0_31 = arith.constant 0 : index
    %c0_32 = arith.constant 0 : index
    %60 = vector.load %arg10[%c0_31, %c0_32] : memref<128x128xbf16, #tpu.memory_space<vmem>>, vector<128x128xbf16>
    %cst_33 = arith.constant dense<0.000000e+00> : vector<16x128xf32>
    %61 = tpu.matmul %59, %60, %cst_33 {dimension_numbers = #tpu.dot_dimension_numbers<[1], [0], [0], [1], [0, 0, 1, 1], [], []>} : vector<16x128xbf16>, vector<128x128xbf16>, vector<16x128xf32> -> vector<16x128xf32>
    %c0_34 = arith.constant 0 : index
    %c0_35 = arith.constant 0 : index
    %62 = vector.load %arg11[%c0_34, %c0_35] : memref<1x128xf32, #tpu.memory_space<vmem>>, vector<1x128xf32>
    %63 = vector.broadcast %62 : vector<1x128xf32> to vector<16x128xf32>
    %64 = arith.mulf %61, %63 : vector<16x128xf32>
    %c0_36 = arith.constant 0 : index
    %c0_37 = arith.constant 0 : index
    %65 = vector.load %arg12[%c0_36, %c0_37] : memref<1x128xf32, #tpu.memory_space<vmem>>, vector<1x128xf32>
    %66 = vector.broadcast %65 : vector<1x128xf32> to vector<16x128xf32>
    %67 = arith.addf %64, %66 : vector<16x128xf32>
    %c0_38 = arith.constant 0 : index
    %68 = memref.load %arg2[%c0_38] : memref<1xf32, #tpu.memory_space<smem>>
    %69 = vector.broadcast %68 : f32 to vector<16x128xf32>
    %70 = arith.mulf %69, %45 : vector<16x128xf32>
    %71 = arith.addf %70, %67 : vector<16x128xf32>
    %72 = arith.truncf %71 : vector<16x128xf32> to vector<16x128xbf16>
    %c0_39 = arith.constant 0 : index
    %c0_40 = arith.constant 0 : index
    %73 = vector.load %arg13[%c0_39, %c0_40] : memref<16x128xbf16, #tpu.memory_space<vmem>>, vector<16x128xbf16>
    tpu.vector_store %arg13[%c0_39, %c0_40], %72 {strides = array<i32>} : memref<16x128xbf16, #tpu.memory_space<vmem>>, vector<16x128xbf16>,
    return
  }
  func.func @transform_0(%arg0: i32) -> (i32, i32) {
    %c0_i32 = arith.constant 0 : i32
    %c0_i32_0 = arith.constant 0 : i32
    %c0_i32_1 = arith.constant 0 : i32
    return %c0_i32, %c0_i32_0 : i32, i32
  }
  func.func @transform_1(%arg0: i32) -> i32 {
    %c0_i32 = arith.constant 0 : i32
    %c0_i32_0 = arith.constant 0 : i32
    return %c0_i32 : i32
  }
  func.func @transform_2(%arg0: i32) -> (i32, i32, i32, i32, i32) {
    %c0_i32 = arith.constant 0 : i32
    %c0_i32_0 = arith.constant 0 : i32
    %c0_i32_1 = arith.constant 0 : i32
    %c0_i32_2 = arith.constant 0 : i32
    %c0_i32_3 = arith.constant 0 : i32
    return %arg0, %c0_i32, %c0_i32_0, %c0_i32_1, %c0_i32_2 : i32, i32, i32, i32, i32
  }
  func.func @transform_3(%arg0: i32) -> (i32, i32) {
    %c0_i32 = arith.constant 0 : i32
    %c0_i32_0 = arith.constant 0 : i32
    %c0_i32_1 = arith.constant 0 : i32
    return %c0_i32, %c0_i32_0 : i32, i32
  }
  func.func @transform_4(%arg0: i32) -> (i32, i32) {
    %c0_i32 = arith.constant 0 : i32
    %c0_i32_0 = arith.constant 0 : i32
    %c0_i32_1 = arith.constant 0 : i32
    return %c0_i32, %c0_i32_0 : i32, i32
  }
  func.func @transform_5(%arg0: i32) -> (i32, i32) {
    %c0_i32 = arith.constant 0 : i32
    %c0_i32_0 = arith.constant 0 : i32
    %c0_i32_1 = arith.constant 0 : i32
    return %c0_i32, %c0_i32_0 : i32, i32
  }
  func.func @transform_6(%arg0: i32) -> (i32, i32, i32) {
    %c0_i32 = arith.constant 0 : i32
    %c0_i32_0 = arith.constant 0 : i32
    %c0_i32_1 = arith.constant 0 : i32
    %c0_i32_2 = arith.constant 0 : i32
    return %c0_i32, %c0_i32_0, %c0_i32_1 : i32, i32, i32
  }
  func.func @transform_7(%arg0: i32) -> (i32, i32, i32) {
    %c0_i32 = arith.constant 0 : i32
    %c0_i32_0 = arith.constant 0 : i32
    %c0_i32_1 = arith.constant 0 : i32
    %c0_i32_2 = arith.constant 0 : i32
    return %c0_i32, %c0_i32_0, %c0_i32_1 : i32, i32, i32
  }
  func.func @transform_8(%arg0: i32) -> (i32, i32, i32) {
    %c0_i32 = arith.constant 0 : i32
    %c0_i32_0 = arith.constant 0 : i32
    %c0_i32_1 = arith.constant 0 : i32
    %c0_i32_2 = arith.constant 0 : i32
    return %c0_i32, %c0_i32_0, %c0_i32_1 : i32, i32, i32
  }
  func.func @transform_9(%arg0: i32) -> (i32, i32) {
    %c0_i32 = arith.constant 0 : i32
    %c0_i32_0 = arith.constant 0 : i32
    %c0_i32_1 = arith.constant 0 : i32
    return %c0_i32, %c0_i32_0 : i32, i32
  }
  func.func @transform_10(%arg0: i32) -> (i32, i32) {
    %c0_i32 = arith.constant 0 : i32
    %c0_i32_0 = arith.constant 0 : i32
    %c0_i32_1 = arith.constant 0 : i32
    return %c0_i32, %c0_i32_0 : i32, i32
  }
  func.func @transform_11(%arg0: i32) -> (i32, i32) {
    %c0_i32 = arith.constant 0 : i32
    %c0_i32_0 = arith.constant 0 : i32
    %c0_i32_1 = arith.constant 0 : i32
    return %c0_i32, %c0_i32_0 : i32, i32
  }
  func.func @transform_12(%arg0: i32) -> (i32, i32) {
    %c0_i32 = arith.constant 0 : i32
    %c0_i32_0 = arith.constant 0 : i32
    return %arg0, %c0_i32 : i32, i32
  }
}

</mosaic_0001>

<llo_original>
// kernel: _lambda_.5
$region0: #{_lambda_.5}
  #allocation0 [shape = 'u32[]', space=smem, size = 0x4, offset = 0x4, fixed_abs, tag = 'smem constant byte address 0x4 - core index']
  #allocation1 [shape = 'u32[144,128]{1,0:T(1,128)}', space=vmem, size = 0x12000, scoped, tag = 'internal scratch']
  #allocation2 [shape = 'f32[1]{0:T(128)S(6)}', space=smem, size = 0x200, scoped, tag = 'scoped memory for _lambda_.5']
  %s0 = inlined_call_operand.vmem [shape: f32[2,4], index: 0, kind: input, shape index: {}]
  %s1 = inlined_call_operand.<no memory space> [shape: f32[1], index: 1, kind: input, shape index: {}]
  %s2 = inlined_call_operand.vmem [shape: bf16[8,2,4,2,128], index: 2, kind: input, shape index: {}]
  %s3 = inlined_call_operand.vmem [shape: bf16[128,128], index: 3, kind: input, shape index: {}]
  %s4 = inlined_call_operand.vmem [shape: f32[1,128], index: 4, kind: input, shape index: {}]
  %s5 = inlined_call_operand.vmem [shape: f32[1,128], index: 5, kind: input, shape index: {}]
  %s6 = inlined_call_operand.vmem [shape: bf16[1,128,128], index: 6, kind: input, shape index: {}]
  %s7 = inlined_call_operand.vmem [shape: f32[1,1,128], index: 7, kind: input, shape index: {}]
  %s8 = inlined_call_operand.vmem [shape: f32[1,1,128], index: 8, kind: input, shape index: {}]
  %s9 = inlined_call_operand.vmem [shape: bf16[128,128], index: 9, kind: input, shape index: {}]
  %s10 = inlined_call_operand.vmem [shape: f32[1,128], index: 10, kind: input, shape index: {}]
  %s11 = inlined_call_operand.vmem [shape: f32[1,128], index: 11, kind: input, shape index: {}]
  %s12 = inlined_call_operand.vmem [shape: bf16[32,128], index: 12, kind: output, shape index: {}]
  %s13 = sld [smem:[#allocation0]]
  $region85: #{_lambda_.5} parent=0
    _
  %s15 = ssub.s32 1, %s13
  %s16 = scalar_select 0, %s15, %s13
  %17 = sst [smem:[#allocation2]] %s1
  $region1: #{_lambda_.5} parent=0
    #allocation3 [shape = 'u8[1024]{0}', space=smem, size = 0x400, scoped, tag = 'input window, operand 0, single buffered']
    #allocation4 [shape = 's32[2]{0}', space=sflag, size = 0x8, scoped, tag = 'scoped memory for _lambda_.5']
    %18 = vsyncpa [#allocation4], 0
    loop: start=0, step=1, limit=4
    $region2: #{_lambda_.5} parent=1 // loop_pre_header
      _
    $region3: #{_lambda_.5} parent=1 // loop_header
      %s20 = sphi 0, %s24
      %p21 = scmp.ge.s32.totalorder %s20, 4
      %s28 = sphi 0, %s28
      %s30 = sphi 0, %s28
      %s31 = sphi 0, %s30
      %s45 = sphi 0, %s31
      %s49 = sphi 0, %s49
      %s51 = sphi 0, %s49
      %s52 = sphi 0, %s51
      %s66 = sphi 0, %s52
      %s72 = sphi 0, %s74
      %s75 = sphi 0, %s72
      %s76 = sphi 0, %s75
      %s92 = sphi 0, %s76
      %s96 = sphi 0, %s96
      %s98 = sphi 0, %s96
      %s99 = sphi 0, %s98
      %s113 = sphi 0, %s99
      %s117 = sphi 0, %s117
      %s119 = sphi 0, %s117
      %s120 = sphi 0, %s119
      %s134 = sphi 0, %s120
      %s138 = sphi 0, %s138
      %s140 = sphi 0, %s138
      %s141 = sphi 0, %s140
      %s155 = sphi 0, %s141
      %s159 = sphi 0, %s159
      %s161 = sphi 0, %s159
      %s162 = sphi 0, %s161
      %s176 = sphi 0, %s162
      %s180 = sphi 0, %s180
      %s182 = sphi 0, %s180
      %s183 = sphi 0, %s182
      %s197 = sphi 0, %s183
      %s201 = sphi 0, %s201
      %s203 = sphi 0, %s201
      %s204 = sphi 0, %s203
      %s218 = sphi 0, %s204
      %s222 = sphi 0, %s222
      %s224 = sphi 0, %s222
      %s225 = sphi 0, %s224
      %s239 = sphi 0, %s225
      %s243 = sphi 0, %s243
      %s245 = sphi 0, %s243
      %s246 = sphi 0, %s245
      %s260 = sphi 0, %s246
      %s264 = sphi 0, %s264
      %s266 = sphi 0, %s264
      %s267 = sphi 0, %s266
      %s281 = sphi 0, %s267
      %s287 = sphi 0, %s289
      %s290 = sphi 0, %s287
      %s291 = sphi 0, %s290
      %s307 = sphi 0, %s291
    $region4: #{_lambda_.5} parent=1 // loop_header_branch
      %23 = sbr.rel (%p21) target = $region8
    $region5: #{_lambda_.5} parent=1 // loop_body
      %s25 = ssub.s32 %s20, 1
      %s26 = ssub.s32 %s20, 2
      %s27 = sadd.s32 %s20, 1
      %s29 = sadd.s32 %s28, 1
      %p32 = scmp.eq.s32.totalorder %s20, 1
      %p33 = scmp.ne.s32.totalorder %s28, %s30
      %p34 = scmp.eq.s32.totalorder %s20, 0
      %p35 = por %p33, %p34
      %p36 = scmp.ne.s32.totalorder %s28, %s30
      %p37 = scmp.eq.s32.totalorder %s25, 1
      %p38 = por %p36, %p37
      %p39 = scmp.ne.s32.totalorder %s30, %s31
      %p40 = scmp.eq.s32.totalorder %s25, 0
      %p41 = por %p39, %p40
      %p42 = scmp.ne.s32.totalorder %s30, %s31
      %p43 = scmp.eq.s32.totalorder %s26, 1
      %p44 = por %p42, %p43
      %p46 = scmp.ne.s32.totalorder %s31, %s45
      %p47 = scmp.eq.s32.totalorder %s26, 0
      %p48 = por %p46, %p47
      %s50 = sadd.s32 %s49, 1
      %p53 = scmp.eq.s32.totalorder %s20, 1
      %p54 = scmp.ne.s32.totalorder %s49, %s51
      %p55 = scmp.eq.s32.totalorder %s20, 0
      %p56 = por %p54, %p55
      %p57 = scmp.ne.s32.totalorder %s49, %s51
      %p58 = scmp.eq.s32.totalorder %s25, 1
      %p59 = por %p57, %p58
      %p60 = scmp.ne.s32.totalorder %s51, %s52
      %p61 = scmp.eq.s32.totalorder %s25, 0
      %p62 = por %p60, %p61
      %p63 = scmp.ne.s32.totalorder %s51, %s52
      %p64 = scmp.eq.s32.totalorder %s26, 1
      %p65 = por %p63, %p64
      %p67 = scmp.ne.s32.totalorder %s52, %s66
      %p68 = scmp.eq.s32.totalorder %s26, 0
      %p69 = por %p67, %p68
      %s70 = ssub.s32 %s20, %s27
      %p71 = scmp.eq.s32.totalorder %s70, 0
      %s73 = sadd.s32 %s72, 1
      %s74 = scalar_select %p71, %s72, %s73
      %p77 = pneg %p71
      %p78 = scmp.eq.s32.totalorder %s20, 1
      %p79 = por %p77, %p78
      %p80 = scmp.ne.s32.totalorder %s72, %s75
      %p81 = scmp.eq.s32.totalorder %s20, 0
      %p82 = por %p80, %p81
      %p83 = scmp.ne.s32.totalorder %s72, %s75
      %p84 = scmp.eq.s32.totalorder %s25, 1
      %p85 = por %p83, %p84
      %p86 = scmp.ne.s32.totalorder %s75, %s76
      %p87 = scmp.eq.s32.totalorder %s25, 0
      %p88 = por %p86, %p87
      %p89 = scmp.ne.s32.totalorder %s75, %s76
      %p90 = scmp.eq.s32.totalorder %s26, 1
      %p91 = por %p89, %p90
      %p93 = scmp.ne.s32.totalorder %s76, %s92
      %p94 = scmp.eq.s32.totalorder %s26, 0
      %p95 = por %p93, %p94
      %s97 = sadd.s32 %s96, 1
      %p100 = scmp.eq.s32.totalorder %s20, 1
      %p101 = scmp.ne.s32.totalorder %s96, %s98
      %p102 = scmp.eq.s32.totalorder %s20, 0
      %p103 = por %p101, %p102
      %p104 = scmp.ne.s32.totalorder %s96, %s98
      %p105 = scmp.eq.s32.totalorder %s25, 1
      %p106 = por %p104, %p105
      %p107 = scmp.ne.s32.totalorder %s98, %s99
      %p108 = scmp.eq.s32.totalorder %s25, 0
      %p109 = por %p107, %p108
      %p110 = scmp.ne.s32.totalorder %s98, %s99
      %p111 = scmp.eq.s32.totalorder %s26, 1
      %p112 = por %p110, %p111
      %p114 = scmp.ne.s32.totalorder %s99, %s113
      %p115 = scmp.eq.s32.totalorder %s26, 0
      %p116 = por %p114, %p115
      %s118 = sadd.s32 %s117, 1
      %p121 = scmp.eq.s32.totalorder %s20, 1
      %p122 = scmp.ne.s32.totalorder %s117, %s119
      %p123 = scmp.eq.s32.totalorder %s20, 0
      %p124 = por %p122, %p123
      %p125 = scmp.ne.s32.totalorder %s117, %s119
      %p126 = scmp.eq.s32.totalorder %s25, 1
      %p127 = por %p125, %p126
      %p128 = scmp.ne.s32.totalorder %s119, %s120
      %p129 = scmp.eq.s32.totalorder %s25, 0
      %p130 = por %p128, %p129
      %p131 = scmp.ne.s32.totalorder %s119, %s120
      %p132 = scmp.eq.s32.totalorder %s26, 1
      %p133 = por %p131, %p132
      %p135 = scmp.ne.s32.totalorder %s120, %s134
      %p136 = scmp.eq.s32.totalorder %s26, 0
      %p137 = por %p135, %p136
      %s139 = sadd.s32 %s138, 1
      %p142 = scmp.eq.s32.totalorder %s20, 1
      %p143 = scmp.ne.s32.totalorder %s138, %s140
      %p144 = scmp.eq.s32.totalorder %s20, 0
      %p145 = por %p143, %p144
      %p146 = scmp.ne.s32.totalorder %s138, %s140
      %p147 = scmp.eq.s32.totalorder %s25, 1
      %p148 = por %p146, %p147
      %p149 = scmp.ne.s32.totalorder %s140, %s141
      %p150 = scmp.eq.s32.totalorder %s25, 0
      %p151 = por %p149, %p150
      %p152 = scmp.ne.s32.totalorder %s140, %s141
      %p153 = scmp.eq.s32.totalorder %s26, 1
      %p154 = por %p152, %p153
      %p156 = scmp.ne.s32.totalorder %s141, %s155
      %p157 = scmp.eq.s32.totalorder %s26, 0
      %p158 = por %p156, %p157
      %s160 = sadd.s32 %s159, 1
      %p163 = scmp.eq.s32.totalorder %s20, 1
      %p164 = scmp.ne.s32.totalorder %s159, %s161
      %p165 = scmp.eq.s32.totalorder %s20, 0
      %p166 = por %p164, %p165
      %p167 = scmp.ne.s32.totalorder %s159, %s161
      %p168 = scmp.eq.s32.totalorder %s25, 1
      %p169 = por %p167, %p168
      %p170 = scmp.ne.s32.totalorder %s161, %s162
      %p171 = scmp.eq.s32.totalorder %s25, 0
      %p172 = por %p170, %p171
      %p173 = scmp.ne.s32.totalorder %s161, %s162
      %p174 = scmp.eq.s32.totalorder %s26, 1
      %p175 = por %p173, %p174
      %p177 = scmp.ne.s32.totalorder %s162, %s176
      %p178 = scmp.eq.s32.totalorder %s26, 0
      %p179 = por %p177, %p178
      %s181 = sadd.s32 %s180, 1
      %p184 = scmp.eq.s32.totalorder %s20, 1
      %p185 = scmp.ne.s32.totalorder %s180, %s182
      %p186 = scmp.eq.s32.totalorder %s20, 0
      %p187 = por %p185, %p186
      %p188 = scmp.ne.s32.totalorder %s180, %s182
      %p189 = scmp.eq.s32.totalorder %s25, 1
      %p190 = por %p188, %p189
      %p191 = scmp.ne.s32.totalorder %s182, %s183
      %p192 = scmp.eq.s32.totalorder %s25, 0
      %p193 = por %p191, %p192
      %p194 = scmp.ne.s32.totalorder %s182, %s183
      %p195 = scmp.eq.s32.totalorder %s26, 1
      %p196 = por %p194, %p195
      %p198 = scmp.ne.s32.totalorder %s183, %s197
      %p199 = scmp.eq.s32.totalorder %s26, 0
      %p200 = por %p198, %p199
      %s202 = sadd.s32 %s201, 1
      %p205 = scmp.eq.s32.totalorder %s20, 1
      %p206 = scmp.ne.s32.totalorder %s201, %s203
      %p207 = scmp.eq.s32.totalorder %s20, 0
      %p208 = por %p206, %p207
      %p209 = scmp.ne.s32.totalorder %s201, %s203
      %p210 = scmp.eq.s32.totalorder %s25, 1
      %p211 = por %p209, %p210
      %p212 = scmp.ne.s32.totalorder %s203, %s204
      %p213 = scmp.eq.s32.totalorder %s25, 0
      %p214 = por %p212, %p213
      %p215 = scmp.ne.s32.totalorder %s203, %s204
      %p216 = scmp.eq.s32.totalorder %s26, 1
      %p217 = por %p215, %p216
      %p219 = scmp.ne.s32.totalorder %s204, %s218
      %p220 = scmp.eq.s32.totalorder %s26, 0
      %p221 = por %p219, %p220
      %s223 = sadd.s32 %s222, 1
      %p226 = scmp.eq.s32.totalorder %s20, 1
      %p227 = scmp.ne.s32.totalorder %s222, %s224
      %p228 = scmp.eq.s32.totalorder %s20, 0
      %p229 = por %p227, %p228
      %p230 = scmp.ne.s32.totalorder %s222, %s224
      %p231 = scmp.eq.s32.totalorder %s25, 1
      %p232 = por %p230, %p231
      %p233 = scmp.ne.s32.totalorder %s224, %s225
      %p234 = scmp.eq.s32.totalorder %s25, 0
      %p235 = por %p233, %p234
      %p236 = scmp.ne.s32.totalorder %s224, %s225
      %p237 = scmp.eq.s32.totalorder %s26, 1
      %p238 = por %p236, %p237
      %p240 = scmp.ne.s32.totalorder %s225, %s239
      %p241 = scmp.eq.s32.totalorder %s26, 0
      %p242 = por %p240, %p241
      %s244 = sadd.s32 %s243, 1
      %p247 = scmp.eq.s32.totalorder %s20, 1
      %p248 = scmp.ne.s32.totalorder %s243, %s245
      %p249 = scmp.eq.s32.totalorder %s20, 0
      %p250 = por %p248, %p249
      %p251 = scmp.ne.s32.totalorder %s243, %s245
      %p252 = scmp.eq.s32.totalorder %s25, 1
      %p253 = por %p251, %p252
      %p254 = scmp.ne.s32.totalorder %s245, %s246
      %p255 = scmp.eq.s32.totalorder %s25, 0
      %p256 = por %p254, %p255
      %p257 = scmp.ne.s32.totalorder %s245, %s246
      %p258 = scmp.eq.s32.totalorder %s26, 1
      %p259 = por %p257, %p258
      %p261 = scmp.ne.s32.totalorder %s246, %s260
      %p262 = scmp.eq.s32.totalorder %s26, 0
      %p263 = por %p261, %p262
      %s265 = sadd.s32 %s264, 1
      %p268 = scmp.eq.s32.totalorder %s20, 1
      %p269 = scmp.ne.s32.totalorder %s264, %s266
      %p270 = scmp.eq.s32.totalorder %s20, 0
      %p271 = por %p269, %p270
      %p272 = scmp.ne.s32.totalorder %s264, %s266
      %p273 = scmp.eq.s32.totalorder %s25, 1
      %p274 = por %p272, %p273
      %p275 = scmp.ne.s32.totalorder %s266, %s267
      %p276 = scmp.eq.s32.totalorder %s25, 0
      %p277 = por %p275, %p276
      %p278 = scmp.ne.s32.totalorder %s266, %s267
      %p279 = scmp.eq.s32.totalorder %s26, 1
      %p280 = por %p278, %p279
      %p282 = scmp.ne.s32.totalorder %s267, %s281
      %p283 = scmp.eq.s32.totalorder %s26, 0
      %p284 = por %p282, %p283
      %s285 = ssub.s32 %s20, %s27
      %p286 = scmp.eq.s32.totalorder %s285, 0
      %s288 = sadd.s32 %s287, 1
      %s289 = scalar_select %p286, %s287, %s288
      %p292 = pneg %p286
      %p293 = scmp.eq.s32.totalorder %s20, 1
      %p294 = por %p292, %p293
      %p295 = scmp.ne.s32.totalorder %s287, %s290
      %p296 = scmp.eq.s32.totalorder %s20, 0
      %p297 = por %p295, %p296
      %p298 = scmp.ne.s32.totalorder %s287, %s290
      %p299 = scmp.eq.s32.totalorder %s25, 1
      %p300 = por %p298, %p299
      %p301 = scmp.ne.s32.totalorder %s290, %s291
      %p302 = scmp.eq.s32.totalorder %s25, 0
      %p303 = por %p301, %p302
      %p304 = scmp.ne.s32.totalorder %s290, %s291
      %p305 = scmp.eq.s32.totalorder %s26, 1
      %p306 = por %p304, %p305
      %p308 = scmp.ne.s32.totalorder %s291, %s307
      %p309 = scmp.eq.s32.totalorder %s26, 0
      %p310 = por %p308, %p309
      %p311 = scmp.le.s32.totalorder 1, %s20
      %p312 = scmp.lt.s32.totalorder %s20, 3
      %p313 = pnand %p311, %p312
      %p314 = pneg %p313
      // Predicated region
      $region9: #{_lambda_.5} parent=5 // pred_check
        _
      $region10: #{_lambda_.5} parent=5 // pred_check_branch
        %316 = sbr.rel (%p313) target = $region12
      $region11: #{_lambda_.5} parent=5 // pred_region
        %s317 = ssub.s32 %s20, 1
        // Predicated region
        $region13: #{_lambda_.5} parent=11 // pred_check
          %p318 = pneg %p41
        $region14: #{_lambda_.5} parent=11 // pred_check_branch
          %320 = sbr.rel (%p318) target = $region16
        $region15: #{_lambda_.5} parent=11 // pred_region
          %s322 = ssub.s32 32, 32
          %323 = vsyncadd [#allocation4], %s322
          %s325 = sshll.u32 %s0, 4
          %s326 = int_to_ptr.vmem [resolvable:$true] %s325
          %328 = dma.vmem_to_smem %s326, 32, [#allocation3], [#allocation4]
        $region16: #{_lambda_.5} parent=11 // pred_fallthru
          _
        // Predicated region
        $region17: #{_lambda_.5} parent=11 // pred_check
          %p329 = pneg %p62
        $region18: #{_lambda_.5} parent=11 // pred_check_branch
          %331 = sbr.rel (%p329) target = $region20
        $region19: #{_lambda_.5} parent=11 // pred_region
          _
        $region20: #{_lambda_.5} parent=11 // pred_fallthru
          _
        // Predicated region
        $region21: #{_lambda_.5} parent=11 // pred_check
          %p332 = pneg %p109
        $region22: #{_lambda_.5} parent=11 // pred_check_branch
          %334 = sbr.rel (%p332) target = $region24
        $region23: #{_lambda_.5} parent=11 // pred_region
          _
        $region24: #{_lambda_.5} parent=11 // pred_fallthru
          _
        // Predicated region
        $region25: #{_lambda_.5} parent=11 // pred_check
          %p335 = pneg %p130
        $region26: #{_lambda_.5} parent=11 // pred_check_branch
          %337 = sbr.rel (%p335) target = $region28
        $region27: #{_lambda_.5} parent=11 // pred_region
          _
        $region28: #{_lambda_.5} parent=11 // pred_fallthru
          _
        // Predicated region
        $region29: #{_lambda_.5} parent=11 // pred_check
          %p338 = pneg %p151
        $region30: #{_lambda_.5} parent=11 // pred_check_branch
          %340 = sbr.rel (%p338) target = $region32
        $region31: #{_lambda_.5} parent=11 // pred_region
          _
        $region32: #{_lambda_.5} parent=11 // pred_fallthru
          _
        // Predicated region
        $region33: #{_lambda_.5} parent=11 // pred_check
          %p341 = pneg %p172
        $region34: #{_lambda_.5} parent=11 // pred_check_branch
          %343 = sbr.rel (%p341) target = $region36
        $region35: #{_lambda_.5} parent=11 // pred_region
          _
        $region36: #{_lambda_.5} parent=11 // pred_fallthru
          _
        // Predicated region
        $region37: #{_lambda_.5} parent=11 // pred_check
          %p344 = pneg %p193
        $region38: #{_lambda_.5} parent=11 // pred_check_branch
          %346 = sbr.rel (%p344) target = $region40
        $region39: #{_lambda_.5} parent=11 // pred_region
          _
        $region40: #{_lambda_.5} parent=11 // pred_fallthru
          _
        // Predicated region
        $region41: #{_lambda_.5} parent=11 // pred_check
          %p347 = pneg %p214
        $region42: #{_lambda_.5} parent=11 // pred_check_branch
          %349 = sbr.rel (%p347) target = $region44
        $region43: #{_lambda_.5} parent=11 // pred_region
          _
        $region44: #{_lambda_.5} parent=11 // pred_fallthru
          _
        // Predicated region
        $region45: #{_lambda_.5} parent=11 // pred_check
          %p350 = pneg %p235
        $region46: #{_lambda_.5} parent=11 // pred_check_branch
          %352 = sbr.rel (%p350) target = $region48
        $region47: #{_lambda_.5} parent=11 // pred_region
          _
        $region48: #{_lambda_.5} parent=11 // pred_fallthru
          _
        // Predicated region
        $region49: #{_lambda_.5} parent=11 // pred_check
          %p353 = pneg %p256
        $region50: #{_lambda_.5} parent=11 // pred_check_branch
          %355 = sbr.rel (%p353) target = $region52
        $region51: #{_lambda_.5} parent=11 // pred_region
          _
        $region52: #{_lambda_.5} parent=11 // pred_fallthru
          _
        // Predicated region
        $region53: #{_lambda_.5} parent=11 // pred_check
          %p356 = pneg %p277
        $region54: #{_lambda_.5} parent=11 // pred_check_branch
          %358 = sbr.rel (%p356) target = $region56
        $region55: #{_lambda_.5} parent=11 // pred_region
          _
        $region56: #{_lambda_.5} parent=11 // pred_fallthru
          _
      $region12: #{_lambda_.5} parent=5 // pred_fallthru
        _
      %p359 = scmp.lt.s32.totalorder %s20, 2
      // Predicated region
      $region57: #{_lambda_.5} parent=5 // pred_check
        %p360 = pneg %p359
      $region58: #{_lambda_.5} parent=5 // pred_check_branch
        %362 = sbr.rel (%p360) target = $region60
      $region59: #{_lambda_.5} parent=5 // pred_region
        // Predicated region
        $region61: #{_lambda_.5} parent=59 // pred_check
          %p363 = pneg %p82
        $region62: #{_lambda_.5} parent=59 // pred_check_branch
          %365 = sbr.rel (%p363) target = $region64
        $region63: #{_lambda_.5} parent=59 // pred_region
          %s366 = smul.u32 4, %s20
          %p367 = scmp.lt.s32.totalorder %s366, 7
          %s368 = scalar_select %p367, %s366, 7
          %s369 = smul.addr %s368, 8
          %s370 = scalar_lea.vmem %s2, %s369
          %s371 = smul.u32 4, %s20
        $region64: #{_lambda_.5} parent=59 // pred_fallthru
          _
      $region60: #{_lambda_.5} parent=5 // pred_fallthru
        _
      %p372 = scmp.le.s32.totalorder 1, %s20
      %p373 = scmp.lt.s32.totalorder %s20, 3
      %p374 = pnand %p372, %p373
      %p375 = pneg %p374
      // Predicated region
      $region65: #{_lambda_.5} parent=5 // pred_check
        _
      $region66: #{_lambda_.5} parent=5 // pred_check_branch
        %377 = sbr.rel (%p374) target = $region68
      $region67: #{_lambda_.5} parent=5 // pred_region
        %s378 = ssub.s32 %s20, 1
        // Predicated region
        $region69: #{_lambda_.5} parent=67 // pred_check
          %p379 = pneg %p41
        $region70: #{_lambda_.5} parent=67 // pred_check_branch
          %381 = sbr.rel (%p379) target = $region72
        $region71: #{_lambda_.5} parent=67 // pred_region
          %382 = dma.done [#allocation4], 32
        $region72: #{_lambda_.5} parent=67 // pred_fallthru
          _
        %383 = sfence
        %p384 = pneg %p41
        %p385 = pneg %p38
        %p386 = pneg %p62
        %p387 = pneg %p59
        %s388 = smul.u32 4, %s25
        %p389 = scmp.lt.s32.totalorder %s388, 7
        %s390 = scalar_select %p389, %s388, 7
        %s391 = smul.addr %s390, 8
        %s392 = scalar_lea.vmem %s2, %s391
        %p393 = pneg %p88
        %p394 = pneg %p85
        %p395 = pneg %p109
        %p396 = pneg %p106
        %p397 = pneg %p130
        %p398 = pneg %p127
        %p399 = pneg %p151
        %p400 = pneg %p148
        %p401 = pneg %p172
        %p402 = pneg %p169
        %p403 = pneg %p193
        %p404 = pneg %p190
        %p405 = pneg %p214
        %p406 = pneg %p211
        %p407 = pneg %p235
        %p408 = pneg %p232
        %p409 = pneg %p256
        %p410 = pneg %p253
        %p411 = pneg %p277
        %p412 = pneg %p274
        %p413 = pneg %p303
        %p414 = pneg %p300
        %s415 = smul.u32 2, %s25
        %p416 = scmp.lt.s32.totalorder %s415, 3
        %s417 = scalar_select %p416, %s415, 3
        %s418 = smul.addr %s417, 4
        %s419 = scalar_lea.vmem %s12, %s418
        %s420 = smul.u32 4, %s25
        %p421 = scmp.lt.s32.totalorder %s420, 7
        %s422 = scalar_select %p421, %s420, 7
        %s423 = smul.addr %s422, 8
        %s424 = scalar_lea.vmem %s2, %s423
        %s425 = smul.u32 4, %s25
        %s426 = smul.u32 2, %s25
        %p427 = scmp.lt.s32.totalorder %s426, 3
        %s428 = scalar_select %p427, %s426, 3
        %s429 = smul.addr %s428, 4
        %s430 = scalar_lea.vmem %s12, %s429
        %s431 = smul.u32 2, %s25
        %v433 = vld [vmem:[%s424] sm:$0x1]
        %v434 = vld [vmem:[%s424 + $0x1] sm:$0x1]
        %v435 = vld [vmem:[%s424 + $0x2] sm:$0x1]
        %v436 = vld [vmem:[%s424 + $0x3] sm:$0x1]
        %v437 = vld [vmem:[%s424 + $0x4] sm:$0x1]
        %v438 = vld [vmem:[%s424 + $0x5] sm:$0x1]
        %v439 = vld [vmem:[%s424 + $0x6] sm:$0x1]
        %v440 = vld [vmem:[%s424 + $0x7] sm:$0x1]
        %v441 = vld [vmem:[%s424 + $0x8] sm:$0x1]
        %v442 = vld [vmem:[%s424 + $0x9] sm:$0x1]
        %v443 = vld [vmem:[%s424 + $0xa] sm:$0x1]
        %v444 = vld [vmem:[%s424 + $0xb] sm:$0x1]
        %v445 = vld [vmem:[%s424 + $0xc] sm:$0x1]
        %v446 = vld [vmem:[%s424 + $0xd] sm:$0x1]
        %v447 = vld [vmem:[%s424 + $0xe] sm:$0x1]
        %v448 = vld [vmem:[%s424 + $0xf] sm:$0x1]
        %v449 = vld [vmem:[%s424 + $0x10] sm:$0x1]
        %v450 = vld [vmem:[%s424 + $0x11] sm:$0x1]
        %v451 = vld [vmem:[%s424 + $0x12] sm:$0x1]
        %v452 = vld [vmem:[%s424 + $0x13] sm:$0x1]
        %v453 = vld [vmem:[%s424 + $0x14] sm:$0x1]
        %v454 = vld [vmem:[%s424 + $0x15] sm:$0x1]
        %v455 = vld [vmem:[%s424 + $0x16] sm:$0x1]
        %v456 = vld [vmem:[%s424 + $0x17] sm:$0x1]
        %v457 = vld [vmem:[%s424 + $0x18] sm:$0x1]
        %v458 = vld [vmem:[%s424 + $0x19] sm:$0x1]
        %v459 = vld [vmem:[%s424 + $0x1a] sm:$0x1]
        %v460 = vld [vmem:[%s424 + $0x1b] sm:$0x1]
        %v461 = vld [vmem:[%s424 + $0x1c] sm:$0x1]
        %v462 = vld [vmem:[%s424 + $0x1d] sm:$0x1]
        %v463 = vld [vmem:[%s424 + $0x1e] sm:$0x1]
        %v464 = vld [vmem:[%s424 + $0x1f] sm:$0x1]
        %v465 = vunpack.c.l.bf16 %v433
        %v466 = vunpack.c.l.bf16 %v434
        %v467 = vunpack.c.l.bf16 %v435
        %v468 = vunpack.c.l.bf16 %v436
        %v469 = vunpack.c.l.bf16 %v437
        %v470 = vunpack.c.l.bf16 %v438
        %v471 = vunpack.c.l.bf16 %v439
        %v472 = vunpack.c.l.bf16 %v440
        %v473 = vunpack.c.l.bf16 %v441
        %v474 = vunpack.c.l.bf16 %v442
        %v475 = vunpack.c.l.bf16 %v443
        %v476 = vunpack.c.l.bf16 %v444
        %v477 = vunpack.c.l.bf16 %v445
        %v478 = vunpack.c.l.bf16 %v446
        %v479 = vunpack.c.l.bf16 %v447
        %v480 = vunpack.c.l.bf16 %v448
        %v481 = vunpack.c.l.bf16 %v449
        %v482 = vunpack.c.l.bf16 %v450
        %v483 = vunpack.c.l.bf16 %v451
        %v484 = vunpack.c.l.bf16 %v452
        %v485 = vunpack.c.l.bf16 %v453
        %v486 = vunpack.c.l.bf16 %v454
        %v487 = vunpack.c.l.bf16 %v455
        %v488 = vunpack.c.l.bf16 %v456
        %v489 = vunpack.c.l.bf16 %v457
        %v490 = vunpack.c.l.bf16 %v458
        %v491 = vunpack.c.l.bf16 %v459
        %v492 = vunpack.c.l.bf16 %v460
        %v493 = vunpack.c.l.bf16 %v461
        %v494 = vunpack.c.l.bf16 %v462
        %v495 = vunpack.c.l.bf16 %v463
        %v496 = vunpack.c.l.bf16 %v464
        %v497 = vmax.f32 %v465, 0.0
        %v498 = vmax.f32 %v466, 0.0
        %v499 = vmax.f32 %v467, 0.0
        %v500 = vmax.f32 %v468, 0.0
        %v501 = vmax.f32 %v469, 0.0
        %v502 = vmax.f32 %v470, 0.0
        %v503 = vmax.f32 %v471, 0.0
        %v504 = vmax.f32 %v472, 0.0
        %v505 = vmax.f32 %v473, 0.0
        %v506 = vmax.f32 %v474, 0.0
        %v507 = vmax.f32 %v475, 0.0
        %v508 = vmax.f32 %v476, 0.0
        %v509 = vmax.f32 %v477, 0.0
        %v510 = vmax.f32 %v478, 0.0
        %v511 = vmax.f32 %v479, 0.0
        %v512 = vmax.f32 %v480, 0.0
        %v513 = vmax.f32 %v481, 0.0
        %v514 = vmax.f32 %v482, 0.0
        %v515 = vmax.f32 %v483, 0.0
        %v516 = vmax.f32 %v484, 0.0
        %v517 = vmax.f32 %v485, 0.0
        %v518 = vmax.f32 %v486, 0.0
        %v519 = vmax.f32 %v487, 0.0
        %v520 = vmax.f32 %v488, 0.0
        %v521 = vmax.f32 %v489, 0.0
        %v522 = vmax.f32 %v490, 0.0
        %v523 = vmax.f32 %v491, 0.0
        %v524 = vmax.f32 %v492, 0.0
        %v525 = vmax.f32 %v493, 0.0
        %v526 = vmax.f32 %v494, 0.0
        %v527 = vmax.f32 %v495, 0.0
        %v528 = vmax.f32 %v496, 0.0
        %v545 = vrot.slane %v497, 7
        %v546 = vrot.slane %v545, 2
        %v547 = vrot.slane %v498, 7
        %v548 = vrot.slane %v547, 2
        %v549 = vrot.slane %v499, 7
        %v550 = vrot.slane %v549, 2
        %v551 = vrot.slane %v500, 7
        %v552 = vrot.slane %v551, 2
        %v553 = vrot.slane %v505, 7
        %v554 = vrot.slane %v553, 2
        %v555 = vrot.slane %v506, 7
        %v556 = vrot.slane %v555, 2
        %v557 = vrot.slane %v507, 7
        %v558 = vrot.slane %v557, 2
        %v559 = vrot.slane %v508, 7
        %v560 = vrot.slane %v559, 2
        %v561 = vrot.slane %v513, 7
        %v562 = vrot.slane %v561, 2
        %v563 = vrot.slane %v514, 7
        %v564 = vrot.slane %v563, 2
        %v565 = vrot.slane %v515, 7
        %v566 = vrot.slane %v565, 2
        %v567 = vrot.slane %v516, 7
        %v568 = vrot.slane %v567, 2
        %v569 = vrot.slane %v521, 7
        %v570 = vrot.slane %v569, 2
        %v571 = vrot.slane %v522, 7
        %v572 = vrot.slane %v571, 2
        %v573 = vrot.slane %v523, 7
        %v574 = vrot.slane %v573, 2
        %v575 = vrot.slane %v524, 7
        %v576 = vrot.slane %v575, 2
        %v593 = vadd.f32 %v497, %v546
        %v594 = vadd.f32 %v498, %v548
        %v595 = vadd.f32 %v499, %v550
        %v596 = vadd.f32 %v500, %v552
        %v597 = vadd.f32 %v505, %v554
        %v598 = vadd.f32 %v506, %v556
        %v599 = vadd.f32 %v507, %v558
        %v600 = vadd.f32 %v508, %v560
        %v601 = vadd.f32 %v513, %v562
        %v602 = vadd.f32 %v514, %v564
        %v603 = vadd.f32 %v515, %v566
        %v604 = vadd.f32 %v516, %v568
        %v605 = vadd.f32 %v521, %v570
        %v606 = vadd.f32 %v522, %v572
        %v607 = vadd.f32 %v523, %v574
        %v608 = vadd.f32 %v524, %v576
        %v609 = vadd.f32 %v593, %v501
        %v610 = vadd.f32 %v594, %v502
        %v611 = vadd.f32 %v595, %v503
        %v612 = vadd.f32 %v596, %v504
        %v613 = vadd.f32 %v597, %v509
        %v614 = vadd.f32 %v598, %v510
        %v615 = vadd.f32 %v599, %v511
        %v616 = vadd.f32 %v600, %v512
        %v617 = vadd.f32 %v601, %v517
        %v618 = vadd.f32 %v602, %v518
        %v619 = vadd.f32 %v603, %v519
        %v620 = vadd.f32 %v604, %v520
        %v621 = vadd.f32 %v605, %v525
        %v622 = vadd.f32 %v606, %v526
        %v623 = vadd.f32 %v607, %v527
        %v624 = vadd.f32 %v608, %v528
        %v641 = vrot.slane %v501, 7
        %v642 = vrot.slane %v641, 2
        %v643 = vrot.slane %v502, 7
        %v644 = vrot.slane %v643, 2
        %v645 = vrot.slane %v503, 7
        %v646 = vrot.slane %v645, 2
        %v647 = vrot.slane %v504, 7
        %v648 = vrot.slane %v647, 2
        %v649 = vrot.slane %v509, 7
        %v650 = vrot.slane %v649, 2
        %v651 = vrot.slane %v510, 7
        %v652 = vrot.slane %v651, 2
        %v653 = vrot.slane %v511, 7
        %v654 = vrot.slane %v653, 2
        %v655 = vrot.slane %v512, 7
        %v656 = vrot.slane %v655, 2
        %v657 = vrot.slane %v517, 7
        %v658 = vrot.slane %v657, 2
        %v659 = vrot.slane %v518, 7
        %v660 = vrot.slane %v659, 2
        %v661 = vrot.slane %v519, 7
        %v662 = vrot.slane %v661, 2
        %v663 = vrot.slane %v520, 7
        %v664 = vrot.slane %v663, 2
        %v665 = vrot.slane %v525, 7
        %v666 = vrot.slane %v665, 2
        %v667 = vrot.slane %v526, 7
        %v668 = vrot.slane %v667, 2
        %v669 = vrot.slane %v527, 7
        %v670 = vrot.slane %v669, 2
        %v671 = vrot.slane %v528, 7
        %v672 = vrot.slane %v671, 2
        %v689 = vadd.f32 %v609, %v642
        %v690 = vadd.f32 %v610, %v644
        %v691 = vadd.f32 %v611, %v646
        %v692 = vadd.f32 %v612, %v648
        %v693 = vadd.f32 %v613, %v650
        %v694 = vadd.f32 %v614, %v652
        %v695 = vadd.f32 %v615, %v654
        %v696 = vadd.f32 %v616, %v656
        %v697 = vadd.f32 %v617, %v658
        %v698 = vadd.f32 %v618, %v660
        %v699 = vadd.f32 %v619, %v662
        %v700 = vadd.f32 %v620, %v664
        %v701 = vadd.f32 %v621, %v666
        %v702 = vadd.f32 %v622, %v668
        %v703 = vadd.f32 %v623, %v670
        %v704 = vadd.f32 %v624, %v672
        %v705 = vpack.c.bf16 %v689, %v689
        %v706 = vpack.c.bf16 %v690, %v690
        %v707 = vpack.c.bf16 %v691, %v691
        %v708 = vpack.c.bf16 %v692, %v692
        %v709 = vpack.c.bf16 %v693, %v693
        %v710 = vpack.c.bf16 %v694, %v694
        %v711 = vpack.c.bf16 %v695, %v695
        %v712 = vpack.c.bf16 %v696, %v696
        %v713 = vpack.c.bf16 %v697, %v697
        %v714 = vpack.c.bf16 %v698, %v698
        %v715 = vpack.c.bf16 %v699, %v699
        %v716 = vpack.c.bf16 %v700, %v700
        %v717 = vpack.c.bf16 %v701, %v701
        %v718 = vpack.c.bf16 %v702, %v702
        %v719 = vpack.c.bf16 %v703, %v703
        %v720 = vpack.c.bf16 %v704, %v704
        %v721 = vld [vmem:[%s3] sm:$0xf]
        %v722 = vld [vmem:[%s3 + $0x4] sm:$0xf]
        %v723 = vld [vmem:[%s3 + $0x8] sm:$0xf]
        %v724 = vld [vmem:[%s3 + $0xc] sm:$0xf]
        %v725 = vld [vmem:[%s3 + $0x10] sm:$0xf]
        %v726 = vld [vmem:[%s3 + $0x14] sm:$0xf]
        %v727 = vld [vmem:[%s3 + $0x18] sm:$0xf]
        %v728 = vld [vmem:[%s3 + $0x1c] sm:$0xf]
        %v729 = vld [vmem:[%s3 + $0x20] sm:$0xf]
        %v730 = vld [vmem:[%s3 + $0x24] sm:$0xf]
        %v731 = vld [vmem:[%s3 + $0x28] sm:$0xf]
        %v732 = vld [vmem:[%s3 + $0x2c] sm:$0xf]
        %v733 = vld [vmem:[%s3 + $0x30] sm:$0xf]
        %v734 = vld [vmem:[%s3 + $0x34] sm:$0xf]
        %v735 = vld [vmem:[%s3 + $0x38] sm:$0xf]
        %v736 = vld [vmem:[%s3 + $0x3c] sm:$0xf]
        %v753 = vunpack.c.l.b16 %v705
        %v754 = vunpack.c.l.b16 %v706
        %v755 = vunpack.c.l.b16 %v707
        %v756 = vunpack.c.l.b16 %v708
        %v757 = vunpack.c.l.b16 %v709
        %v758 = vunpack.c.l.b16 %v710
        %v759 = vunpack.c.l.b16 %v711
        %v760 = vunpack.c.l.b16 %v712
        %v761 = vunpack.c.l.b16 %v713
        %v762 = vunpack.c.l.b16 %v714
        %v763 = vunpack.c.l.b16 %v715
        %v764 = vunpack.c.l.b16 %v716
        %v765 = vunpack.c.l.b16 %v717
        %v766 = vunpack.c.l.b16 %v718
        %v767 = vunpack.c.l.b16 %v719
        %v768 = vunpack.c.l.b16 %v720
        %v769 = vrot.slane %v754, 7
        %vm770 = vcmask 1041409
        %v771 = vsel %vm770, %v769, %v753
        %v772 = vrot.slane %v755, 6
        %vm773 = vcmask 1042434
        %v774 = vsel %vm773, %v772, %v771
        %v775 = vrot.slane %v756, 5
        %vm776 = vcmask 1043459
        %v777 = vsel %vm776, %v775, %v774
        %v778 = vrot.slane %v757, 4
        %vm779 = vcmask 1044484
        %v780 = vsel %vm779, %v778, %v777
        %v781 = vrot.slane %v758, 3
        %vm782 = vcmask 1045509
        %v783 = vsel %vm782, %v781, %v780
        %v784 = vrot.slane %v759, 2
        %vm785 = vcmask 1046534
        %v786 = vsel %vm785, %v784, %v783
        %v787 = vrot.slane %v760, 1
        %vm788 = vcmask 1047559
        %v789 = vsel %vm788, %v787, %v786
        %v790 = vrot.slane %v762, 7
        %v791 = vsel %vm770, %v790, %v761
        %v792 = vrot.slane %v763, 6
        %v793 = vsel %vm773, %v792, %v791
        %v794 = vrot.slane %v764, 5
        %v795 = vsel %vm776, %v794, %v793
        %v796 = vrot.slane %v765, 4
        %v797 = vsel %vm779, %v796, %v795
        %v798 = vrot.slane %v766, 3
        %v799 = vsel %vm782, %v798, %v797
        %v800 = vrot.slane %v767, 2
        %v801 = vsel %vm785, %v800, %v799
        %v802 = vrot.slane %v768, 1
        %v803 = vsel %vm788, %v802, %v801
        %v804 = vpack.c.b16 %v803, %v789
        %v822 = vunpack.c.l.b16 %v721
        %v823 = vunpack.c.l.b16 %v722
        %v824 = vunpack.c.l.b16 %v723
        %v825 = vunpack.c.l.b16 %v724
        %v826 = vunpack.c.l.b16 %v725
        %v827 = vunpack.c.l.b16 %v726
        %v828 = vunpack.c.l.b16 %v727
        %v829 = vunpack.c.l.b16 %v728
        %v830 = vunpack.c.l.b16 %v729
        %v831 = vunpack.c.l.b16 %v730
        %v832 = vunpack.c.l.b16 %v731
        %v833 = vunpack.c.l.b16 %v732
        %v834 = vunpack.c.l.b16 %v733
        %v835 = vunpack.c.l.b16 %v734
        %v836 = vunpack.c.l.b16 %v735
        %v837 = vunpack.c.l.b16 %v736
        %v838 = vpack.c.b16 %v823, %v822
        %v839 = vpack.c.b16 %v825, %v824
        %v840 = vpack.c.b16 %v827, %v826
        %v841 = vpack.c.b16 %v829, %v828
        %v842 = vpack.c.b16 %v831, %v830
        %v843 = vpack.c.b16 %v833, %v832
        %v844 = vpack.c.b16 %v835, %v834
        %v845 = vpack.c.b16 %v837, %v836
        %854 = vmatprep.subr.bf16.mxu0 0
        %855 = vmatpush1.bf16.msra.mxu0 %v845
        %856 = vmatprep.subr.bf16.mxu0 0
        %857 = vmatpush1.bf16.msra.mxu0 %v844
        %858 = vmatprep.subr.bf16.mxu0 0
        %859 = vmatpush1.bf16.msra.mxu0 %v843
        %860 = vmatprep.subr.bf16.mxu0 0
        %861 = vmatpush1.bf16.msra.mxu0 %v842
        %862 = vmatprep.subr.bf16.mxu0 0
        %863 = vmatpush1.bf16.msra.mxu0 %v841
        %864 = vmatprep.subr.bf16.mxu0 0
        %865 = vmatpush1.bf16.msra.mxu0 %v840
        %866 = vmatprep.subr.bf16.mxu0 0
        %867 = vmatpush1.bf16.msra.mxu0 %v839
        %868 = vmatprep.subr.bf16.mxu0 0
        %869 = vmatpush1.bf16.msra.mxu0 %v838
        %870 = vmatprep.subr.bf16.mxu0 0
        %871 = vmatpush2.bf16.msra.mxu0 0
        %872 = vmatprep.subr.bf16.mxu0 0
        %873 = vmatpush2.bf16.msra.mxu0 0
        %874 = vmatprep.subr.bf16.mxu0 0
        %875 = vmatpush2.bf16.msra.mxu0 0
        %876 = vmatprep.subr.bf16.mxu0 0
        %877 = vmatpush2.bf16.msra.mxu0 0
        %878 = vmatprep.subr.bf16.mxu0 0
        %879 = vmatpush2.bf16.msra.mxu0 0
        %880 = vmatprep.subr.bf16.mxu0 0
        %881 = vmatpush2.bf16.msra.mxu0 0
        %882 = vmatprep.subr.bf16.mxu0 0
        %883 = vmatpush2.bf16.msra.mxu0 0
        %884 = vmatprep.subr.bf16.mxu0 0
        %885 = vmatpush2.bf16.msra.mxu0 0
        %886 = vmatprep.mubr.bf16.mxu0 0
        %887 = vmatmul.mubr.bf16.gmra.mxu0 %v804
        %v888 = vpop.f32.mrf.mxu0
        %v889 = vadd.f32 0.0, %v888
        %v890 = vpop.f32.mrf.mxu0
        %v891 = vpop.f32.mrf.mxu0
        %v892 = vadd.f32 0.0, %v891
        %v893 = vpop.f32.mrf.mxu0
        %894 = vdwg.mxu0
        %v895 = vld [vmem:[%s4] sm:$0x1]
        %v897 = vlaneseq
        %v898 = vshrl.u32 %v897, 7
        %v899 = vsub.s32 0, %v898
        %v900 = vrot.slane %v895, %v899
        %v902 = vmul.f32 %v889, %v900
        %v903 = vmul.f32 %v892, %v900
        %v904 = vld [vmem:[%s5] sm:$0x1]
        %v906 = vlaneseq
        %v907 = vshrl.u32 %v906, 7
        %v908 = vsub.s32 0, %v907
        %v909 = vrot.slane %v904, %v908
        %v911 = vadd.f32 %v902, %v909
        %v912 = vadd.f32 %v903, %v909
        %s913 = sld [smem:[#allocation3]]
        %v914 = vstv %s913
        %v915 = vmul.f32 %v914, %v911
        %v916 = vmul.f32 %v914, %v912
        %s917 = sld [smem:[#allocation3 + $0x1]]
        %v918 = vstv %s917
        %v919 = vmul.f32 %v918, %v911
        %v920 = vmul.f32 %v918, %v912
        %v921 = vadd.f32 %v915, %v919
        %v922 = vadd.f32 %v916, %v920
        %v923 = vmax.f32 %v921, 0.0
        %v924 = vmax.f32 %v922, 0.0
        %v925 = vpack.c.bf16 %v924, %v923
        %v926 = vld [vmem:[%s6] sm:$0xf]
        %v927 = vld [vmem:[%s6 + $0x4] sm:$0xf]
        %v928 = vld [vmem:[%s6 + $0x8] sm:$0xf]
        %v929 = vld [vmem:[%s6 + $0xc] sm:$0xf]
        %v930 = vld [vmem:[%s6 + $0x10] sm:$0xf]
        %v931 = vld [vmem:[%s6 + $0x14] sm:$0xf]
        %v932 = vld [vmem:[%s6 + $0x18] sm:$0xf]
        %v933 = vld [vmem:[%s6 + $0x1c] sm:$0xf]
        %v934 = vld [vmem:[%s6 + $0x20] sm:$0xf]
        %v935 = vld [vmem:[%s6 + $0x24] sm:$0xf]
        %v936 = vld [vmem:[%s6 + $0x28] sm:$0xf]
        %v937 = vld [vmem:[%s6 + $0x2c] sm:$0xf]
        %v938 = vld [vmem:[%s6 + $0x30] sm:$0xf]
        %v939 = vld [vmem:[%s6 + $0x34] sm:$0xf]
        %v940 = vld [vmem:[%s6 + $0x38] sm:$0xf]
        %v941 = vld [vmem:[%s6 + $0x3c] sm:$0xf]
        %v958 = vunpack.c.l.b16 %v926
        %v959 = vunpack.c.l.b16 %v927
        %v960 = vunpack.c.l.b16 %v928
        %v961 = vunpack.c.l.b16 %v929
        %v962 = vunpack.c.l.b16 %v930
        %v963 = vunpack.c.l.b16 %v931
        %v964 = vunpack.c.l.b16 %v932
        %v965 = vunpack.c.l.b16 %v933
        %v966 = vunpack.c.l.b16 %v934
        %v967 = vunpack.c.l.b16 %v935
        %v968 = vunpack.c.l.b16 %v936
        %v969 = vunpack.c.l.b16 %v937
        %v970 = vunpack.c.l.b16 %v938
        %v971 = vunpack.c.l.b16 %v939
        %v972 = vunpack.c.l.b16 %v940
        %v973 = vunpack.c.l.b16 %v941
        %v974 = vpack.c.b16 %v959, %v958
        %v975 = vpack.c.b16 %v961, %v960
        %v976 = vpack.c.b16 %v963, %v962
        %v977 = vpack.c.b16 %v965, %v964
        %v978 = vpack.c.b16 %v967, %v966
        %v979 = vpack.c.b16 %v969, %v968
        %v980 = vpack.c.b16 %v971, %v970
        %v981 = vpack.c.b16 %v973, %v972
        %990 = vmatprep.subr.bf16.mxu0 0
        %991 = vmatpush1.bf16.msra.mxu0 %v981
        %992 = vmatprep.subr.bf16.mxu0 0
        %993 = vmatpush1.bf16.msra.mxu0 %v980
        %994 = vmatprep.subr.bf16.mxu0 0
        %995 = vmatpush1.bf16.msra.mxu0 %v979
        %996 = vmatprep.subr.bf16.mxu0 0
        %997 = vmatpush1.bf16.msra.mxu0 %v978
        %998 = vmatprep.subr.bf16.mxu0 0
        %999 = vmatpush1.bf16.msra.mxu0 %v977
        %1000 = vmatprep.subr.bf16.mxu0 0
        %1001 = vmatpush1.bf16.msra.mxu0 %v976
        %1002 = vmatprep.subr.bf16.mxu0 0
        %1003 = vmatpush1.bf16.msra.mxu0 %v975
        %1004 = vmatprep.subr.bf16.mxu0 0
        %1005 = vmatpush1.bf16.msra.mxu0 %v974
        %1006 = vmatprep.subr.bf16.mxu0 0
        %1007 = vmatpush2.bf16.msra.mxu0 0
        %1008 = vmatprep.subr.bf16.mxu0 0
        %1009 = vmatpush2.bf16.msra.mxu0 0
        %1010 = vmatprep.subr.bf16.mxu0 0
        %1011 = vmatpush2.bf16.msra.mxu0 0
        %1012 = vmatprep.subr.bf16.mxu0 0
        %1013 = vmatpush2.bf16.msra.mxu0 0
        %1014 = vmatprep.subr.bf16.mxu0 0
        %1015 = vmatpush2.bf16.msra.mxu0 0
        %1016 = vmatprep.subr.bf16.mxu0 0
        %1017 = vmatpush2.bf16.msra.mxu0 0
        %1018 = vmatprep.subr.bf16.mxu0 0
        %1019 = vmatpush2.bf16.msra.mxu0 0
        %1020 = vmatprep.subr.bf16.mxu0 0
        %1021 = vmatpush2.bf16.msra.mxu0 0
        %1022 = vmatprep.mubr.bf16.mxu0 0
        %1023 = vmatmul.mubr.bf16.gmra.mxu0 %v925
        %v1024 = vpop.f32.mrf.mxu0
        %v1025 = vadd.f32 0.0, %v1024
        %v1026 = vpop.f32.mrf.mxu0
        %v1027 = vpop.f32.mrf.mxu0
        %v1028 = vadd.f32 0.0, %v1027
        %v1029 = vpop.f32.mrf.mxu0
        %1030 = vdwg.mxu0
        %v1031 = vld [vmem:[%s7] sm:$0x1]
        %v1033 = vlaneseq
        %v1034 = vshrl.u32 %v1033, 7
        %v1035 = vsub.s32 0, %v1034
        %v1036 = vrot.slane %v1031, %v1035
        %v1038 = vmul.f32 %v1025, %v1036
        %v1039 = vmul.f32 %v1028, %v1036
        %v1040 = vld [vmem:[%s8] sm:$0x1]
        %v1042 = vlaneseq
        %v1043 = vshrl.u32 %v1042, 7
        %v1044 = vsub.s32 0, %v1043
        %v1045 = vrot.slane %v1040, %v1044
        %v1047 = vadd.f32 %v1038, %v1045
        %v1048 = vadd.f32 %v1039, %v1045
        %s1049 = sld [smem:[#allocation3 + $0x80]]
        %v1050 = vstv %s1049
        %v1051 = vmul.f32 %v1050, %v911
        %v1052 = vmul.f32 %v1050, %v912
        %s1053 = sld [smem:[#allocation3 + $0x81]]
        %v1054 = vstv %s1053
        %v1055 = vmul.f32 %v1054, %v911
        %v1056 = vmul.f32 %v1054, %v912
        %v1057 = vadd.f32 %v1051, %v1055
        %v1058 = vadd.f32 %v1052, %v1056
        %s1059 = sld [smem:[#allocation3 + $0x82]]
        %v1060 = vstv %s1059
        %v1061 = vmul.f32 %v1060, %v1047
        %v1062 = vmul.f32 %v1060, %v1048
        %v1063 = vadd.f32 %v1057, %v1061
        %v1064 = vadd.f32 %v1058, %v1062
        %v1065 = vmax.f32 %v1063, 0.0
        %v1066 = vmax.f32 %v1064, 0.0
        %v1067 = vpack.c.bf16 %v1066, %v1065
        %v1068 = vld [vmem:[%s9] sm:$0xf]
        %v1069 = vld [vmem:[%s9 + $0x4] sm:$0xf]
        %v1070 = vld [vmem:[%s9 + $0x8] sm:$0xf]
        %v1071 = vld [vmem:[%s9 + $0xc] sm:$0xf]
        %v1072 = vld [vmem:[%s9 + $0x10] sm:$0xf]
        %v1073 = vld [vmem:[%s9 + $0x14] sm:$0xf]
        %v1074 = vld [vmem:[%s9 + $0x18] sm:$0xf]
        %v1075 = vld [vmem:[%s9 + $0x1c] sm:$0xf]
        %v1076 = vld [vmem:[%s9 + $0x20] sm:$0xf]
        %v1077 = vld [vmem:[%s9 + $0x24] sm:$0xf]
        %v1078 = vld [vmem:[%s9 + $0x28] sm:$0xf]
        %v1079 = vld [vmem:[%s9 + $0x2c] sm:$0xf]
        %v1080 = vld [vmem:[%s9 + $0x30] sm:$0xf]
        %v1081 = vld [vmem:[%s9 + $0x34] sm:$0xf]
        %v1082 = vld [vmem:[%s9 + $0x38] sm:$0xf]
        %v1083 = vld [vmem:[%s9 + $0x3c] sm:$0xf]
        %v1100 = vunpack.c.l.b16 %v1068
        %v1101 = vunpack.c.l.b16 %v1069
        %v1102 = vunpack.c.l.b16 %v1070
        %v1103 = vunpack.c.l.b16 %v1071
        %v1104 = vunpack.c.l.b16 %v1072
        %v1105 = vunpack.c.l.b16 %v1073
        %v1106 = vunpack.c.l.b16 %v1074
        %v1107 = vunpack.c.l.b16 %v1075
        %v1108 = vunpack.c.l.b16 %v1076
        %v1109 = vunpack.c.l.b16 %v1077
        %v1110 = vunpack.c.l.b16 %v1078
        %v1111 = vunpack.c.l.b16 %v1079
        %v1112 = vunpack.c.l.b16 %v1080
        %v1113 = vunpack.c.l.b16 %v1081
        %v1114 = vunpack.c.l.b16 %v1082
        %v1115 = vunpack.c.l.b16 %v1083
        %v1116 = vpack.c.b16 %v1101, %v1100
        %v1117 = vpack.c.b16 %v1103, %v1102
        %v1118 = vpack.c.b16 %v1105, %v1104
        %v1119 = vpack.c.b16 %v1107, %v1106
        %v1120 = vpack.c.b16 %v1109, %v1108
        %v1121 = vpack.c.b16 %v1111, %v1110
        %v1122 = vpack.c.b16 %v1113, %v1112
        %v1123 = vpack.c.b16 %v1115, %v1114
        %1132 = vmatprep.subr.bf16.mxu0 0
        %1133 = vmatpush1.bf16.msra.mxu0 %v1123
        %1134 = vmatprep.subr.bf16.mxu0 0
        %1135 = vmatpush1.bf16.msra.mxu0 %v1122
        %1136 = vmatprep.subr.bf16.mxu0 0
        %1137 = vmatpush1.bf16.msra.mxu0 %v1121
        %1138 = vmatprep.subr.bf16.mxu0 0
        %1139 = vmatpush1.bf16.msra.mxu0 %v1120
        %1140 = vmatprep.subr.bf16.mxu0 0
        %1141 = vmatpush1.bf16.msra.mxu0 %v1119
        %1142 = vmatprep.subr.bf16.mxu0 0
        %1143 = vmatpush1.bf16.msra.mxu0 %v1118
        %1144 = vmatprep.subr.bf16.mxu0 0
        %1145 = vmatpush1.bf16.msra.mxu0 %v1117
        %1146 = vmatprep.subr.bf16.mxu0 0
        %1147 = vmatpush1.bf16.msra.mxu0 %v1116
        %1148 = vmatprep.subr.bf16.mxu0 0
        %1149 = vmatpush2.bf16.msra.mxu0 0
        %1150 = vmatprep.subr.bf16.mxu0 0
        %1151 = vmatpush2.bf16.msra.mxu0 0
        %1152 = vmatprep.subr.bf16.mxu0 0
        %1153 = vmatpush2.bf16.msra.mxu0 0
        %1154 = vmatprep.subr.bf16.mxu0 0
        %1155 = vmatpush2.bf16.msra.mxu0 0
        %1156 = vmatprep.subr.bf16.mxu0 0
        %1157 = vmatpush2.bf16.msra.mxu0 0
        %1158 = vmatprep.subr.bf16.mxu0 0
        %1159 = vmatpush2.bf16.msra.mxu0 0
        %1160 = vmatprep.subr.bf16.mxu0 0
        %1161 = vmatpush2.bf16.msra.mxu0 0
        %1162 = vmatprep.subr.bf16.mxu0 0
        %1163 = vmatpush2.bf16.msra.mxu0 0
        %1164 = vmatprep.mubr.bf16.mxu0 0
        %1165 = vmatmul.mubr.bf16.gmra.mxu0 %v1067
        %v1166 = vpop.f32.mrf.mxu0
        %v1167 = vadd.f32 0.0, %v1166
        %v1168 = vpop.f32.mrf.mxu0
        %v1169 = vpop.f32.mrf.mxu0
        %v1170 = vadd.f32 0.0, %v1169
        %v1171 = vpop.f32.mrf.mxu0
        %1172 = vdwg.mxu0
        %v1173 = vld [vmem:[%s10] sm:$0x1]
        %v1175 = vlaneseq
        %v1176 = vshrl.u32 %v1175, 7
        %v1177 = vsub.s32 0, %v1176
        %v1178 = vrot.slane %v1173, %v1177
        %v1180 = vmul.f32 %v1167, %v1178
        %v1181 = vmul.f32 %v1170, %v1178
        %v1182 = vld [vmem:[%s11] sm:$0x1]
        %v1184 = vlaneseq
        %v1185 = vshrl.u32 %v1184, 7
        %v1186 = vsub.s32 0, %v1185
        %v1187 = vrot.slane %v1182, %v1186
        %v1189 = vadd.f32 %v1180, %v1187
        %v1190 = vadd.f32 %v1181, %v1187
        %s1191 = sld [smem:[#allocation2]]
        %v1192 = vstv %s1191
        %v1193 = vmul.f32 %v1192, %v1047
        %v1194 = vmul.f32 %v1192, %v1048
        %v1195 = vadd.f32 %v1193, %v1189
        %v1196 = vadd.f32 %v1194, %v1190
        %v1197 = vpack.c.bf16 %v1196, %v1195
        %v1199 = vunpack.c.l.b16 %v1197
        %v1200 = vunpack.c.h.b16 %v1197
        %v1201 = vpack.c.b16 %v1199, %v1199
        %v1202 = vpack.c.b16 %v1200, %v1200
        %1205 = vst [vmem:[%s430] sm:$0xf] %v1201
        %1206 = vst [vmem:[%s430 + $0x4] sm:$0xf] %v1202
        %s1207 = smul.u32 2, %s25
        %p1208 = scmp.lt.s32.totalorder %s1207, 3
        %s1209 = scalar_select %p1208, %s1207, 3
        %s1210 = smul.addr %s1209, 4
        %s1211 = scalar_lea.vmem %s12, %s1210
        // Predicated region
        $region73: #{_lambda_.5} parent=67 // pred_check
          %p1212 = pneg %p300
        $region74: #{_lambda_.5} parent=67 // pred_check_branch
          %1214 = sbr.rel (%p1212) target = $region76
        $region75: #{_lambda_.5} parent=67 // pred_region
          %s1215 = smul.u32 2, %s25
        $region76: #{_lambda_.5} parent=67 // pred_fallthru
          _
      $region68: #{_lambda_.5} parent=5 // pred_fallthru
        _
      %p1216 = scmp.le.s32.totalorder 2, %s20
      // Predicated region
      $region77: #{_lambda_.5} parent=5 // pred_check
        %p1217 = pneg %p1216
      $region78: #{_lambda_.5} parent=5 // pred_check_branch
        %1219 = sbr.rel (%p1217) target = $region80
      $region79: #{_lambda_.5} parent=5 // pred_region
        %s1220 = ssub.s32 %s20, 2
        // Predicated region
        $region81: #{_lambda_.5} parent=79 // pred_check
          %p1221 = pneg %p306
        $region82: #{_lambda_.5} parent=79 // pred_check_branch
          %1223 = sbr.rel (%p1221) target = $region84
        $region83: #{_lambda_.5} parent=79 // pred_region
          %s1224 = smul.u32 2, %s26
          %p1225 = scmp.lt.s32.totalorder %s1224, 3
          %s1226 = scalar_select %p1225, %s1224, 3
          %s1227 = smul.addr %s1226, 4
          %s1228 = scalar_lea.vmem %s12, %s1227
        $region84: #{_lambda_.5} parent=79 // pred_fallthru
          _
      $region80: #{_lambda_.5} parent=5 // pred_fallthru
        _
    $region6: #{_lambda_.5} parent=1 // loop_footer
      %s24 = sadd.s32 1, %s20
    $region7: #{_lambda_.5} parent=1 // loop_footer_branch
      %19 = sbr.rel target = $region3
    $region8: #{_lambda_.5} parent=1 // loop_exit
      _
    %1229 = vsyncpa [#allocation4], 1
    %s1230 = scalar_lea.sflag [#allocation4], 1
    %1231 = vsyncpa %s1230, 1

// kernel: _lambda_.3
$region0: #{_lambda_.3}
  #allocation0 [shape = 'u32[]', space=smem, size = 0x4, offset = 0x4, fixed_abs, tag = 'smem constant byte address 0x4 - core index']
  #allocation1 [shape = 'u32[144,128]{1,0:T(1,128)}', space=vmem, size = 0x12000, scoped, tag = 'internal scratch']
  #allocation2 [shape = 'f32[1]{0:T(128)S(6)}', space=smem, size = 0x200, scoped, tag = 'scoped memory for _lambda_.3']
  %s0 = inlined_call_operand.vmem [shape: f32[2,4], index: 0, kind: input, shape index: {}]
  %s1 = inlined_call_operand.<no memory space> [shape: f32[1], index: 1, kind: input, shape index: {}]
  %s2 = inlined_call_operand.vmem [shape: bf16[512,32], index: 2, kind: input, shape index: {}]
  %s3 = inlined_call_operand.vmem [shape: bf16[32,128], index: 3, kind: input, shape index: {}]
  %s4 = inlined_call_operand.vmem [shape: f32[1,128], index: 4, kind: input, shape index: {}]
  %s5 = inlined_call_operand.vmem [shape: f32[1,128], index: 5, kind: input, shape index: {}]
  %s6 = inlined_call_operand.vmem [shape: bf16[1,128,128], index: 6, kind: input, shape index: {}]
  %s7 = inlined_call_operand.vmem [shape: f32[1,1,128], index: 7, kind: input, shape index: {}]
  %s8 = inlined_call_operand.vmem [shape: f32[1,1,128], index: 8, kind: input, shape index: {}]
  %s9 = inlined_call_operand.vmem [shape: bf16[128,128], index: 9, kind: input, shape index: {}]
  %s10 = inlined_call_operand.vmem [shape: f32[1,128], index: 10, kind: input, shape index: {}]
  %s11 = inlined_call_operand.vmem [shape: f32[1,128], index: 11, kind: input, shape index: {}]
  %s12 = inlined_call_operand.vmem [shape: bf16[512,128], index: 12, kind: output, shape index: {}]
  %s13 = sld [smem:[#allocation0]]
  $region85: #{_lambda_.3} parent=0
    _
  %s15 = ssub.s32 1, %s13
  %s16 = scalar_select 0, %s15, %s13
  %17 = sst [smem:[#allocation2]] %s1
  $region1: #{_lambda_.3} parent=0
    #allocation3 [shape = 'u8[1024]{0}', space=smem, size = 0x400, scoped, tag = 'input window, operand 0, single buffered']
    #allocation4 [shape = 's32[2]{0}', space=sflag, size = 0x8, scoped, tag = 'scoped memory for _lambda_.3']
    %18 = vsyncpa [#allocation4], 0
    loop: start=0, step=1, limit=4
    $region2: #{_lambda_.3} parent=1 // loop_pre_header
      _
    $region3: #{_lambda_.3} parent=1 // loop_header
      %s20 = sphi 0, %s24
      %p21 = scmp.ge.s32.totalorder %s20, 4
      %s28 = sphi 0, %s28
      %s30 = sphi 0, %s28
      %s31 = sphi 0, %s30
      %s45 = sphi 0, %s31
      %s49 = sphi 0, %s49
      %s51 = sphi 0, %s49
      %s52 = sphi 0, %s51
      %s66 = sphi 0, %s52
      %s72 = sphi 0, %s74
      %s75 = sphi 0, %s72
      %s76 = sphi 0, %s75
      %s92 = sphi 0, %s76
      %s96 = sphi 0, %s96
      %s98 = sphi 0, %s96
      %s99 = sphi 0, %s98
      %s113 = sphi 0, %s99
      %s117 = sphi 0, %s117
      %s119 = sphi 0, %s117
      %s120 = sphi 0, %s119
      %s134 = sphi 0, %s120
      %s138 = sphi 0, %s138
      %s140 = sphi 0, %s138
      %s141 = sphi 0, %s140
      %s155 = sphi 0, %s141
      %s159 = sphi 0, %s159
      %s161 = sphi 0, %s159
      %s162 = sphi 0, %s161
      %s176 = sphi 0, %s162
      %s180 = sphi 0, %s180
      %s182 = sphi 0, %s180
      %s183 = sphi 0, %s182
      %s197 = sphi 0, %s183
      %s201 = sphi 0, %s201
      %s203 = sphi 0, %s201
      %s204 = sphi 0, %s203
      %s218 = sphi 0, %s204
      %s222 = sphi 0, %s222
      %s224 = sphi 0, %s222
      %s225 = sphi 0, %s224
      %s239 = sphi 0, %s225
      %s243 = sphi 0, %s243
      %s245 = sphi 0, %s243
      %s246 = sphi 0, %s245
      %s260 = sphi 0, %s246
      %s264 = sphi 0, %s264
      %s266 = sphi 0, %s264
      %s267 = sphi 0, %s266
      %s281 = sphi 0, %s267
      %s287 = sphi 0, %s289
      %s290 = sphi 0, %s287
      %s291 = sphi 0, %s290
      %s307 = sphi 0, %s291
    $region4: #{_lambda_.3} parent=1 // loop_header_branch
      %23 = sbr.rel (%p21) target = $region8
    $region5: #{_lambda_.3} parent=1 // loop_body
      %s25 = ssub.s32 %s20, 1
      %s26 = ssub.s32 %s20, 2
      %s27 = sadd.s32 %s20, 1
      %s29 = sadd.s32 %s28, 1
      %p32 = scmp.eq.s32.totalorder %s20, 1
      %p33 = scmp.ne.s32.totalorder %s28, %s30
      %p34 = scmp.eq.s32.totalorder %s20, 0
      %p35 = por %p33, %p34
      %p36 = scmp.ne.s32.totalorder %s28, %s30
      %p37 = scmp.eq.s32.totalorder %s25, 1
      %p38 = por %p36, %p37
      %p39 = scmp.ne.s32.totalorder %s30, %s31
      %p40 = scmp.eq.s32.totalorder %s25, 0
      %p41 = por %p39, %p40
      %p42 = scmp.ne.s32.totalorder %s30, %s31
      %p43 = scmp.eq.s32.totalorder %s26, 1
      %p44 = por %p42, %p43
      %p46 = scmp.ne.s32.totalorder %s31, %s45
      %p47 = scmp.eq.s32.totalorder %s26, 0
      %p48 = por %p46, %p47
      %s50 = sadd.s32 %s49, 1
      %p53 = scmp.eq.s32.totalorder %s20, 1
      %p54 = scmp.ne.s32.totalorder %s49, %s51
      %p55 = scmp.eq.s32.totalorder %s20, 0
      %p56 = por %p54, %p55
      %p57 = scmp.ne.s32.totalorder %s49, %s51
      %p58 = scmp.eq.s32.totalorder %s25, 1
      %p59 = por %p57, %p58
      %p60 = scmp.ne.s32.totalorder %s51, %s52
      %p61 = scmp.eq.s32.totalorder %s25, 0
      %p62 = por %p60, %p61
      %p63 = scmp.ne.s32.totalorder %s51, %s52
      %p64 = scmp.eq.s32.totalorder %s26, 1
      %p65 = por %p63, %p64
      %p67 = scmp.ne.s32.totalorder %s52, %s66
      %p68 = scmp.eq.s32.totalorder %s26, 0
      %p69 = por %p67, %p68
      %s70 = ssub.s32 %s20, %s27
      %p71 = scmp.eq.s32.totalorder %s70, 0
      %s73 = sadd.s32 %s72, 1
      %s74 = scalar_select %p71, %s72, %s73
      %p77 = pneg %p71
      %p78 = scmp.eq.s32.totalorder %s20, 1
      %p79 = por %p77, %p78
      %p80 = scmp.ne.s32.totalorder %s72, %s75
      %p81 = scmp.eq.s32.totalorder %s20, 0
      %p82 = por %p80, %p81
      %p83 = scmp.ne.s32.totalorder %s72, %s75
      %p84 = scmp.eq.s32.totalorder %s25, 1
      %p85 = por %p83, %p84
      %p86 = scmp.ne.s32.totalorder %s75, %s76
      %p87 = scmp.eq.s32.totalorder %s25, 0
      %p88 = por %p86, %p87
      %p89 = scmp.ne.s32.totalorder %s75, %s76
      %p90 = scmp.eq.s32.totalorder %s26, 1
      %p91 = por %p89, %p90
      %p93 = scmp.ne.s32.totalorder %s76, %s92
      %p94 = scmp.eq.s32.totalorder %s26, 0
      %p95 = por %p93, %p94
      %s97 = sadd.s32 %s96, 1
      %p100 = scmp.eq.s32.totalorder %s20, 1
      %p101 = scmp.ne.s32.totalorder %s96, %s98
      %p102 = scmp.eq.s32.totalorder %s20, 0
      %p103 = por %p101, %p102
      %p104 = scmp.ne.s32.totalorder %s96, %s98
      %p105 = scmp.eq.s32.totalorder %s25, 1
      %p106 = por %p104, %p105
      %p107 = scmp.ne.s32.totalorder %s98, %s99
      %p108 = scmp.eq.s32.totalorder %s25, 0
      %p109 = por %p107, %p108
      %p110 = scmp.ne.s32.totalorder %s98, %s99
      %p111 = scmp.eq.s32.totalorder %s26, 1
      %p112 = por %p110, %p111
      %p114 = scmp.ne.s32.totalorder %s99, %s113
      %p115 = scmp.eq.s32.totalorder %s26, 0
      %p116 = por %p114, %p115
      %s118 = sadd.s32 %s117, 1
      %p121 = scmp.eq.s32.totalorder %s20, 1
      %p122 = scmp.ne.s32.totalorder %s117, %s119
      %p123 = scmp.eq.s32.totalorder %s20, 0
      %p124 = por %p122, %p123
      %p125 = scmp.ne.s32.totalorder %s117, %s119
      %p126 = scmp.eq.s32.totalorder %s25, 1
      %p127 = por %p125, %p126
      %p128 = scmp.ne.s32.totalorder %s119, %s120
      %p129 = scmp.eq.s32.totalorder %s25, 0
      %p130 = por %p128, %p129
      %p131 = scmp.ne.s32.totalorder %s119, %s120
      %p132 = scmp.eq.s32.totalorder %s26, 1
      %p133 = por %p131, %p132
      %p135 = scmp.ne.s32.totalorder %s120, %s134
      %p136 = scmp.eq.s32.totalorder %s26, 0
      %p137 = por %p135, %p136
      %s139 = sadd.s32 %s138, 1
      %p142 = scmp.eq.s32.totalorder %s20, 1
      %p143 = scmp.ne.s32.totalorder %s138, %s140
      %p144 = scmp.eq.s32.totalorder %s20, 0
      %p145 = por %p143, %p144
      %p146 = scmp.ne.s32.totalorder %s138, %s140
      %p147 = scmp.eq.s32.totalorder %s25, 1
      %p148 = por %p146, %p147
      %p149 = scmp.ne.s32.totalorder %s140, %s141
      %p150 = scmp.eq.s32.totalorder %s25, 0
      %p151 = por %p149, %p150
      %p152 = scmp.ne.s32.totalorder %s140, %s141
      %p153 = scmp.eq.s32.totalorder %s26, 1
      %p154 = por %p152, %p153
      %p156 = scmp.ne.s32.totalorder %s141, %s155
      %p157 = scmp.eq.s32.totalorder %s26, 0
      %p158 = por %p156, %p157
      %s160 = sadd.s32 %s159, 1
      %p163 = scmp.eq.s32.totalorder %s20, 1
      %p164 = scmp.ne.s32.totalorder %s159, %s161
      %p165 = scmp.eq.s32.totalorder %s20, 0
      %p166 = por %p164, %p165
      %p167 = scmp.ne.s32.totalorder %s159, %s161
      %p168 = scmp.eq.s32.totalorder %s25, 1
      %p169 = por %p167, %p168
      %p170 = scmp.ne.s32.totalorder %s161, %s162
      %p171 = scmp.eq.s32.totalorder %s25, 0
      %p172 = por %p170, %p171
      %p173 = scmp.ne.s32.totalorder %s161, %s162
      %p174 = scmp.eq.s32.totalorder %s26, 1
      %p175 = por %p173, %p174
      %p177 = scmp.ne.s32.totalorder %s162, %s176
      %p178 = scmp.eq.s32.totalorder %s26, 0
      %p179 = por %p177, %p178
      %s181 = sadd.s32 %s180, 1
      %p184 = scmp.eq.s32.totalorder %s20, 1
      %p185 = scmp.ne.s32.totalorder %s180, %s182
      %p186 = scmp.eq.s32.totalorder %s20, 0
      %p187 = por %p185, %p186
      %p188 = scmp.ne.s32.totalorder %s180, %s182
      %p189 = scmp.eq.s32.totalorder %s25, 1
      %p190 = por %p188, %p189
      %p191 = scmp.ne.s32.totalorder %s182, %s183
      %p192 = scmp.eq.s32.totalorder %s25, 0
      %p193 = por %p191, %p192
      %p194 = scmp.ne.s32.totalorder %s182, %s183
      %p195 = scmp.eq.s32.totalorder %s26, 1
      %p196 = por %p194, %p195
      %p198 = scmp.ne.s32.totalorder %s183, %s197
      %p199 = scmp.eq.s32.totalorder %s26, 0
      %p200 = por %p198, %p199
      %s202 = sadd.s32 %s201, 1
      %p205 = scmp.eq.s32.totalorder %s20, 1
      %p206 = scmp.ne.s32.totalorder %s201, %s203
      %p207 = scmp.eq.s32.totalorder %s20, 0
      %p208 = por %p206, %p207
      %p209 = scmp.ne.s32.totalorder %s201, %s203
      %p210 = scmp.eq.s32.totalorder %s25, 1
      %p211 = por %p209, %p210
      %p212 = scmp.ne.s32.totalorder %s203, %s204
      %p213 = scmp.eq.s32.totalorder %s25, 0
      %p214 = por %p212, %p213
      %p215 = scmp.ne.s32.totalorder %s203, %s204
      %p216 = scmp.eq.s32.totalorder %s26, 1
      %p217 = por %p215, %p216
      %p219 = scmp.ne.s32.totalorder %s204, %s218
      %p220 = scmp.eq.s32.totalorder %s26, 0
      %p221 = por %p219, %p220
      %s223 = sadd.s32 %s222, 1
      %p226 = scmp.eq.s32.totalorder %s20, 1
      %p227 = scmp.ne.s32.totalorder %s222, %s224
      %p228 = scmp.eq.s32.totalorder %s20, 0
      %p229 = por %p227, %p228
      %p230 = scmp.ne.s32.totalorder %s222, %s224
      %p231 = scmp.eq.s32.totalorder %s25, 1
      %p232 = por %p230, %p231
      %p233 = scmp.ne.s32.totalorder %s224, %s225
      %p234 = scmp.eq.s32.totalorder %s25, 0
      %p235 = por %p233, %p234
      %p236 = scmp.ne.s32.totalorder %s224, %s225
      %p237 = scmp.eq.s32.totalorder %s26, 1
      %p238 = por %p236, %p237
      %p240 = scmp.ne.s32.totalorder %s225, %s239
      %p241 = scmp.eq.s32.totalorder %s26, 0
      %p242 = por %p240, %p241
      %s244 = sadd.s32 %s243, 1
      %p247 = scmp.eq.s32.totalorder %s20, 1
      %p248 = scmp.ne.s32.totalorder %s243, %s245
      %p249 = scmp.eq.s32.totalorder %s20, 0
      %p250 = por %p248, %p249
      %p251 = scmp.ne.s32.totalorder %s243, %s245
      %p252 = scmp.eq.s32.totalorder %s25, 1
      %p253 = por %p251, %p252
      %p254 = scmp.ne.s32.totalorder %s245, %s246
      %p255 = scmp.eq.s32.totalorder %s25, 0
      %p256 = por %p254, %p255
      %p257 = scmp.ne.s32.totalorder %s245, %s246
      %p258 = scmp.eq.s32.totalorder %s26, 1
      %p259 = por %p257, %p258
      %p261 = scmp.ne.s32.totalorder %s246, %s260
      %p262 = scmp.eq.s32.totalorder %s26, 0
      %p263 = por %p261, %p262
      %s265 = sadd.s32 %s264, 1
      %p268 = scmp.eq.s32.totalorder %s20, 1
      %p269 = scmp.ne.s32.totalorder %s264, %s266
      %p270 = scmp.eq.s32.totalorder %s20, 0
      %p271 = por %p269, %p270
      %p272 = scmp.ne.s32.totalorder %s264, %s266
      %p273 = scmp.eq.s32.totalorder %s25, 1
      %p274 = por %p272, %p273
      %p275 = scmp.ne.s32.totalorder %s266, %s267
      %p276 = scmp.eq.s32.totalorder %s25, 0
      %p277 = por %p275, %p276
      %p278 = scmp.ne.s32.totalorder %s266, %s267
      %p279 = scmp.eq.s32.totalorder %s26, 1
      %p280 = por %p278, %p279
      %p282 = scmp.ne.s32.totalorder %s267, %s281
      %p283 = scmp.eq.s32.totalorder %s26, 0
      %p284 = por %p282, %p283
      %s285 = ssub.s32 %s20, %s27
      %p286 = scmp.eq.s32.totalorder %s285, 0
      %s288 = sadd.s32 %s287, 1
      %s289 = scalar_select %p286, %s287, %s288
      %p292 = pneg %p286
      %p293 = scmp.eq.s32.totalorder %s20, 1
      %p294 = por %p292, %p293
      %p295 = scmp.ne.s32.totalorder %s287, %s290
      %p296 = scmp.eq.s32.totalorder %s20, 0
      %p297 = por %p295, %p296
      %p298 = scmp.ne.s32.totalorder %s287, %s290
      %p299 = scmp.eq.s32.totalorder %s25, 1
      %p300 = por %p298, %p299
      %p301 = scmp.ne.s32.totalorder %s290, %s291
      %p302 = scmp.eq.s32.totalorder %s25, 0
      %p303 = por %p301, %p302
      %p304 = scmp.ne.s32.totalorder %s290, %s291
      %p305 = scmp.eq.s32.totalorder %s26, 1
      %p306 = por %p304, %p305
      %p308 = scmp.ne.s32.totalorder %s291, %s307
      %p309 = scmp.eq.s32.totalorder %s26, 0
      %p310 = por %p308, %p309
      %p311 = scmp.le.s32.totalorder 1, %s20
      %p312 = scmp.lt.s32.totalorder %s20, 3
      %p313 = pnand %p311, %p312
      %p314 = pneg %p313
      // Predicated region
      $region9: #{_lambda_.3} parent=5 // pred_check
        _
      $region10: #{_lambda_.3} parent=5 // pred_check_branch
        %316 = sbr.rel (%p313) target = $region12
      $region11: #{_lambda_.3} parent=5 // pred_region
        %s317 = ssub.s32 %s20, 1
        // Predicated region
        $region13: #{_lambda_.3} parent=11 // pred_check
          %p318 = pneg %p41
        $region14: #{_lambda_.3} parent=11 // pred_check_branch
          %320 = sbr.rel (%p318) target = $region16
        $region15: #{_lambda_.3} parent=11 // pred_region
          %s322 = ssub.s32 32, 32
          %323 = vsyncadd [#allocation4], %s322
          %s325 = sshll.u32 %s0, 4
          %s326 = int_to_ptr.vmem [resolvable:$true] %s325
          %328 = dma.vmem_to_smem %s326, 32, [#allocation3], [#allocation4]
        $region16: #{_lambda_.3} parent=11 // pred_fallthru
          _
        // Predicated region
        $region17: #{_lambda_.3} parent=11 // pred_check
          %p329 = pneg %p62
        $region18: #{_lambda_.3} parent=11 // pred_check_branch
          %331 = sbr.rel (%p329) target = $region20
        $region19: #{_lambda_.3} parent=11 // pred_region
          _
        $region20: #{_lambda_.3} parent=11 // pred_fallthru
          _
        // Predicated region
        $region21: #{_lambda_.3} parent=11 // pred_check
          %p332 = pneg %p109
        $region22: #{_lambda_.3} parent=11 // pred_check_branch
          %334 = sbr.rel (%p332) target = $region24
        $region23: #{_lambda_.3} parent=11 // pred_region
          _
        $region24: #{_lambda_.3} parent=11 // pred_fallthru
          _
        // Predicated region
        $region25: #{_lambda_.3} parent=11 // pred_check
          %p335 = pneg %p130
        $region26: #{_lambda_.3} parent=11 // pred_check_branch
          %337 = sbr.rel (%p335) target = $region28
        $region27: #{_lambda_.3} parent=11 // pred_region
          _
        $region28: #{_lambda_.3} parent=11 // pred_fallthru
          _
        // Predicated region
        $region29: #{_lambda_.3} parent=11 // pred_check
          %p338 = pneg %p151
        $region30: #{_lambda_.3} parent=11 // pred_check_branch
          %340 = sbr.rel (%p338) target = $region32
        $region31: #{_lambda_.3} parent=11 // pred_region
          _
        $region32: #{_lambda_.3} parent=11 // pred_fallthru
          _
        // Predicated region
        $region33: #{_lambda_.3} parent=11 // pred_check
          %p341 = pneg %p172
        $region34: #{_lambda_.3} parent=11 // pred_check_branch
          %343 = sbr.rel (%p341) target = $region36
        $region35: #{_lambda_.3} parent=11 // pred_region
          _
        $region36: #{_lambda_.3} parent=11 // pred_fallthru
          _
        // Predicated region
        $region37: #{_lambda_.3} parent=11 // pred_check
          %p344 = pneg %p193
        $region38: #{_lambda_.3} parent=11 // pred_check_branch
          %346 = sbr.rel (%p344) target = $region40
        $region39: #{_lambda_.3} parent=11 // pred_region
          _
        $region40: #{_lambda_.3} parent=11 // pred_fallthru
          _
        // Predicated region
        $region41: #{_lambda_.3} parent=11 // pred_check
          %p347 = pneg %p214
        $region42: #{_lambda_.3} parent=11 // pred_check_branch
          %349 = sbr.rel (%p347) target = $region44
        $region43: #{_lambda_.3} parent=11 // pred_region
          _
        $region44: #{_lambda_.3} parent=11 // pred_fallthru
          _
        // Predicated region
        $region45: #{_lambda_.3} parent=11 // pred_check
          %p350 = pneg %p235
        $region46: #{_lambda_.3} parent=11 // pred_check_branch
          %352 = sbr.rel (%p350) target = $region48
        $region47: #{_lambda_.3} parent=11 // pred_region
          _
        $region48: #{_lambda_.3} parent=11 // pred_fallthru
          _
        // Predicated region
        $region49: #{_lambda_.3} parent=11 // pred_check
          %p353 = pneg %p256
        $region50: #{_lambda_.3} parent=11 // pred_check_branch
          %355 = sbr.rel (%p353) target = $region52
        $region51: #{_lambda_.3} parent=11 // pred_region
          _
        $region52: #{_lambda_.3} parent=11 // pred_fallthru
          _
        // Predicated region
        $region53: #{_lambda_.3} parent=11 // pred_check
          %p356 = pneg %p277
        $region54: #{_lambda_.3} parent=11 // pred_check_branch
          %358 = sbr.rel (%p356) target = $region56
        $region55: #{_lambda_.3} parent=11 // pred_region
          _
        $region56: #{_lambda_.3} parent=11 // pred_fallthru
          _
      $region12: #{_lambda_.3} parent=5 // pred_fallthru
        _
      %p359 = scmp.lt.s32.totalorder %s20, 2
      // Predicated region
      $region57: #{_lambda_.3} parent=5 // pred_check
        %p360 = pneg %p359
      $region58: #{_lambda_.3} parent=5 // pred_check_branch
        %362 = sbr.rel (%p360) target = $region60
      $region59: #{_lambda_.3} parent=5 // pred_region
        // Predicated region
        $region61: #{_lambda_.3} parent=59 // pred_check
          %p363 = pneg %p82
        $region62: #{_lambda_.3} parent=59 // pred_check_branch
          %365 = sbr.rel (%p363) target = $region64
        $region63: #{_lambda_.3} parent=59 // pred_region
          %s366 = smul.u32 32, %s20
          %p367 = scmp.lt.s32.totalorder %s366, 63
          %s368 = scalar_select %p367, %s366, 63
          %s369 = smul.addr %s368, 4
          %s370 = scalar_lea.vmem %s2, %s369
          %s371 = smul.u32 32, %s20
        $region64: #{_lambda_.3} parent=59 // pred_fallthru
          _
      $region60: #{_lambda_.3} parent=5 // pred_fallthru
        _
      %p372 = scmp.le.s32.totalorder 1, %s20
      %p373 = scmp.lt.s32.totalorder %s20, 3
      %p374 = pnand %p372, %p373
      %p375 = pneg %p374
      // Predicated region
      $region65: #{_lambda_.3} parent=5 // pred_check
        _
      $region66: #{_lambda_.3} parent=5 // pred_check_branch
        %377 = sbr.rel (%p374) target = $region68
      $region67: #{_lambda_.3} parent=5 // pred_region
        %s378 = ssub.s32 %s20, 1
        // Predicated region
        $region69: #{_lambda_.3} parent=67 // pred_check
          %p379 = pneg %p41
        $region70: #{_lambda_.3} parent=67 // pred_check_branch
          %381 = sbr.rel (%p379) target = $region72
        $region71: #{_lambda_.3} parent=67 // pred_region
          %382 = dma.done [#allocation4], 32
        $region72: #{_lambda_.3} parent=67 // pred_fallthru
          _
        %383 = sfence
        %p384 = pneg %p41
        %p385 = pneg %p38
        %p386 = pneg %p62
        %p387 = pneg %p59
        %s388 = smul.u32 32, %s25
        %p389 = scmp.lt.s32.totalorder %s388, 63
        %s390 = scalar_select %p389, %s388, 63
        %s391 = smul.addr %s390, 4
        %s392 = scalar_lea.vmem %s2, %s391
        %p393 = pneg %p88
        %p394 = pneg %p85
        %p395 = pneg %p109
        %p396 = pneg %p106
        %p397 = pneg %p130
        %p398 = pneg %p127
        %p399 = pneg %p151
        %p400 = pneg %p148
        %p401 = pneg %p172
        %p402 = pneg %p169
        %p403 = pneg %p193
        %p404 = pneg %p190
        %p405 = pneg %p214
        %p406 = pneg %p211
        %p407 = pneg %p235
        %p408 = pneg %p232
        %p409 = pneg %p256
        %p410 = pneg %p253
        %p411 = pneg %p277
        %p412 = pneg %p274
        %p413 = pneg %p303
        %p414 = pneg %p300
        %s415 = smul.u32 32, %s25
        %p416 = scmp.lt.s32.totalorder %s415, 63
        %s417 = scalar_select %p416, %s415, 63
        %s418 = smul.addr %s417, 4
        %s419 = scalar_lea.vmem %s12, %s418
        %s420 = smul.u32 32, %s25
        %p421 = scmp.lt.s32.totalorder %s420, 63
        %s422 = scalar_select %p421, %s420, 63
        %s423 = smul.addr %s422, 4
        %s424 = scalar_lea.vmem %s2, %s423
        %s425 = smul.u32 32, %s25
        %s426 = smul.u32 32, %s25
        %p427 = scmp.lt.s32.totalorder %s426, 63
        %s428 = scalar_select %p427, %s426, 63
        %s429 = smul.addr %s428, 4
        %s430 = scalar_lea.vmem %s12, %s429
        %s431 = smul.u32 32, %s25
        %v433 = vld [vmem:[%s424] sm:$0xf]
        %v434 = vld [vmem:[%s424 + $0x4] sm:$0xf]
        %v435 = vld [vmem:[%s424 + $0x8] sm:$0xf]
        %v436 = vld [vmem:[%s424 + $0xc] sm:$0xf]
        %v437 = vld [vmem:[%s424 + $0x10] sm:$0xf]
        %v438 = vld [vmem:[%s424 + $0x14] sm:$0xf]
        %v439 = vld [vmem:[%s424 + $0x18] sm:$0xf]
        %v440 = vld [vmem:[%s424 + $0x1c] sm:$0xf]
        %v441 = vld [vmem:[%s424 + $0x20] sm:$0xf]
        %v442 = vld [vmem:[%s424 + $0x24] sm:$0xf]
        %v443 = vld [vmem:[%s424 + $0x28] sm:$0xf]
        %v444 = vld [vmem:[%s424 + $0x2c] sm:$0xf]
        %v445 = vld [vmem:[%s424 + $0x30] sm:$0xf]
        %v446 = vld [vmem:[%s424 + $0x34] sm:$0xf]
        %v447 = vld [vmem:[%s424 + $0x38] sm:$0xf]
        %v448 = vld [vmem:[%s424 + $0x3c] sm:$0xf]
        %v449 = vld [vmem:[%s424 + $0x40] sm:$0xf]
        %v450 = vld [vmem:[%s424 + $0x44] sm:$0xf]
        %v451 = vld [vmem:[%s424 + $0x48] sm:$0xf]
        %v452 = vld [vmem:[%s424 + $0x4c] sm:$0xf]
        %v453 = vld [vmem:[%s424 + $0x50] sm:$0xf]
        %v454 = vld [vmem:[%s424 + $0x54] sm:$0xf]
        %v455 = vld [vmem:[%s424 + $0x58] sm:$0xf]
        %v456 = vld [vmem:[%s424 + $0x5c] sm:$0xf]
        %v457 = vld [vmem:[%s424 + $0x60] sm:$0xf]
        %v458 = vld [vmem:[%s424 + $0x64] sm:$0xf]
        %v459 = vld [vmem:[%s424 + $0x68] sm:$0xf]
        %v460 = vld [vmem:[%s424 + $0x6c] sm:$0xf]
        %v461 = vld [vmem:[%s424 + $0x70] sm:$0xf]
        %v462 = vld [vmem:[%s424 + $0x74] sm:$0xf]
        %v463 = vld [vmem:[%s424 + $0x78] sm:$0xf]
        %v464 = vld [vmem:[%s424 + $0x7c] sm:$0xf]
        %v465 = vld [vmem:[%s3] sm:$0xf]
        %v466 = vld [vmem:[%s3 + $0x4] sm:$0xf]
        %v467 = vld [vmem:[%s3 + $0x8] sm:$0xf]
        %v468 = vld [vmem:[%s3 + $0xc] sm:$0xf]
        %v501 = vunpack.c.l.b16 %v433
        %v502 = vunpack.c.l.b16 %v434
        %v503 = vunpack.c.l.b16 %v435
        %v504 = vunpack.c.l.b16 %v436
        %v505 = vunpack.c.l.b16 %v437
        %v506 = vunpack.c.l.b16 %v438
        %v507 = vunpack.c.l.b16 %v439
        %v508 = vunpack.c.l.b16 %v440
        %v509 = vunpack.c.l.b16 %v441
        %v510 = vunpack.c.l.b16 %v442
        %v511 = vunpack.c.l.b16 %v443
        %v512 = vunpack.c.l.b16 %v444
        %v513 = vunpack.c.l.b16 %v445
        %v514 = vunpack.c.l.b16 %v446
        %v515 = vunpack.c.l.b16 %v447
        %v516 = vunpack.c.l.b16 %v448
        %v517 = vunpack.c.l.b16 %v449
        %v518 = vunpack.c.l.b16 %v450
        %v519 = vunpack.c.l.b16 %v451
        %v520 = vunpack.c.l.b16 %v452
        %v521 = vunpack.c.l.b16 %v453
        %v522 = vunpack.c.l.b16 %v454
        %v523 = vunpack.c.l.b16 %v455
        %v524 = vunpack.c.l.b16 %v456
        %v525 = vunpack.c.l.b16 %v457
        %v526 = vunpack.c.l.b16 %v458
        %v527 = vunpack.c.l.b16 %v459
        %v528 = vunpack.c.l.b16 %v460
        %v529 = vunpack.c.l.b16 %v461
        %v530 = vunpack.c.l.b16 %v462
        %v531 = vunpack.c.l.b16 %v463
        %v532 = vunpack.c.l.b16 %v464
        %v533 = vpack.c.b16 %v502, %v501
        %v534 = vpack.c.b16 %v504, %v503
        %v535 = vpack.c.b16 %v506, %v505
        %v536 = vpack.c.b16 %v508, %v507
        %v537 = vpack.c.b16 %v510, %v509
        %v538 = vpack.c.b16 %v512, %v511
        %v539 = vpack.c.b16 %v514, %v513
        %v540 = vpack.c.b16 %v516, %v515
        %v541 = vpack.c.b16 %v518, %v517
        %v542 = vpack.c.b16 %v520, %v519
        %v543 = vpack.c.b16 %v522, %v521
        %v544 = vpack.c.b16 %v524, %v523
        %v545 = vpack.c.b16 %v526, %v525
        %v546 = vpack.c.b16 %v528, %v527
        %v547 = vpack.c.b16 %v530, %v529
        %v548 = vpack.c.b16 %v532, %v531
        %v553 = vunpack.c.l.b16 %v465
        %v554 = vunpack.c.l.b16 %v466
        %v555 = vunpack.c.l.b16 %v467
        %v556 = vunpack.c.l.b16 %v468
        %v557 = vpack.c.b16 %v554, %v553
        %v558 = vpack.c.b16 %v556, %v555
        %vm561 = vcmask 261120
        %v563 = vsel %vm561, %v533, 0
        %v566 = vsel %vm561, %v534, 0
        %v569 = vsel %vm561, %v535, 0
        %v572 = vsel %vm561, %v536, 0
        %v575 = vsel %vm561, %v537, 0
        %v578 = vsel %vm561, %v538, 0
        %v581 = vsel %vm561, %v539, 0
        %v584 = vsel %vm561, %v540, 0
        %v587 = vsel %vm561, %v541, 0
        %v590 = vsel %vm561, %v542, 0
        %v593 = vsel %vm561, %v543, 0
        %v596 = vsel %vm561, %v544, 0
        %v599 = vsel %vm561, %v545, 0
        %v602 = vsel %vm561, %v546, 0
        %v605 = vsel %vm561, %v547, 0
        %v608 = vsel %vm561, %v548, 0
        %610 = vmatprep.subr.bf16.mxu0 0
        %611 = vmatpush1.bf16.msra.mxu0 0
        %612 = vmatprep.subr.bf16.mxu0 0
        %613 = vmatpush1.bf16.msra.mxu0 0
        %614 = vmatprep.subr.bf16.mxu0 0
        %615 = vmatpush1.bf16.msra.mxu0 0
        %616 = vmatprep.subr.bf16.mxu0 0
        %617 = vmatpush1.bf16.msra.mxu0 0
        %618 = vmatprep.subr.bf16.mxu0 0
        %619 = vmatpush1.bf16.msra.mxu0 0
        %620 = vmatprep.subr.bf16.mxu0 0
        %621 = vmatpush1.bf16.msra.mxu0 0
        %622 = vmatprep.subr.bf16.mxu0 0
        %623 = vmatpush1.bf16.msra.mxu0 %v558
        %624 = vmatprep.subr.bf16.mxu0 0
        %625 = vmatpush1.bf16.msra.mxu0 %v557
        %626 = vmatprep.subr.bf16.mxu0 0
        %627 = vmatpush2.bf16.msra.mxu0 0
        %628 = vmatprep.subr.bf16.mxu0 0
        %629 = vmatpush2.bf16.msra.mxu0 0
        %630 = vmatprep.subr.bf16.mxu0 0
        %631 = vmatpush2.bf16.msra.mxu0 0
        %632 = vmatprep.subr.bf16.mxu0 0
        %633 = vmatpush2.bf16.msra.mxu0 0
        %634 = vmatprep.subr.bf16.mxu0 0
        %635 = vmatpush2.bf16.msra.mxu0 0
        %636 = vmatprep.subr.bf16.mxu0 0
        %637 = vmatpush2.bf16.msra.mxu0 0
        %638 = vmatprep.subr.bf16.mxu0 0
        %639 = vmatpush2.bf16.msra.mxu0 0
        %640 = vmatprep.subr.bf16.mxu0 0
        %641 = vmatpush2.bf16.msra.mxu0 0
        %642 = vmatprep.mubr.bf16.mxu0 0
        %643 = vmatmul.mubr.bf16.gmra.mxu0 %v563
        %v644 = vpop.f32.mrf.mxu0
        %v645 = vadd.f32 0.0, %v644
        %v646 = vpop.f32.mrf.mxu0
        %v647 = vpop.f32.mrf.mxu0
        %v648 = vadd.f32 0.0, %v647
        %v649 = vpop.f32.mrf.mxu0
        %650 = vmatprep.mubr.bf16.mxu0 0
        %651 = vmatmul.mubr.bf16.gmra.mxu0 %v566
        %v652 = vpop.f32.mrf.mxu0
        %v653 = vadd.f32 0.0, %v652
        %v654 = vpop.f32.mrf.mxu0
        %v655 = vpop.f32.mrf.mxu0
        %v656 = vadd.f32 0.0, %v655
        %v657 = vpop.f32.mrf.mxu0
        %658 = vmatprep.mubr.bf16.mxu0 0
        %659 = vmatmul.mubr.bf16.gmra.mxu0 %v569
        %v660 = vpop.f32.mrf.mxu0
        %v661 = vadd.f32 0.0, %v660
        %v662 = vpop.f32.mrf.mxu0
        %v663 = vpop.f32.mrf.mxu0
        %v664 = vadd.f32 0.0, %v663
        %v665 = vpop.f32.mrf.mxu0
        %666 = vmatprep.mubr.bf16.mxu0 0
        %667 = vmatmul.mubr.bf16.gmra.mxu0 %v572
        %v668 = vpop.f32.mrf.mxu0
        %v669 = vadd.f32 0.0, %v668
        %v670 = vpop.f32.mrf.mxu0
        %v671 = vpop.f32.mrf.mxu0
        %v672 = vadd.f32 0.0, %v671
        %v673 = vpop.f32.mrf.mxu0
        %674 = vmatprep.mubr.bf16.mxu0 0
        %675 = vmatmul.mubr.bf16.gmra.mxu0 %v575
        %v676 = vpop.f32.mrf.mxu0
        %v677 = vadd.f32 0.0, %v676
        %v678 = vpop.f32.mrf.mxu0
        %v679 = vpop.f32.mrf.mxu0
        %v680 = vadd.f32 0.0, %v679
        %v681 = vpop.f32.mrf.mxu0
        %682 = vmatprep.mubr.bf16.mxu0 0
        %683 = vmatmul.mubr.bf16.gmra.mxu0 %v578
        %v684 = vpop.f32.mrf.mxu0
        %v685 = vadd.f32 0.0, %v684
        %v686 = vpop.f32.mrf.mxu0
        %v687 = vpop.f32.mrf.mxu0
        %v688 = vadd.f32 0.0, %v687
        %v689 = vpop.f32.mrf.mxu0
        %690 = vmatprep.mubr.bf16.mxu0 0
        %691 = vmatmul.mubr.bf16.gmra.mxu0 %v581
        %v692 = vpop.f32.mrf.mxu0
        %v693 = vadd.f32 0.0, %v692
        %v694 = vpop.f32.mrf.mxu0
        %v695 = vpop.f32.mrf.mxu0
        %v696 = vadd.f32 0.0, %v695
        %v697 = vpop.f32.mrf.mxu0
        %698 = vmatprep.mubr.bf16.mxu0 0
        %699 = vmatmul.mubr.bf16.gmra.mxu0 %v584
        %v700 = vpop.f32.mrf.mxu0
        %v701 = vadd.f32 0.0, %v700
        %v702 = vpop.f32.mrf.mxu0
        %v703 = vpop.f32.mrf.mxu0
        %v704 = vadd.f32 0.0, %v703
        %v705 = vpop.f32.mrf.mxu0
        %706 = vmatprep.mubr.bf16.mxu0 0
        %707 = vmatmul.mubr.bf16.gmra.mxu0 %v587
        %v708 = vpop.f32.mrf.mxu0
        %v709 = vadd.f32 0.0, %v708
        %v710 = vpop.f32.mrf.mxu0
        %v711 = vpop.f32.mrf.mxu0
        %v712 = vadd.f32 0.0, %v711
        %v713 = vpop.f32.mrf.mxu0
        %714 = vmatprep.mubr.bf16.mxu0 0
        %715 = vmatmul.mubr.bf16.gmra.mxu0 %v590
        %v716 = vpop.f32.mrf.mxu0
        %v717 = vadd.f32 0.0, %v716
        %v718 = vpop.f32.mrf.mxu0
        %v719 = vpop.f32.mrf.mxu0
        %v720 = vadd.f32 0.0, %v719
        %v721 = vpop.f32.mrf.mxu0
        %722 = vmatprep.mubr.bf16.mxu0 0
        %723 = vmatmul.mubr.bf16.gmra.mxu0 %v593
        %v724 = vpop.f32.mrf.mxu0
        %v725 = vadd.f32 0.0, %v724
        %v726 = vpop.f32.mrf.mxu0
        %v727 = vpop.f32.mrf.mxu0
        %v728 = vadd.f32 0.0, %v727
        %v729 = vpop.f32.mrf.mxu0
        %730 = vmatprep.mubr.bf16.mxu0 0
        %731 = vmatmul.mubr.bf16.gmra.mxu0 %v596
        %v732 = vpop.f32.mrf.mxu0
        %v733 = vadd.f32 0.0, %v732
        %v734 = vpop.f32.mrf.mxu0
        %v735 = vpop.f32.mrf.mxu0
        %v736 = vadd.f32 0.0, %v735
        %v737 = vpop.f32.mrf.mxu0
        %738 = vmatprep.mubr.bf16.mxu0 0
        %739 = vmatmul.mubr.bf16.gmra.mxu0 %v599
        %v740 = vpop.f32.mrf.mxu0
        %v741 = vadd.f32 0.0, %v740
        %v742 = vpop.f32.mrf.mxu0
        %v743 = vpop.f32.mrf.mxu0
        %v744 = vadd.f32 0.0, %v743
        %v745 = vpop.f32.mrf.mxu0
        %746 = vmatprep.mubr.bf16.mxu0 0
        %747 = vmatmul.mubr.bf16.gmra.mxu0 %v602
        %v748 = vpop.f32.mrf.mxu0
        %v749 = vadd.f32 0.0, %v748
        %v750 = vpop.f32.mrf.mxu0
        %v751 = vpop.f32.mrf.mxu0
        %v752 = vadd.f32 0.0, %v751
        %v753 = vpop.f32.mrf.mxu0
        %754 = vmatprep.mubr.bf16.mxu0 0
        %755 = vmatmul.mubr.bf16.gmra.mxu0 %v605
        %v756 = vpop.f32.mrf.mxu0
        %v757 = vadd.f32 0.0, %v756
        %v758 = vpop.f32.mrf.mxu0
        %v759 = vpop.f32.mrf.mxu0
        %v760 = vadd.f32 0.0, %v759
        %v761 = vpop.f32.mrf.mxu0
        %762 = vmatprep.mubr.bf16.mxu0 0
        %763 = vmatmul.mubr.bf16.gmra.mxu0 %v608
        %v764 = vpop.f32.mrf.mxu0
        %v765 = vadd.f32 0.0, %v764
        %v766 = vpop.f32.mrf.mxu0
        %v767 = vpop.f32.mrf.mxu0
        %v768 = vadd.f32 0.0, %v767
        %v769 = vpop.f32.mrf.mxu0
        %770 = vdwg.mxu0
        %v771 = vld [vmem:[%s4] sm:$0x1]
        %v773 = vlaneseq
        %v774 = vshrl.u32 %v773, 7
        %v775 = vsub.s32 0, %v774
        %v776 = vrot.slane %v771, %v775
        %v778 = vmul.f32 %v645, %v776
        %v779 = vmul.f32 %v648, %v776
        %v780 = vmul.f32 %v653, %v776
        %v781 = vmul.f32 %v656, %v776
        %v782 = vmul.f32 %v661, %v776
        %v783 = vmul.f32 %v664, %v776
        %v784 = vmul.f32 %v669, %v776
        %v785 = vmul.f32 %v672, %v776
        %v786 = vmul.f32 %v677, %v776
        %v787 = vmul.f32 %v680, %v776
        %v788 = vmul.f32 %v685, %v776
        %v789 = vmul.f32 %v688, %v776
        %v790 = vmul.f32 %v693, %v776
        %v791 = vmul.f32 %v696, %v776
        %v792 = vmul.f32 %v701, %v776
        %v793 = vmul.f32 %v704, %v776
        %v794 = vmul.f32 %v709, %v776
        %v795 = vmul.f32 %v712, %v776
        %v796 = vmul.f32 %v717, %v776
        %v797 = vmul.f32 %v720, %v776
        %v798 = vmul.f32 %v725, %v776
        %v799 = vmul.f32 %v728, %v776
        %v800 = vmul.f32 %v733, %v776
        %v801 = vmul.f32 %v736, %v776
        %v802 = vmul.f32 %v741, %v776
        %v803 = vmul.f32 %v744, %v776
        %v804 = vmul.f32 %v749, %v776
        %v805 = vmul.f32 %v752, %v776
        %v806 = vmul.f32 %v757, %v776
        %v807 = vmul.f32 %v760, %v776
        %v808 = vmul.f32 %v765, %v776
        %v809 = vmul.f32 %v768, %v776
        %v810 = vld [vmem:[%s5] sm:$0x1]
        %v812 = vlaneseq
        %v813 = vshrl.u32 %v812, 7
        %v814 = vsub.s32 0, %v813
        %v815 = vrot.slane %v810, %v814
        %v817 = vadd.f32 %v778, %v815
        %v818 = vadd.f32 %v779, %v815
        %v819 = vadd.f32 %v780, %v815
        %v820 = vadd.f32 %v781, %v815
        %v821 = vadd.f32 %v782, %v815
        %v822 = vadd.f32 %v783, %v815
        %v823 = vadd.f32 %v784, %v815
        %v824 = vadd.f32 %v785, %v815
        %v825 = vadd.f32 %v786, %v815
        %v826 = vadd.f32 %v787, %v815
        %v827 = vadd.f32 %v788, %v815
        %v828 = vadd.f32 %v789, %v815
        %v829 = vadd.f32 %v790, %v815
        %v830 = vadd.f32 %v791, %v815
        %v831 = vadd.f32 %v792, %v815
        %v832 = vadd.f32 %v793, %v815
        %v833 = vadd.f32 %v794, %v815
        %v834 = vadd.f32 %v795, %v815
        %v835 = vadd.f32 %v796, %v815
        %v836 = vadd.f32 %v797, %v815
        %v837 = vadd.f32 %v798, %v815
        %v838 = vadd.f32 %v799, %v815
        %v839 = vadd.f32 %v800, %v815
        %v840 = vadd.f32 %v801, %v815
        %v841 = vadd.f32 %v802, %v815
        %v842 = vadd.f32 %v803, %v815
        %v843 = vadd.f32 %v804, %v815
        %v844 = vadd.f32 %v805, %v815
        %v845 = vadd.f32 %v806, %v815
        %v846 = vadd.f32 %v807, %v815
        %v847 = vadd.f32 %v808, %v815
        %v848 = vadd.f32 %v809, %v815
        %s849 = sld [smem:[#allocation3]]
        %v850 = vstv %s849
        %v851 = vmul.f32 %v850, %v817
        %v852 = vmul.f32 %v850, %v818
        %v853 = vmul.f32 %v850, %v819
        %v854 = vmul.f32 %v850, %v820
        %v855 = vmul.f32 %v850, %v821
        %v856 = vmul.f32 %v850, %v822
        %v857 = vmul.f32 %v850, %v823
        %v858 = vmul.f32 %v850, %v824
        %v859 = vmul.f32 %v850, %v825
        %v860 = vmul.f32 %v850, %v826
        %v861 = vmul.f32 %v850, %v827
        %v862 = vmul.f32 %v850, %v828
        %v863 = vmul.f32 %v850, %v829
        %v864 = vmul.f32 %v850, %v830
        %v865 = vmul.f32 %v850, %v831
        %v866 = vmul.f32 %v850, %v832
        %v867 = vmul.f32 %v850, %v833
        %v868 = vmul.f32 %v850, %v834
        %v869 = vmul.f32 %v850, %v835
        %v870 = vmul.f32 %v850, %v836
        %v871 = vmul.f32 %v850, %v837
        %v872 = vmul.f32 %v850, %v838
        %v873 = vmul.f32 %v850, %v839
        %v874 = vmul.f32 %v850, %v840
        %v875 = vmul.f32 %v850, %v841
        %v876 = vmul.f32 %v850, %v842
        %v877 = vmul.f32 %v850, %v843
        %v878 = vmul.f32 %v850, %v844
        %v879 = vmul.f32 %v850, %v845
        %v880 = vmul.f32 %v850, %v846
        %v881 = vmul.f32 %v850, %v847
        %v882 = vmul.f32 %v850, %v848
        %s883 = sld [smem:[#allocation3 + $0x1]]
        %v884 = vstv %s883
        %v885 = vmul.f32 %v884, %v817
        %v886 = vmul.f32 %v884, %v818
        %v887 = vmul.f32 %v884, %v819
        %v888 = vmul.f32 %v884, %v820
        %v889 = vmul.f32 %v884, %v821
        %v890 = vmul.f32 %v884, %v822
        %v891 = vmul.f32 %v884, %v823
        %v892 = vmul.f32 %v884, %v824
        %v893 = vmul.f32 %v884, %v825
        %v894 = vmul.f32 %v884, %v826
        %v895 = vmul.f32 %v884, %v827
        %v896 = vmul.f32 %v884, %v828
        %v897 = vmul.f32 %v884, %v829
        %v898 = vmul.f32 %v884, %v830
        %v899 = vmul.f32 %v884, %v831
        %v900 = vmul.f32 %v884, %v832
        %v901 = vmul.f32 %v884, %v833
        %v902 = vmul.f32 %v884, %v834
        %v903 = vmul.f32 %v884, %v835
        %v904 = vmul.f32 %v884, %v836
        %v905 = vmul.f32 %v884, %v837
        %v906 = vmul.f32 %v884, %v838
        %v907 = vmul.f32 %v884, %v839
        %v908 = vmul.f32 %v884, %v840
        %v909 = vmul.f32 %v884, %v841
        %v910 = vmul.f32 %v884, %v842
        %v911 = vmul.f32 %v884, %v843
        %v912 = vmul.f32 %v884, %v844
        %v913 = vmul.f32 %v884, %v845
        %v914 = vmul.f32 %v884, %v846
        %v915 = vmul.f32 %v884, %v847
        %v916 = vmul.f32 %v884, %v848
        %v917 = vadd.f32 %v851, %v885
        %v918 = vadd.f32 %v852, %v886
        %v919 = vadd.f32 %v853, %v887
        %v920 = vadd.f32 %v854, %v888
        %v921 = vadd.f32 %v855, %v889
        %v922 = vadd.f32 %v856, %v890
        %v923 = vadd.f32 %v857, %v891
        %v924 = vadd.f32 %v858, %v892
        %v925 = vadd.f32 %v859, %v893
        %v926 = vadd.f32 %v860, %v894
        %v927 = vadd.f32 %v861, %v895
        %v928 = vadd.f32 %v862, %v896
        %v929 = vadd.f32 %v863, %v897
        %v930 = vadd.f32 %v864, %v898
        %v931 = vadd.f32 %v865, %v899
        %v932 = vadd.f32 %v866, %v900
        %v933 = vadd.f32 %v867, %v901
        %v934 = vadd.f32 %v868, %v902
        %v935 = vadd.f32 %v869, %v903
        %v936 = vadd.f32 %v870, %v904
        %v937 = vadd.f32 %v871, %v905
        %v938 = vadd.f32 %v872, %v906
        %v939 = vadd.f32 %v873, %v907
        %v940 = vadd.f32 %v874, %v908
        %v941 = vadd.f32 %v875, %v909
        %v942 = vadd.f32 %v876, %v910
        %v943 = vadd.f32 %v877, %v911
        %v944 = vadd.f32 %v878, %v912
        %v945 = vadd.f32 %v879, %v913
        %v946 = vadd.f32 %v880, %v914
        %v947 = vadd.f32 %v881, %v915
        %v948 = vadd.f32 %v882, %v916
        %v949 = vmax.f32 %v917, 0.0
        %v950 = vmax.f32 %v918, 0.0
        %v951 = vmax.f32 %v919, 0.0
        %v952 = vmax.f32 %v920, 0.0
        %v953 = vmax.f32 %v921, 0.0
        %v954 = vmax.f32 %v922, 0.0
        %v955 = vmax.f32 %v923, 0.0
        %v956 = vmax.f32 %v924, 0.0
        %v957 = vmax.f32 %v925, 0.0
        %v958 = vmax.f32 %v926, 0.0
        %v959 = vmax.f32 %v927, 0.0
        %v960 = vmax.f32 %v928, 0.0
        %v961 = vmax.f32 %v929, 0.0
        %v962 = vmax.f32 %v930, 0.0
        %v963 = vmax.f32 %v931, 0.0
        %v964 = vmax.f32 %v932, 0.0
        %v965 = vmax.f32 %v933, 0.0
        %v966 = vmax.f32 %v934, 0.0
        %v967 = vmax.f32 %v935, 0.0
        %v968 = vmax.f32 %v936, 0.0
        %v969 = vmax.f32 %v937, 0.0
        %v970 = vmax.f32 %v938, 0.0
        %v971 = vmax.f32 %v939, 0.0
        %v972 = vmax.f32 %v940, 0.0
        %v973 = vmax.f32 %v941, 0.0
        %v974 = vmax.f32 %v942, 0.0
        %v975 = vmax.f32 %v943, 0.0
        %v976 = vmax.f32 %v944, 0.0
        %v977 = vmax.f32 %v945, 0.0
        %v978 = vmax.f32 %v946, 0.0
        %v979 = vmax.f32 %v947, 0.0
        %v980 = vmax.f32 %v948, 0.0
        %v981 = vpack.c.bf16 %v950, %v949
        %v982 = vpack.c.bf16 %v952, %v951
        %v983 = vpack.c.bf16 %v954, %v953
        %v984 = vpack.c.bf16 %v956, %v955
        %v985 = vpack.c.bf16 %v958, %v957
        %v986 = vpack.c.bf16 %v960, %v959
        %v987 = vpack.c.bf16 %v962, %v961
        %v988 = vpack.c.bf16 %v964, %v963
        %v989 = vpack.c.bf16 %v966, %v965
        %v990 = vpack.c.bf16 %v968, %v967
        %v991 = vpack.c.bf16 %v970, %v969
        %v992 = vpack.c.bf16 %v972, %v971
        %v993 = vpack.c.bf16 %v974, %v973
        %v994 = vpack.c.bf16 %v976, %v975
        %v995 = vpack.c.bf16 %v978, %v977
        %v996 = vpack.c.bf16 %v980, %v979
        %v997 = vld [vmem:[%s6] sm:$0xf]
        %v998 = vld [vmem:[%s6 + $0x4] sm:$0xf]
        %v999 = vld [vmem:[%s6 + $0x8] sm:$0xf]
        %v1000 = vld [vmem:[%s6 + $0xc] sm:$0xf]
        %v1001 = vld [vmem:[%s6 + $0x10] sm:$0xf]
        %v1002 = vld [vmem:[%s6 + $0x14] sm:$0xf]
        %v1003 = vld [vmem:[%s6 + $0x18] sm:$0xf]
        %v1004 = vld [vmem:[%s6 + $0x1c] sm:$0xf]
        %v1005 = vld [vmem:[%s6 + $0x20] sm:$0xf]
        %v1006 = vld [vmem:[%s6 + $0x24] sm:$0xf]
        %v1007 = vld [vmem:[%s6 + $0x28] sm:$0xf]
        %v1008 = vld [vmem:[%s6 + $0x2c] sm:$0xf]
        %v1009 = vld [vmem:[%s6 + $0x30] sm:$0xf]
        %v1010 = vld [vmem:[%s6 + $0x34] sm:$0xf]
        %v1011 = vld [vmem:[%s6 + $0x38] sm:$0xf]
        %v1012 = vld [vmem:[%s6 + $0x3c] sm:$0xf]
        %v1029 = vunpack.c.l.b16 %v997
        %v1030 = vunpack.c.l.b16 %v998
        %v1031 = vunpack.c.l.b16 %v999
        %v1032 = vunpack.c.l.b16 %v1000
        %v1033 = vunpack.c.l.b16 %v1001
        %v1034 = vunpack.c.l.b16 %v1002
        %v1035 = vunpack.c.l.b16 %v1003
        %v1036 = vunpack.c.l.b16 %v1004
        %v1037 = vunpack.c.l.b16 %v1005
        %v1038 = vunpack.c.l.b16 %v1006
        %v1039 = vunpack.c.l.b16 %v1007
        %v1040 = vunpack.c.l.b16 %v1008
        %v1041 = vunpack.c.l.b16 %v1009
        %v1042 = vunpack.c.l.b16 %v1010
        %v1043 = vunpack.c.l.b16 %v1011
        %v1044 = vunpack.c.l.b16 %v1012
        %v1045 = vpack.c.b16 %v1030, %v1029
        %v1046 = vpack.c.b16 %v1032, %v1031
        %v1047 = vpack.c.b16 %v1034, %v1033
        %v1048 = vpack.c.b16 %v1036, %v1035
        %v1049 = vpack.c.b16 %v1038, %v1037
        %v1050 = vpack.c.b16 %v1040, %v1039
        %v1051 = vpack.c.b16 %v1042, %v1041
        %v1052 = vpack.c.b16 %v1044, %v1043
        %1061 = vmatprep.subr.bf16.mxu0 0
        %1062 = vmatpush1.bf16.msra.mxu0 %v1052
        %1063 = vmatprep.subr.bf16.mxu0 0
        %1064 = vmatpush1.bf16.msra.mxu0 %v1051
        %1065 = vmatprep.subr.bf16.mxu0 0
        %1066 = vmatpush1.bf16.msra.mxu0 %v1050
        %1067 = vmatprep.subr.bf16.mxu0 0
        %1068 = vmatpush1.bf16.msra.mxu0 %v1049
        %1069 = vmatprep.subr.bf16.mxu0 0
        %1070 = vmatpush1.bf16.msra.mxu0 %v1048
        %1071 = vmatprep.subr.bf16.mxu0 0
        %1072 = vmatpush1.bf16.msra.mxu0 %v1047
        %1073 = vmatprep.subr.bf16.mxu0 0
        %1074 = vmatpush1.bf16.msra.mxu0 %v1046
        %1075 = vmatprep.subr.bf16.mxu0 0
        %1076 = vmatpush1.bf16.msra.mxu0 %v1045
        %1077 = vmatprep.subr.bf16.mxu0 0
        %1078 = vmatpush2.bf16.msra.mxu0 0
        %1079 = vmatprep.subr.bf16.mxu0 0
        %1080 = vmatpush2.bf16.msra.mxu0 0
        %1081 = vmatprep.subr.bf16.mxu0 0
        %1082 = vmatpush2.bf16.msra.mxu0 0
        %1083 = vmatprep.subr.bf16.mxu0 0
        %1084 = vmatpush2.bf16.msra.mxu0 0
        %1085 = vmatprep.subr.bf16.mxu0 0
        %1086 = vmatpush2.bf16.msra.mxu0 0
        %1087 = vmatprep.subr.bf16.mxu0 0
        %1088 = vmatpush2.bf16.msra.mxu0 0
        %1089 = vmatprep.subr.bf16.mxu0 0
        %1090 = vmatpush2.bf16.msra.mxu0 0
        %1091 = vmatprep.subr.bf16.mxu0 0
        %1092 = vmatpush2.bf16.msra.mxu0 0
        %1093 = vmatprep.mubr.bf16.mxu0 0
        %1094 = vmatmul.mubr.bf16.gmra.mxu0 %v981
        %v1095 = vpop.f32.mrf.mxu0
        %v1096 = vadd.f32 0.0, %v1095
        %v1097 = vpop.f32.mrf.mxu0
        %v1098 = vpop.f32.mrf.mxu0
        %v1099 = vadd.f32 0.0, %v1098
        %v1100 = vpop.f32.mrf.mxu0
        %1101 = vmatprep.mubr.bf16.mxu0 0
        %1102 = vmatmul.mubr.bf16.gmra.mxu0 %v982
        %v1103 = vpop.f32.mrf.mxu0
        %v1104 = vadd.f32 0.0, %v1103
        %v1105 = vpop.f32.mrf.mxu0
        %v1106 = vpop.f32.mrf.mxu0
        %v1107 = vadd.f32 0.0, %v1106
        %v1108 = vpop.f32.mrf.mxu0
        %1109 = vmatprep.mubr.bf16.mxu0 0
        %1110 = vmatmul.mubr.bf16.gmra.mxu0 %v983
        %v1111 = vpop.f32.mrf.mxu0
        %v1112 = vadd.f32 0.0, %v1111
        %v1113 = vpop.f32.mrf.mxu0
        %v1114 = vpop.f32.mrf.mxu0
        %v1115 = vadd.f32 0.0, %v1114
        %v1116 = vpop.f32.mrf.mxu0
        %1117 = vmatprep.mubr.bf16.mxu0 0
        %1118 = vmatmul.mubr.bf16.gmra.mxu0 %v984
        %v1119 = vpop.f32.mrf.mxu0
        %v1120 = vadd.f32 0.0, %v1119
        %v1121 = vpop.f32.mrf.mxu0
        %v1122 = vpop.f32.mrf.mxu0
        %v1123 = vadd.f32 0.0, %v1122
        %v1124 = vpop.f32.mrf.mxu0
        %1125 = vmatprep.mubr.bf16.mxu0 0
        %1126 = vmatmul.mubr.bf16.gmra.mxu0 %v985
        %v1127 = vpop.f32.mrf.mxu0
        %v1128 = vadd.f32 0.0, %v1127
        %v1129 = vpop.f32.mrf.mxu0
        %v1130 = vpop.f32.mrf.mxu0
        %v1131 = vadd.f32 0.0, %v1130
        %v1132 = vpop.f32.mrf.mxu0
        %1133 = vmatprep.mubr.bf16.mxu0 0
        %1134 = vmatmul.mubr.bf16.gmra.mxu0 %v986
        %v1135 = vpop.f32.mrf.mxu0
        %v1136 = vadd.f32 0.0, %v1135
        %v1137 = vpop.f32.mrf.mxu0
        %v1138 = vpop.f32.mrf.mxu0
        %v1139 = vadd.f32 0.0, %v1138
        %v1140 = vpop.f32.mrf.mxu0
        %1141 = vmatprep.mubr.bf16.mxu0 0
        %1142 = vmatmul.mubr.bf16.gmra.mxu0 %v987
        %v1143 = vpop.f32.mrf.mxu0
        %v1144 = vadd.f32 0.0, %v1143
        %v1145 = vpop.f32.mrf.mxu0
        %v1146 = vpop.f32.mrf.mxu0
        %v1147 = vadd.f32 0.0, %v1146
        %v1148 = vpop.f32.mrf.mxu0
        %1149 = vmatprep.mubr.bf16.mxu0 0
        %1150 = vmatmul.mubr.bf16.gmra.mxu0 %v988
        %v1151 = vpop.f32.mrf.mxu0
        %v1152 = vadd.f32 0.0, %v1151
        %v1153 = vpop.f32.mrf.mxu0
        %v1154 = vpop.f32.mrf.mxu0
        %v1155 = vadd.f32 0.0, %v1154
        %v1156 = vpop.f32.mrf.mxu0
        %1157 = vmatprep.mubr.bf16.mxu0 0
        %1158 = vmatmul.mubr.bf16.gmra.mxu0 %v989
        %v1159 = vpop.f32.mrf.mxu0
        %v1160 = vadd.f32 0.0, %v1159
        %v1161 = vpop.f32.mrf.mxu0
        %v1162 = vpop.f32.mrf.mxu0
        %v1163 = vadd.f32 0.0, %v1162
        %v1164 = vpop.f32.mrf.mxu0
        %1165 = vmatprep.mubr.bf16.mxu0 0
        %1166 = vmatmul.mubr.bf16.gmra.mxu0 %v990
        %v1167 = vpop.f32.mrf.mxu0
        %v1168 = vadd.f32 0.0, %v1167
        %v1169 = vpop.f32.mrf.mxu0
        %v1170 = vpop.f32.mrf.mxu0
        %v1171 = vadd.f32 0.0, %v1170
        %v1172 = vpop.f32.mrf.mxu0
        %1173 = vmatprep.mubr.bf16.mxu0 0
        %1174 = vmatmul.mubr.bf16.gmra.mxu0 %v991
        %v1175 = vpop.f32.mrf.mxu0
        %v1176 = vadd.f32 0.0, %v1175
        %v1177 = vpop.f32.mrf.mxu0
        %v1178 = vpop.f32.mrf.mxu0
        %v1179 = vadd.f32 0.0, %v1178
        %v1180 = vpop.f32.mrf.mxu0
        %1181 = vmatprep.mubr.bf16.mxu0 0
        %1182 = vmatmul.mubr.bf16.gmra.mxu0 %v992
        %v1183 = vpop.f32.mrf.mxu0
        %v1184 = vadd.f32 0.0, %v1183
        %v1185 = vpop.f32.mrf.mxu0
        %v1186 = vpop.f32.mrf.mxu0
        %v1187 = vadd.f32 0.0, %v1186
        %v1188 = vpop.f32.mrf.mxu0
        %1189 = vmatprep.mubr.bf16.mxu0 0
        %1190 = vmatmul.mubr.bf16.gmra.mxu0 %v993
        %v1191 = vpop.f32.mrf.mxu0
        %v1192 = vadd.f32 0.0, %v1191
        %v1193 = vpop.f32.mrf.mxu0
        %v1194 = vpop.f32.mrf.mxu0
        %v1195 = vadd.f32 0.0, %v1194
        %v1196 = vpop.f32.mrf.mxu0
        %1197 = vmatprep.mubr.bf16.mxu0 0
        %1198 = vmatmul.mubr.bf16.gmra.mxu0 %v994
        %v1199 = vpop.f32.mrf.mxu0
        %v1200 = vadd.f32 0.0, %v1199
        %v1201 = vpop.f32.mrf.mxu0
        %v1202 = vpop.f32.mrf.mxu0
        %v1203 = vadd.f32 0.0, %v1202
        %v1204 = vpop.f32.mrf.mxu0
        %1205 = vmatprep.mubr.bf16.mxu0 0
        %1206 = vmatmul.mubr.bf16.gmra.mxu0 %v995
        %v1207 = vpop.f32.mrf.mxu0
        %v1208 = vadd.f32 0.0, %v1207
        %v1209 = vpop.f32.mrf.mxu0
        %v1210 = vpop.f32.mrf.mxu0
        %v1211 = vadd.f32 0.0, %v1210
        %v1212 = vpop.f32.mrf.mxu0
        %1213 = vmatprep.mubr.bf16.mxu0 0
        %1214 = vmatmul.mubr.bf16.gmra.mxu0 %v996
        %v1215 = vpop.f32.mrf.mxu0
        %v1216 = vadd.f32 0.0, %v1215
        %v1217 = vpop.f32.mrf.mxu0
        %v1218 = vpop.f32.mrf.mxu0
        %v1219 = vadd.f32 0.0, %v1218
        %v1220 = vpop.f32.mrf.mxu0
        %1221 = vdwg.mxu0
        %v1222 = vld [vmem:[%s7] sm:$0x1]
        %v1224 = vlaneseq
        %v1225 = vshrl.u32 %v1224, 7
        %v1226 = vsub.s32 0, %v1225
        %v1227 = vrot.slane %v1222, %v1226
        %v1229 = vmul.f32 %v1096, %v1227
        %v1230 = vmul.f32 %v1099, %v1227
        %v1231 = vmul.f32 %v1104, %v1227
        %v1232 = vmul.f32 %v1107, %v1227
        %v1233 = vmul.f32 %v1112, %v1227
        %v1234 = vmul.f32 %v1115, %v1227
        %v1235 = vmul.f32 %v1120, %v1227
        %v1236 = vmul.f32 %v1123, %v1227
        %v1237 = vmul.f32 %v1128, %v1227
        %v1238 = vmul.f32 %v1131, %v1227
        %v1239 = vmul.f32 %v1136, %v1227
        %v1240 = vmul.f32 %v1139, %v1227
        %v1241 = vmul.f32 %v1144, %v1227
        %v1242 = vmul.f32 %v1147, %v1227
        %v1243 = vmul.f32 %v1152, %v1227
        %v1244 = vmul.f32 %v1155, %v1227
        %v1245 = vmul.f32 %v1160, %v1227
        %v1246 = vmul.f32 %v1163, %v1227
        %v1247 = vmul.f32 %v1168, %v1227
        %v1248 = vmul.f32 %v1171, %v1227
        %v1249 = vmul.f32 %v1176, %v1227
        %v1250 = vmul.f32 %v1179, %v1227
        %v1251 = vmul.f32 %v1184, %v1227
        %v1252 = vmul.f32 %v1187, %v1227
        %v1253 = vmul.f32 %v1192, %v1227
        %v1254 = vmul.f32 %v1195, %v1227
        %v1255 = vmul.f32 %v1200, %v1227
        %v1256 = vmul.f32 %v1203, %v1227
        %v1257 = vmul.f32 %v1208, %v1227
        %v1258 = vmul.f32 %v1211, %v1227
        %v1259 = vmul.f32 %v1216, %v1227
        %v1260 = vmul.f32 %v1219, %v1227
        %v1261 = vld [vmem:[%s8] sm:$0x1]
        %v1263 = vlaneseq
        %v1264 = vshrl.u32 %v1263, 7
        %v1265 = vsub.s32 0, %v1264
        %v1266 = vrot.slane %v1261, %v1265
        %v1268 = vadd.f32 %v1229, %v1266
        %v1269 = vadd.f32 %v1230, %v1266
        %v1270 = vadd.f32 %v1231, %v1266
        %v1271 = vadd.f32 %v1232, %v1266
        %v1272 = vadd.f32 %v1233, %v1266
        %v1273 = vadd.f32 %v1234, %v1266
        %v1274 = vadd.f32 %v1235, %v1266
        %v1275 = vadd.f32 %v1236, %v1266
        %v1276 = vadd.f32 %v1237, %v1266
        %v1277 = vadd.f32 %v1238, %v1266
        %v1278 = vadd.f32 %v1239, %v1266
        %v1279 = vadd.f32 %v1240, %v1266
        %v1280 = vadd.f32 %v1241, %v1266
        %v1281 = vadd.f32 %v1242, %v1266
        %v1282 = vadd.f32 %v1243, %v1266
        %v1283 = vadd.f32 %v1244, %v1266
        %v1284 = vadd.f32 %v1245, %v1266
        %v1285 = vadd.f32 %v1246, %v1266
        %v1286 = vadd.f32 %v1247, %v1266
        %v1287 = vadd.f32 %v1248, %v1266
        %v1288 = vadd.f32 %v1249, %v1266
        %v1289 = vadd.f32 %v1250, %v1266
        %v1290 = vadd.f32 %v1251, %v1266
        %v1291 = vadd.f32 %v1252, %v1266
        %v1292 = vadd.f32 %v1253, %v1266
        %v1293 = vadd.f32 %v1254, %v1266
        %v1294 = vadd.f32 %v1255, %v1266
        %v1295 = vadd.f32 %v1256, %v1266
        %v1296 = vadd.f32 %v1257, %v1266
        %v1297 = vadd.f32 %v1258, %v1266
        %v1298 = vadd.f32 %v1259, %v1266
        %v1299 = vadd.f32 %v1260, %v1266
        %s1300 = sld [smem:[#allocation3 + $0x80]]
        %v1301 = vstv %s1300
        %v1302 = vmul.f32 %v1301, %v817
        %v1303 = vmul.f32 %v1301, %v818
        %v1304 = vmul.f32 %v1301, %v819
        %v1305 = vmul.f32 %v1301, %v820
        %v1306 = vmul.f32 %v1301, %v821
        %v1307 = vmul.f32 %v1301, %v822
        %v1308 = vmul.f32 %v1301, %v823
        %v1309 = vmul.f32 %v1301, %v824
        %v1310 = vmul.f32 %v1301, %v825
        %v1311 = vmul.f32 %v1301, %v826
        %v1312 = vmul.f32 %v1301, %v827
        %v1313 = vmul.f32 %v1301, %v828
        %v1314 = vmul.f32 %v1301, %v829
        %v1315 = vmul.f32 %v1301, %v830
        %v1316 = vmul.f32 %v1301, %v831
        %v1317 = vmul.f32 %v1301, %v832
        %v1318 = vmul.f32 %v1301, %v833
        %v1319 = vmul.f32 %v1301, %v834
        %v1320 = vmul.f32 %v1301, %v835
        %v1321 = vmul.f32 %v1301, %v836
        %v1322 = vmul.f32 %v1301, %v837
        %v1323 = vmul.f32 %v1301, %v838
        %v1324 = vmul.f32 %v1301, %v839
        %v1325 = vmul.f32 %v1301, %v840
        %v1326 = vmul.f32 %v1301, %v841
        %v1327 = vmul.f32 %v1301, %v842
        %v1328 = vmul.f32 %v1301, %v843
        %v1329 = vmul.f32 %v1301, %v844
        %v1330 = vmul.f32 %v1301, %v845
        %v1331 = vmul.f32 %v1301, %v846
        %v1332 = vmul.f32 %v1301, %v847
        %v1333 = vmul.f32 %v1301, %v848
        %s1334 = sld [smem:[#allocation3 + $0x81]]
        %v1335 = vstv %s1334
        %v1336 = vmul.f32 %v1335, %v817
        %v1337 = vmul.f32 %v1335, %v818
        %v1338 = vmul.f32 %v1335, %v819
        %v1339 = vmul.f32 %v1335, %v820
        %v1340 = vmul.f32 %v1335, %v821
        %v1341 = vmul.f32 %v1335, %v822
        %v1342 = vmul.f32 %v1335, %v823
        %v1343 = vmul.f32 %v1335, %v824
        %v1344 = vmul.f32 %v1335, %v825
        %v1345 = vmul.f32 %v1335, %v826
        %v1346 = vmul.f32 %v1335, %v827
        %v1347 = vmul.f32 %v1335, %v828
        %v1348 = vmul.f32 %v1335, %v829
        %v1349 = vmul.f32 %v1335, %v830
        %v1350 = vmul.f32 %v1335, %v831
        %v1351 = vmul.f32 %v1335, %v832
        %v1352 = vmul.f32 %v1335, %v833
        %v1353 = vmul.f32 %v1335, %v834
        %v1354 = vmul.f32 %v1335, %v835
        %v1355 = vmul.f32 %v1335, %v836
        %v1356 = vmul.f32 %v1335, %v837
        %v1357 = vmul.f32 %v1335, %v838
        %v1358 = vmul.f32 %v1335, %v839
        %v1359 = vmul.f32 %v1335, %v840
        %v1360 = vmul.f32 %v1335, %v841
        %v1361 = vmul.f32 %v1335, %v842
        %v1362 = vmul.f32 %v1335, %v843
        %v1363 = vmul.f32 %v1335, %v844
        %v1364 = vmul.f32 %v1335, %v845
        %v1365 = vmul.f32 %v1335, %v846
        %v1366 = vmul.f32 %v1335, %v847
        %v1367 = vmul.f32 %v1335, %v848
        %v1368 = vadd.f32 %v1302, %v1336
        %v1369 = vadd.f32 %v1303, %v1337
        %v1370 = vadd.f32 %v1304, %v1338
        %v1371 = vadd.f32 %v1305, %v1339
        %v1372 = vadd.f32 %v1306, %v1340
        %v1373 = vadd.f32 %v1307, %v1341
        %v1374 = vadd.f32 %v1308, %v1342
        %v1375 = vadd.f32 %v1309, %v1343
        %v1376 = vadd.f32 %v1310, %v1344
        %v1377 = vadd.f32 %v1311, %v1345
        %v1378 = vadd.f32 %v1312, %v1346
        %v1379 = vadd.f32 %v1313, %v1347
        %v1380 = vadd.f32 %v1314, %v1348
        %v1381 = vadd.f32 %v1315, %v1349
        %v1382 = vadd.f32 %v1316, %v1350
        %v1383 = vadd.f32 %v1317, %v1351
        %v1384 = vadd.f32 %v1318, %v1352
        %v1385 = vadd.f32 %v1319, %v1353
        %v1386 = vadd.f32 %v1320, %v1354
        %v1387 = vadd.f32 %v1321, %v1355
        %v1388 = vadd.f32 %v1322, %v1356
        %v1389 = vadd.f32 %v1323, %v1357
        %v1390 = vadd.f32 %v1324, %v1358
        %v1391 = vadd.f32 %v1325, %v1359
        %v1392 = vadd.f32 %v1326, %v1360
        %v1393 = vadd.f32 %v1327, %v1361
        %v1394 = vadd.f32 %v1328, %v1362
        %v1395 = vadd.f32 %v1329, %v1363
        %v1396 = vadd.f32 %v1330, %v1364
        %v1397 = vadd.f32 %v1331, %v1365
        %v1398 = vadd.f32 %v1332, %v1366
        %v1399 = vadd.f32 %v1333, %v1367
        %s1400 = sld [smem:[#allocation3 + $0x82]]
        %v1401 = vstv %s1400
        %v1402 = vmul.f32 %v1401, %v1268
        %v1403 = vmul.f32 %v1401, %v1269
        %v1404 = vmul.f32 %v1401, %v1270
        %v1405 = vmul.f32 %v1401, %v1271
        %v1406 = vmul.f32 %v1401, %v1272
        %v1407 = vmul.f32 %v1401, %v1273
        %v1408 = vmul.f32 %v1401, %v1274
        %v1409 = vmul.f32 %v1401, %v1275
        %v1410 = vmul.f32 %v1401, %v1276
        %v1411 = vmul.f32 %v1401, %v1277
        %v1412 = vmul.f32 %v1401, %v1278
        %v1413 = vmul.f32 %v1401, %v1279
        %v1414 = vmul.f32 %v1401, %v1280
        %v1415 = vmul.f32 %v1401, %v1281
        %v1416 = vmul.f32 %v1401, %v1282
        %v1417 = vmul.f32 %v1401, %v1283
        %v1418 = vmul.f32 %v1401, %v1284
        %v1419 = vmul.f32 %v1401, %v1285
        %v1420 = vmul.f32 %v1401, %v1286
        %v1421 = vmul.f32 %v1401, %v1287
        %v1422 = vmul.f32 %v1401, %v1288
        %v1423 = vmul.f32 %v1401, %v1289
        %v1424 = vmul.f32 %v1401, %v1290
        %v1425 = vmul.f32 %v1401, %v1291
        %v1426 = vmul.f32 %v1401, %v1292
        %v1427 = vmul.f32 %v1401, %v1293
        %v1428 = vmul.f32 %v1401, %v1294
        %v1429 = vmul.f32 %v1401, %v1295
        %v1430 = vmul.f32 %v1401, %v1296
        %v1431 = vmul.f32 %v1401, %v1297
        %v1432 = vmul.f32 %v1401, %v1298
        %v1433 = vmul.f32 %v1401, %v1299
        %v1434 = vadd.f32 %v1368, %v1402
        %v1435 = vadd.f32 %v1369, %v1403
        %v1436 = vadd.f32 %v1370, %v1404
        %v1437 = vadd.f32 %v1371, %v1405
        %v1438 = vadd.f32 %v1372, %v1406
        %v1439 = vadd.f32 %v1373, %v1407
        %v1440 = vadd.f32 %v1374, %v1408
        %v1441 = vadd.f32 %v1375, %v1409
        %v1442 = vadd.f32 %v1376, %v1410
        %v1443 = vadd.f32 %v1377, %v1411
        %v1444 = vadd.f32 %v1378, %v1412
        %v1445 = vadd.f32 %v1379, %v1413
        %v1446 = vadd.f32 %v1380, %v1414
        %v1447 = vadd.f32 %v1381, %v1415
        %v1448 = vadd.f32 %v1382, %v1416
        %v1449 = vadd.f32 %v1383, %v1417
        %v1450 = vadd.f32 %v1384, %v1418
        %v1451 = vadd.f32 %v1385, %v1419
        %v1452 = vadd.f32 %v1386, %v1420
        %v1453 = vadd.f32 %v1387, %v1421
        %v1454 = vadd.f32 %v1388, %v1422
        %v1455 = vadd.f32 %v1389, %v1423
        %v1456 = vadd.f32 %v1390, %v1424
        %v1457 = vadd.f32 %v1391, %v1425
        %v1458 = vadd.f32 %v1392, %v1426
        %v1459 = vadd.f32 %v1393, %v1427
        %v1460 = vadd.f32 %v1394, %v1428
        %v1461 = vadd.f32 %v1395, %v1429
        %v1462 = vadd.f32 %v1396, %v1430
        %v1463 = vadd.f32 %v1397, %v1431
        %v1464 = vadd.f32 %v1398, %v1432
        %v1465 = vadd.f32 %v1399, %v1433
        %v1466 = vmax.f32 %v1434, 0.0
        %v1467 = vmax.f32 %v1435, 0.0
        %v1468 = vmax.f32 %v1436, 0.0
        %v1469 = vmax.f32 %v1437, 0.0
        %v1470 = vmax.f32 %v1438, 0.0
        %v1471 = vmax.f32 %v1439, 0.0
        %v1472 = vmax.f32 %v1440, 0.0
        %v1473 = vmax.f32 %v1441, 0.0
        %v1474 = vmax.f32 %v1442, 0.0
        %v1475 = vmax.f32 %v1443, 0.0
        %v1476 = vmax.f32 %v1444, 0.0
        %v1477 = vmax.f32 %v1445, 0.0
        %v1478 = vmax.f32 %v1446, 0.0
        %v1479 = vmax.f32 %v1447, 0.0
        %v1480 = vmax.f32 %v1448, 0.0
        %v1481 = vmax.f32 %v1449, 0.0
        %v1482 = vmax.f32 %v1450, 0.0
        %v1483 = vmax.f32 %v1451, 0.0
        %v1484 = vmax.f32 %v1452, 0.0
        %v1485 = vmax.f32 %v1453, 0.0
        %v1486 = vmax.f32 %v1454, 0.0
        %v1487 = vmax.f32 %v1455, 0.0
        %v1488 = vmax.f32 %v1456, 0.0
        %v1489 = vmax.f32 %v1457, 0.0
        %v1490 = vmax.f32 %v1458, 0.0
        %v1491 = vmax.f32 %v1459, 0.0
        %v1492 = vmax.f32 %v1460, 0.0
        %v1493 = vmax.f32 %v1461, 0.0
        %v1494 = vmax.f32 %v1462, 0.0
        %v1495 = vmax.f32 %v1463, 0.0
        %v1496 = vmax.f32 %v1464, 0.0
        %v1497 = vmax.f32 %v1465, 0.0
        %v1498 = vpack.c.bf16 %v1467, %v1466
        %v1499 = vpack.c.bf16 %v1469, %v1468
        %v1500 = vpack.c.bf16 %v1471, %v1470
        %v1501 = vpack.c.bf16 %v1473, %v1472
        %v1502 = vpack.c.bf16 %v1475, %v1474
        %v1503 = vpack.c.bf16 %v1477, %v1476
        %v1504 = vpack.c.bf16 %v1479, %v1478
        %v1505 = vpack.c.bf16 %v1481, %v1480
        %v1506 = vpack.c.bf16 %v1483, %v1482
        %v1507 = vpack.c.bf16 %v1485, %v1484
        %v1508 = vpack.c.bf16 %v1487, %v1486
        %v1509 = vpack.c.bf16 %v1489, %v1488
        %v1510 = vpack.c.bf16 %v1491, %v1490
        %v1511 = vpack.c.bf16 %v1493, %v1492
        %v1512 = vpack.c.bf16 %v1495, %v1494
        %v1513 = vpack.c.bf16 %v1497, %v1496
        %v1514 = vld [vmem:[%s9] sm:$0xf]
        %v1515 = vld [vmem:[%s9 + $0x4] sm:$0xf]
        %v1516 = vld [vmem:[%s9 + $0x8] sm:$0xf]
        %v1517 = vld [vmem:[%s9 + $0xc] sm:$0xf]
        %v1518 = vld [vmem:[%s9 + $0x10] sm:$0xf]
        %v1519 = vld [vmem:[%s9 + $0x14] sm:$0xf]
        %v1520 = vld [vmem:[%s9 + $0x18] sm:$0xf]
        %v1521 = vld [vmem:[%s9 + $0x1c] sm:$0xf]
        %v1522 = vld [vmem:[%s9 + $0x20] sm:$0xf]
        %v1523 = vld [vmem:[%s9 + $0x24] sm:$0xf]
        %v1524 = vld [vmem:[%s9 + $0x28] sm:$0xf]
        %v1525 = vld [vmem:[%s9 + $0x2c] sm:$0xf]
        %v1526 = vld [vmem:[%s9 + $0x30] sm:$0xf]
        %v1527 = vld [vmem:[%s9 + $0x34] sm:$0xf]
        %v1528 = vld [vmem:[%s9 + $0x38] sm:$0xf]
        %v1529 = vld [vmem:[%s9 + $0x3c] sm:$0xf]
        %v1546 = vunpack.c.l.b16 %v1514
        %v1547 = vunpack.c.l.b16 %v1515
        %v1548 = vunpack.c.l.b16 %v1516
        %v1549 = vunpack.c.l.b16 %v1517
        %v1550 = vunpack.c.l.b16 %v1518
        %v1551 = vunpack.c.l.b16 %v1519
        %v1552 = vunpack.c.l.b16 %v1520
        %v1553 = vunpack.c.l.b16 %v1521
        %v1554 = vunpack.c.l.b16 %v1522
        %v1555 = vunpack.c.l.b16 %v1523
        %v1556 = vunpack.c.l.b16 %v1524
        %v1557 = vunpack.c.l.b16 %v1525
        %v1558 = vunpack.c.l.b16 %v1526
        %v1559 = vunpack.c.l.b16 %v1527
        %v1560 = vunpack.c.l.b16 %v1528
        %v1561 = vunpack.c.l.b16 %v1529
        %v1562 = vpack.c.b16 %v1547, %v1546
        %v1563 = vpack.c.b16 %v1549, %v1548
        %v1564 = vpack.c.b16 %v1551, %v1550
        %v1565 = vpack.c.b16 %v1553, %v1552
        %v1566 = vpack.c.b16 %v1555, %v1554
        %v1567 = vpack.c.b16 %v1557, %v1556
        %v1568 = vpack.c.b16 %v1559, %v1558
        %v1569 = vpack.c.b16 %v1561, %v1560
        %1578 = vmatprep.subr.bf16.mxu0 0
        %1579 = vmatpush1.bf16.msra.mxu0 %v1569
        %1580 = vmatprep.subr.bf16.mxu0 0
        %1581 = vmatpush1.bf16.msra.mxu0 %v1568
        %1582 = vmatprep.subr.bf16.mxu0 0
        %1583 = vmatpush1.bf16.msra.mxu0 %v1567
        %1584 = vmatprep.subr.bf16.mxu0 0
        %1585 = vmatpush1.bf16.msra.mxu0 %v1566
        %1586 = vmatprep.subr.bf16.mxu0 0
        %1587 = vmatpush1.bf16.msra.mxu0 %v1565
        %1588 = vmatprep.subr.bf16.mxu0 0
        %1589 = vmatpush1.bf16.msra.mxu0 %v1564
        %1590 = vmatprep.subr.bf16.mxu0 0
        %1591 = vmatpush1.bf16.msra.mxu0 %v1563
        %1592 = vmatprep.subr.bf16.mxu0 0
        %1593 = vmatpush1.bf16.msra.mxu0 %v1562
        %1594 = vmatprep.subr.bf16.mxu0 0
        %1595 = vmatpush2.bf16.msra.mxu0 0
        %1596 = vmatprep.subr.bf16.mxu0 0
        %1597 = vmatpush2.bf16.msra.mxu0 0
        %1598 = vmatprep.subr.bf16.mxu0 0
        %1599 = vmatpush2.bf16.msra.mxu0 0
        %1600 = vmatprep.subr.bf16.mxu0 0
        %1601 = vmatpush2.bf16.msra.mxu0 0
        %1602 = vmatprep.subr.bf16.mxu0 0
        %1603 = vmatpush2.bf16.msra.mxu0 0
        %1604 = vmatprep.subr.bf16.mxu0 0
        %1605 = vmatpush2.bf16.msra.mxu0 0
        %1606 = vmatprep.subr.bf16.mxu0 0
        %1607 = vmatpush2.bf16.msra.mxu0 0
        %1608 = vmatprep.subr.bf16.mxu0 0
        %1609 = vmatpush2.bf16.msra.mxu0 0
        %1610 = vmatprep.mubr.bf16.mxu0 0
        %1611 = vmatmul.mubr.bf16.gmra.mxu0 %v1498
        %v1612 = vpop.f32.mrf.mxu0
        %v1613 = vadd.f32 0.0, %v1612
        %v1614 = vpop.f32.mrf.mxu0
        %v1615 = vpop.f32.mrf.mxu0
        %v1616 = vadd.f32 0.0, %v1615
        %v1617 = vpop.f32.mrf.mxu0
        %1618 = vmatprep.mubr.bf16.mxu0 0
        %1619 = vmatmul.mubr.bf16.gmra.mxu0 %v1499
        %v1620 = vpop.f32.mrf.mxu0
        %v1621 = vadd.f32 0.0, %v1620
        %v1622 = vpop.f32.mrf.mxu0
        %v1623 = vpop.f32.mrf.mxu0
        %v1624 = vadd.f32 0.0, %v1623
        %v1625 = vpop.f32.mrf.mxu0
        %1626 = vmatprep.mubr.bf16.mxu0 0
        %1627 = vmatmul.mubr.bf16.gmra.mxu0 %v1500
        %v1628 = vpop.f32.mrf.mxu0
        %v1629 = vadd.f32 0.0, %v1628
        %v1630 = vpop.f32.mrf.mxu0
        %v1631 = vpop.f32.mrf.mxu0
        %v1632 = vadd.f32 0.0, %v1631
        %v1633 = vpop.f32.mrf.mxu0
        %1634 = vmatprep.mubr.bf16.mxu0 0
        %1635 = vmatmul.mubr.bf16.gmra.mxu0 %v1501
        %v1636 = vpop.f32.mrf.mxu0
        %v1637 = vadd.f32 0.0, %v1636
        %v1638 = vpop.f32.mrf.mxu0
        %v1639 = vpop.f32.mrf.mxu0
        %v1640 = vadd.f32 0.0, %v1639
        %v1641 = vpop.f32.mrf.mxu0
        %1642 = vmatprep.mubr.bf16.mxu0 0
        %1643 = vmatmul.mubr.bf16.gmra.mxu0 %v1502
        %v1644 = vpop.f32.mrf.mxu0
        %v1645 = vadd.f32 0.0, %v1644
        %v1646 = vpop.f32.mrf.mxu0
        %v1647 = vpop.f32.mrf.mxu0
        %v1648 = vadd.f32 0.0, %v1647
        %v1649 = vpop.f32.mrf.mxu0
        %1650 = vmatprep.mubr.bf16.mxu0 0
        %1651 = vmatmul.mubr.bf16.gmra.mxu0 %v1503
        %v1652 = vpop.f32.mrf.mxu0
        %v1653 = vadd.f32 0.0, %v1652
        %v1654 = vpop.f32.mrf.mxu0
        %v1655 = vpop.f32.mrf.mxu0
        %v1656 = vadd.f32 0.0, %v1655
        %v1657 = vpop.f32.mrf.mxu0
        %1658 = vmatprep.mubr.bf16.mxu0 0
        %1659 = vmatmul.mubr.bf16.gmra.mxu0 %v1504
        %v1660 = vpop.f32.mrf.mxu0
        %v1661 = vadd.f32 0.0, %v1660
        %v1662 = vpop.f32.mrf.mxu0
        %v1663 = vpop.f32.mrf.mxu0
        %v1664 = vadd.f32 0.0, %v1663
        %v1665 = vpop.f32.mrf.mxu0
        %1666 = vmatprep.mubr.bf16.mxu0 0
        %1667 = vmatmul.mubr.bf16.gmra.mxu0 %v1505
        %v1668 = vpop.f32.mrf.mxu0
        %v1669 = vadd.f32 0.0, %v1668
        %v1670 = vpop.f32.mrf.mxu0
        %v1671 = vpop.f32.mrf.mxu0
        %v1672 = vadd.f32 0.0, %v1671
        %v1673 = vpop.f32.mrf.mxu0
        %1674 = vmatprep.mubr.bf16.mxu0 0
        %1675 = vmatmul.mubr.bf16.gmra.mxu0 %v1506
        %v1676 = vpop.f32.mrf.mxu0
        %v1677 = vadd.f32 0.0, %v1676
        %v1678 = vpop.f32.mrf.mxu0
        %v1679 = vpop.f32.mrf.mxu0
        %v1680 = vadd.f32 0.0, %v1679
        %v1681 = vpop.f32.mrf.mxu0
        %1682 = vmatprep.mubr.bf16.mxu0 0
        %1683 = vmatmul.mubr.bf16.gmra.mxu0 %v1507
        %v1684 = vpop.f32.mrf.mxu0
        %v1685 = vadd.f32 0.0, %v1684
        %v1686 = vpop.f32.mrf.mxu0
        %v1687 = vpop.f32.mrf.mxu0
        %v1688 = vadd.f32 0.0, %v1687
        %v1689 = vpop.f32.mrf.mxu0
        %1690 = vmatprep.mubr.bf16.mxu0 0
        %1691 = vmatmul.mubr.bf16.gmra.mxu0 %v1508
        %v1692 = vpop.f32.mrf.mxu0
        %v1693 = vadd.f32 0.0, %v1692
        %v1694 = vpop.f32.mrf.mxu0
        %v1695 = vpop.f32.mrf.mxu0
        %v1696 = vadd.f32 0.0, %v1695
        %v1697 = vpop.f32.mrf.mxu0
        %1698 = vmatprep.mubr.bf16.mxu0 0
        %1699 = vmatmul.mubr.bf16.gmra.mxu0 %v1509
        %v1700 = vpop.f32.mrf.mxu0
        %v1701 = vadd.f32 0.0, %v1700
        %v1702 = vpop.f32.mrf.mxu0
        %v1703 = vpop.f32.mrf.mxu0
        %v1704 = vadd.f32 0.0, %v1703
        %v1705 = vpop.f32.mrf.mxu0
        %1706 = vmatprep.mubr.bf16.mxu0 0
        %1707 = vmatmul.mubr.bf16.gmra.mxu0 %v1510
        %v1708 = vpop.f32.mrf.mxu0
        %v1709 = vadd.f32 0.0, %v1708
        %v1710 = vpop.f32.mrf.mxu0
        %v1711 = vpop.f32.mrf.mxu0
        %v1712 = vadd.f32 0.0, %v1711
        %v1713 = vpop.f32.mrf.mxu0
        %1714 = vmatprep.mubr.bf16.mxu0 0
        %1715 = vmatmul.mubr.bf16.gmra.mxu0 %v1511
        %v1716 = vpop.f32.mrf.mxu0
        %v1717 = vadd.f32 0.0, %v1716
        %v1718 = vpop.f32.mrf.mxu0
        %v1719 = vpop.f32.mrf.mxu0
        %v1720 = vadd.f32 0.0, %v1719
        %v1721 = vpop.f32.mrf.mxu0
        %1722 = vmatprep.mubr.bf16.mxu0 0
        %1723 = vmatmul.mubr.bf16.gmra.mxu0 %v1512
        %v1724 = vpop.f32.mrf.mxu0
        %v1725 = vadd.f32 0.0, %v1724
        %v1726 = vpop.f32.mrf.mxu0
        %v1727 = vpop.f32.mrf.mxu0
        %v1728 = vadd.f32 0.0, %v1727
        %v1729 = vpop.f32.mrf.mxu0
        %1730 = vmatprep.mubr.bf16.mxu0 0
        %1731 = vmatmul.mubr.bf16.gmra.mxu0 %v1513
        %v1732 = vpop.f32.mrf.mxu0
        %v1733 = vadd.f32 0.0, %v1732
        %v1734 = vpop.f32.mrf.mxu0
        %v1735 = vpop.f32.mrf.mxu0
        %v1736 = vadd.f32 0.0, %v1735
        %v1737 = vpop.f32.mrf.mxu0
        %1738 = vdwg.mxu0
        %v1739 = vld [vmem:[%s10] sm:$0x1]
        %v1741 = vlaneseq
        %v1742 = vshrl.u32 %v1741, 7
        %v1743 = vsub.s32 0, %v1742
        %v1744 = vrot.slane %v1739, %v1743
        %v1746 = vmul.f32 %v1613, %v1744
        %v1747 = vmul.f32 %v1616, %v1744
        %v1748 = vmul.f32 %v1621, %v1744
        %v1749 = vmul.f32 %v1624, %v1744
        %v1750 = vmul.f32 %v1629, %v1744
        %v1751 = vmul.f32 %v1632, %v1744
        %v1752 = vmul.f32 %v1637, %v1744
        %v1753 = vmul.f32 %v1640, %v1744
        %v1754 = vmul.f32 %v1645, %v1744
        %v1755 = vmul.f32 %v1648, %v1744
        %v1756 = vmul.f32 %v1653, %v1744
        %v1757 = vmul.f32 %v1656, %v1744
        %v1758 = vmul.f32 %v1661, %v1744
        %v1759 = vmul.f32 %v1664, %v1744
        %v1760 = vmul.f32 %v1669, %v1744
        %v1761 = vmul.f32 %v1672, %v1744
        %v1762 = vmul.f32 %v1677, %v1744
        %v1763 = vmul.f32 %v1680, %v1744
        %v1764 = vmul.f32 %v1685, %v1744
        %v1765 = vmul.f32 %v1688, %v1744
        %v1766 = vmul.f32 %v1693, %v1744
        %v1767 = vmul.f32 %v1696, %v1744
        %v1768 = vmul.f32 %v1701, %v1744
        %v1769 = vmul.f32 %v1704, %v1744
        %v1770 = vmul.f32 %v1709, %v1744
        %v1771 = vmul.f32 %v1712, %v1744
        %v1772 = vmul.f32 %v1717, %v1744
        %v1773 = vmul.f32 %v1720, %v1744
        %v1774 = vmul.f32 %v1725, %v1744
        %v1775 = vmul.f32 %v1728, %v1744
        %v1776 = vmul.f32 %v1733, %v1744
        %v1777 = vmul.f32 %v1736, %v1744
        %v1778 = vld [vmem:[%s11] sm:$0x1]
        %v1780 = vlaneseq
        %v1781 = vshrl.u32 %v1780, 7
        %v1782 = vsub.s32 0, %v1781
        %v1783 = vrot.slane %v1778, %v1782
        %v1785 = vadd.f32 %v1746, %v1783
        %v1786 = vadd.f32 %v1747, %v1783
        %v1787 = vadd.f32 %v1748, %v1783
        %v1788 = vadd.f32 %v1749, %v1783
        %v1789 = vadd.f32 %v1750, %v1783
        %v1790 = vadd.f32 %v1751, %v1783
        %v1791 = vadd.f32 %v1752, %v1783
        %v1792 = vadd.f32 %v1753, %v1783
        %v1793 = vadd.f32 %v1754, %v1783
        %v1794 = vadd.f32 %v1755, %v1783
        %v1795 = vadd.f32 %v1756, %v1783
        %v1796 = vadd.f32 %v1757, %v1783
        %v1797 = vadd.f32 %v1758, %v1783
        %v1798 = vadd.f32 %v1759, %v1783
        %v1799 = vadd.f32 %v1760, %v1783
        %v1800 = vadd.f32 %v1761, %v1783
        %v1801 = vadd.f32 %v1762, %v1783
        %v1802 = vadd.f32 %v1763, %v1783
        %v1803 = vadd.f32 %v1764, %v1783
        %v1804 = vadd.f32 %v1765, %v1783
        %v1805 = vadd.f32 %v1766, %v1783
        %v1806 = vadd.f32 %v1767, %v1783
        %v1807 = vadd.f32 %v1768, %v1783
        %v1808 = vadd.f32 %v1769, %v1783
        %v1809 = vadd.f32 %v1770, %v1783
        %v1810 = vadd.f32 %v1771, %v1783
        %v1811 = vadd.f32 %v1772, %v1783
        %v1812 = vadd.f32 %v1773, %v1783
        %v1813 = vadd.f32 %v1774, %v1783
        %v1814 = vadd.f32 %v1775, %v1783
        %v1815 = vadd.f32 %v1776, %v1783
        %v1816 = vadd.f32 %v1777, %v1783
        %s1817 = sld [smem:[#allocation2]]
        %v1818 = vstv %s1817
        %v1819 = vmul.f32 %v1818, %v1268
        %v1820 = vmul.f32 %v1818, %v1269
        %v1821 = vmul.f32 %v1818, %v1270
        %v1822 = vmul.f32 %v1818, %v1271
        %v1823 = vmul.f32 %v1818, %v1272
        %v1824 = vmul.f32 %v1818, %v1273
        %v1825 = vmul.f32 %v1818, %v1274
        %v1826 = vmul.f32 %v1818, %v1275
        %v1827 = vmul.f32 %v1818, %v1276
        %v1828 = vmul.f32 %v1818, %v1277
        %v1829 = vmul.f32 %v1818, %v1278
        %v1830 = vmul.f32 %v1818, %v1279
        %v1831 = vmul.f32 %v1818, %v1280
        %v1832 = vmul.f32 %v1818, %v1281
        %v1833 = vmul.f32 %v1818, %v1282
        %v1834 = vmul.f32 %v1818, %v1283
        %v1835 = vmul.f32 %v1818, %v1284
        %v1836 = vmul.f32 %v1818, %v1285
        %v1837 = vmul.f32 %v1818, %v1286
        %v1838 = vmul.f32 %v1818, %v1287
        %v1839 = vmul.f32 %v1818, %v1288
        %v1840 = vmul.f32 %v1818, %v1289
        %v1841 = vmul.f32 %v1818, %v1290
        %v1842 = vmul.f32 %v1818, %v1291
        %v1843 = vmul.f32 %v1818, %v1292
        %v1844 = vmul.f32 %v1818, %v1293
        %v1845 = vmul.f32 %v1818, %v1294
        %v1846 = vmul.f32 %v1818, %v1295
        %v1847 = vmul.f32 %v1818, %v1296
        %v1848 = vmul.f32 %v1818, %v1297
        %v1849 = vmul.f32 %v1818, %v1298
        %v1850 = vmul.f32 %v1818, %v1299
        %v1851 = vadd.f32 %v1819, %v1785
        %v1852 = vadd.f32 %v1820, %v1786
        %v1853 = vadd.f32 %v1821, %v1787
        %v1854 = vadd.f32 %v1822, %v1788
        %v1855 = vadd.f32 %v1823, %v1789
        %v1856 = vadd.f32 %v1824, %v1790
        %v1857 = vadd.f32 %v1825, %v1791
        %v1858 = vadd.f32 %v1826, %v1792
        %v1859 = vadd.f32 %v1827, %v1793
        %v1860 = vadd.f32 %v1828, %v1794
        %v1861 = vadd.f32 %v1829, %v1795
        %v1862 = vadd.f32 %v1830, %v1796
        %v1863 = vadd.f32 %v1831, %v1797
        %v1864 = vadd.f32 %v1832, %v1798
        %v1865 = vadd.f32 %v1833, %v1799
        %v1866 = vadd.f32 %v1834, %v1800
        %v1867 = vadd.f32 %v1835, %v1801
        %v1868 = vadd.f32 %v1836, %v1802
        %v1869 = vadd.f32 %v1837, %v1803
        %v1870 = vadd.f32 %v1838, %v1804
        %v1871 = vadd.f32 %v1839, %v1805
        %v1872 = vadd.f32 %v1840, %v1806
        %v1873 = vadd.f32 %v1841, %v1807
        %v1874 = vadd.f32 %v1842, %v1808
        %v1875 = vadd.f32 %v1843, %v1809
        %v1876 = vadd.f32 %v1844, %v1810
        %v1877 = vadd.f32 %v1845, %v1811
        %v1878 = vadd.f32 %v1846, %v1812
        %v1879 = vadd.f32 %v1847, %v1813
        %v1880 = vadd.f32 %v1848, %v1814
        %v1881 = vadd.f32 %v1849, %v1815
        %v1882 = vadd.f32 %v1850, %v1816
        %v1883 = vpack.c.bf16 %v1852, %v1851
        %v1884 = vpack.c.bf16 %v1854, %v1853
        %v1885 = vpack.c.bf16 %v1856, %v1855
        %v1886 = vpack.c.bf16 %v1858, %v1857
        %v1887 = vpack.c.bf16 %v1860, %v1859
        %v1888 = vpack.c.bf16 %v1862, %v1861
        %v1889 = vpack.c.bf16 %v1864, %v1863
        %v1890 = vpack.c.bf16 %v1866, %v1865
        %v1891 = vpack.c.bf16 %v1868, %v1867
        %v1892 = vpack.c.bf16 %v1870, %v1869
        %v1893 = vpack.c.bf16 %v1872, %v1871
        %v1894 = vpack.c.bf16 %v1874, %v1873
        %v1895 = vpack.c.bf16 %v1876, %v1875
        %v1896 = vpack.c.bf16 %v1878, %v1877
        %v1897 = vpack.c.bf16 %v1880, %v1879
        %v1898 = vpack.c.bf16 %v1882, %v1881
        %v1915 = vunpack.c.l.b16 %v1883
        %v1916 = vunpack.c.h.b16 %v1883
        %v1917 = vunpack.c.l.b16 %v1884
        %v1918 = vunpack.c.h.b16 %v1884
        %v1919 = vunpack.c.l.b16 %v1885
        %v1920 = vunpack.c.h.b16 %v1885
        %v1921 = vunpack.c.l.b16 %v1886
        %v1922 = vunpack.c.h.b16 %v1886
        %v1923 = vunpack.c.l.b16 %v1887
        %v1924 = vunpack.c.h.b16 %v1887
        %v1925 = vunpack.c.l.b16 %v1888
        %v1926 = vunpack.c.h.b16 %v1888
        %v1927 = vunpack.c.l.b16 %v1889
        %v1928 = vunpack.c.h.b16 %v1889
        %v1929 = vunpack.c.l.b16 %v1890
        %v1930 = vunpack.c.h.b16 %v1890
        %v1931 = vunpack.c.l.b16 %v1891
        %v1932 = vunpack.c.h.b16 %v1891
        %v1933 = vunpack.c.l.b16 %v1892
        %v1934 = vunpack.c.h.b16 %v1892
        %v1935 = vunpack.c.l.b16 %v1893
        %v1936 = vunpack.c.h.b16 %v1893
        %v1937 = vunpack.c.l.b16 %v1894
        %v1938 = vunpack.c.h.b16 %v1894
        %v1939 = vunpack.c.l.b16 %v1895
        %v1940 = vunpack.c.h.b16 %v1895
        %v1941 = vunpack.c.l.b16 %v1896
        %v1942 = vunpack.c.h.b16 %v1896
        %v1943 = vunpack.c.l.b16 %v1897
        %v1944 = vunpack.c.h.b16 %v1897
        %v1945 = vunpack.c.l.b16 %v1898
        %v1946 = vunpack.c.h.b16 %v1898
        %v1947 = vpack.c.b16 %v1915, %v1915
        %v1948 = vpack.c.b16 %v1916, %v1916
        %v1949 = vpack.c.b16 %v1917, %v1917
        %v1950 = vpack.c.b16 %v1918, %v1918
        %v1951 = vpack.c.b16 %v1919, %v1919
        %v1952 = vpack.c.b16 %v1920, %v1920
        %v1953 = vpack.c.b16 %v1921, %v1921
        %v1954 = vpack.c.b16 %v1922, %v1922
        %v1955 = vpack.c.b16 %v1923, %v1923
        %v1956 = vpack.c.b16 %v1924, %v1924
        %v1957 = vpack.c.b16 %v1925, %v1925
        %v1958 = vpack.c.b16 %v1926, %v1926
        %v1959 = vpack.c.b16 %v1927, %v1927
        %v1960 = vpack.c.b16 %v1928, %v1928
        %v1961 = vpack.c.b16 %v1929, %v1929
        %v1962 = vpack.c.b16 %v1930, %v1930
        %v1963 = vpack.c.b16 %v1931, %v1931
        %v1964 = vpack.c.b16 %v1932, %v1932
        %v1965 = vpack.c.b16 %v1933, %v1933
        %v1966 = vpack.c.b16 %v1934, %v1934
        %v1967 = vpack.c.b16 %v1935, %v1935
        %v1968 = vpack.c.b16 %v1936, %v1936
        %v1969 = vpack.c.b16 %v1937, %v1937
        %v1970 = vpack.c.b16 %v1938, %v1938
        %v1971 = vpack.c.b16 %v1939, %v1939
        %v1972 = vpack.c.b16 %v1940, %v1940
        %v1973 = vpack.c.b16 %v1941, %v1941
        %v1974 = vpack.c.b16 %v1942, %v1942
        %v1975 = vpack.c.b16 %v1943, %v1943
        %v1976 = vpack.c.b16 %v1944, %v1944
        %v1977 = vpack.c.b16 %v1945, %v1945
        %v1978 = vpack.c.b16 %v1946, %v1946
        %2011 = vst [vmem:[%s430] sm:$0xf] %v1947
        %2012 = vst [vmem:[%s430 + $0x4] sm:$0xf] %v1948
        %2013 = vst [vmem:[%s430 + $0x8] sm:$0xf] %v1949
        %2014 = vst [vmem:[%s430 + $0xc] sm:$0xf] %v1950
        %2015 = vst [vmem:[%s430 + $0x10] sm:$0xf] %v1951
        %2016 = vst [vmem:[%s430 + $0x14] sm:$0xf] %v1952
        %2017 = vst [vmem:[%s430 + $0x18] sm:$0xf] %v1953
        %2018 = vst [vmem:[%s430 + $0x1c] sm:$0xf] %v1954
        %2019 = vst [vmem:[%s430 + $0x20] sm:$0xf] %v1955
        %2020 = vst [vmem:[%s430 + $0x24] sm:$0xf] %v1956
        %2021 = vst [vmem:[%s430 + $0x28] sm:$0xf] %v1957
        %2022 = vst [vmem:[%s430 + $0x2c] sm:$0xf] %v1958
        %2023 = vst [vmem:[%s430 + $0x30] sm:$0xf] %v1959
        %2024 = vst [vmem:[%s430 + $0x34] sm:$0xf] %v1960
        %2025 = vst [vmem:[%s430 + $0x38] sm:$0xf] %v1961
        %2026 = vst [vmem:[%s430 + $0x3c] sm:$0xf] %v1962
        %2027 = vst [vmem:[%s430 + $0x40] sm:$0xf] %v1963
        %2028 = vst [vmem:[%s430 + $0x44] sm:$0xf] %v1964
        %2029 = vst [vmem:[%s430 + $0x48] sm:$0xf] %v1965
        %2030 = vst [vmem:[%s430 + $0x4c] sm:$0xf] %v1966
        %2031 = vst [vmem:[%s430 + $0x50] sm:$0xf] %v1967
        %2032 = vst [vmem:[%s430 + $0x54] sm:$0xf] %v1968
        %2033 = vst [vmem:[%s430 + $0x58] sm:$0xf] %v1969
        %2034 = vst [vmem:[%s430 + $0x5c] sm:$0xf] %v1970
        %2035 = vst [vmem:[%s430 + $0x60] sm:$0xf] %v1971
        %2036 = vst [vmem:[%s430 + $0x64] sm:$0xf] %v1972
        %2037 = vst [vmem:[%s430 + $0x68] sm:$0xf] %v1973
        %2038 = vst [vmem:[%s430 + $0x6c] sm:$0xf] %v1974
        %2039 = vst [vmem:[%s430 + $0x70] sm:$0xf] %v1975
        %2040 = vst [vmem:[%s430 + $0x74] sm:$0xf] %v1976
        %2041 = vst [vmem:[%s430 + $0x78] sm:$0xf] %v1977
        %2042 = vst [vmem:[%s430 + $0x7c] sm:$0xf] %v1978
        %s2043 = smul.u32 32, %s25
        %p2044 = scmp.lt.s32.totalorder %s2043, 63
        %s2045 = scalar_select %p2044, %s2043, 63
        %s2046 = smul.addr %s2045, 4
        %s2047 = scalar_lea.vmem %s12, %s2046
        // Predicated region
        $region73: #{_lambda_.3} parent=67 // pred_check
          %p2048 = pneg %p300
        $region74: #{_lambda_.3} parent=67 // pred_check_branch
          %2050 = sbr.rel (%p2048) target = $region76
        $region75: #{_lambda_.3} parent=67 // pred_region
          %s2051 = smul.u32 32, %s25
        $region76: #{_lambda_.3} parent=67 // pred_fallthru
          _
      $region68: #{_lambda_.3} parent=5 // pred_fallthru
        _
      %p2052 = scmp.le.s32.totalorder 2, %s20
      // Predicated region
      $region77: #{_lambda_.3} parent=5 // pred_check
        %p2053 = pneg %p2052
      $region78: #{_lambda_.3} parent=5 // pred_check_branch
        %2055 = sbr.rel (%p2053) target = $region80
      $region79: #{_lambda_.3} parent=5 // pred_region
        %s2056 = ssub.s32 %s20, 2
        // Predicated region
        $region81: #{_lambda_.3} parent=79 // pred_check
          %p2057 = pneg %p306
        $region82: #{_lambda_.3} parent=79 // pred_check_branch
          %2059 = sbr.rel (%p2057) target = $region84
        $region83: #{_lambda_.3} parent=79 // pred_region
          %s2060 = smul.u32 32, %s26
          %p2061 = scmp.lt.s32.totalorder %s2060, 63
          %s2062 = scalar_select %p2061, %s2060, 63
          %s2063 = smul.addr %s2062, 4
          %s2064 = scalar_lea.vmem %s12, %s2063
        $region84: #{_lambda_.3} parent=79 // pred_fallthru
          _
      $region80: #{_lambda_.3} parent=5 // pred_fallthru
        _
    $region6: #{_lambda_.3} parent=1 // loop_footer
      %s24 = sadd.s32 1, %s20
    $region7: #{_lambda_.3} parent=1 // loop_footer_branch
      %19 = sbr.rel target = $region3
    $region8: #{_lambda_.3} parent=1 // loop_exit
      _
    %2065 = vsyncpa [#allocation4], 1
    %s2066 = scalar_lea.sflag [#allocation4], 1
    %2067 = vsyncpa %s2066, 1

// kernel: _lambda_.4
$region0: #{_lambda_.4}
  #allocation0 [shape = 'u32[]', space=smem, size = 0x4, offset = 0x4, fixed_abs, tag = 'smem constant byte address 0x4 - core index']
  #allocation1 [shape = 'u32[144,128]{1,0:T(1,128)}', space=vmem, size = 0x12000, scoped, tag = 'internal scratch']
  #allocation2 [shape = 'f32[1]{0:T(128)S(6)}', space=smem, size = 0x200, scoped, tag = 'scoped memory for _lambda_.4']
  %s0 = inlined_call_operand.vmem [shape: f32[2,4], index: 0, kind: input, shape index: {}]
  %s1 = inlined_call_operand.<no memory space> [shape: f32[1], index: 1, kind: input, shape index: {}]
  %s2 = inlined_call_operand.vmem [shape: bf16[16,2,8,2,128], index: 2, kind: input, shape index: {}]
  %s3 = inlined_call_operand.vmem [shape: bf16[128,128], index: 3, kind: input, shape index: {}]
  %s4 = inlined_call_operand.vmem [shape: f32[1,128], index: 4, kind: input, shape index: {}]
  %s5 = inlined_call_operand.vmem [shape: f32[1,128], index: 5, kind: input, shape index: {}]
  %s6 = inlined_call_operand.vmem [shape: bf16[1,128,128], index: 6, kind: input, shape index: {}]
  %s7 = inlined_call_operand.vmem [shape: f32[1,1,128], index: 7, kind: input, shape index: {}]
  %s8 = inlined_call_operand.vmem [shape: f32[1,1,128], index: 8, kind: input, shape index: {}]
  %s9 = inlined_call_operand.vmem [shape: bf16[128,128], index: 9, kind: input, shape index: {}]
  %s10 = inlined_call_operand.vmem [shape: f32[1,128], index: 10, kind: input, shape index: {}]
  %s11 = inlined_call_operand.vmem [shape: f32[1,128], index: 11, kind: input, shape index: {}]
  %s12 = inlined_call_operand.vmem [shape: bf16[128,128], index: 12, kind: output, shape index: {}]
  %s13 = sld [smem:[#allocation0]]
  $region85: #{_lambda_.4} parent=0
    _
  %s15 = ssub.s32 1, %s13
  %s16 = scalar_select 0, %s15, %s13
  %17 = sst [smem:[#allocation2]] %s1
  $region1: #{_lambda_.4} parent=0
    #allocation3 [shape = 'u8[1024]{0}', space=smem, size = 0x400, scoped, tag = 'input window, operand 0, single buffered']
    #allocation4 [shape = 's32[2]{0}', space=sflag, size = 0x8, scoped, tag = 'scoped memory for _lambda_.4']
    %18 = vsyncpa [#allocation4], 0
    loop: start=0, step=1, limit=4
    $region2: #{_lambda_.4} parent=1 // loop_pre_header
      _
    $region3: #{_lambda_.4} parent=1 // loop_header
      %s20 = sphi 0, %s24
      %p21 = scmp.ge.s32.totalorder %s20, 4
      %s28 = sphi 0, %s28
      %s30 = sphi 0, %s28
      %s31 = sphi 0, %s30
      %s45 = sphi 0, %s31
      %s49 = sphi 0, %s49
      %s51 = sphi 0, %s49
      %s52 = sphi 0, %s51
      %s66 = sphi 0, %s52
      %s72 = sphi 0, %s74
      %s75 = sphi 0, %s72
      %s76 = sphi 0, %s75
      %s92 = sphi 0, %s76
      %s96 = sphi 0, %s96
      %s98 = sphi 0, %s96
      %s99 = sphi 0, %s98
      %s113 = sphi 0, %s99
      %s117 = sphi 0, %s117
      %s119 = sphi 0, %s117
      %s120 = sphi 0, %s119
      %s134 = sphi 0, %s120
      %s138 = sphi 0, %s138
      %s140 = sphi 0, %s138
      %s141 = sphi 0, %s140
      %s155 = sphi 0, %s141
      %s159 = sphi 0, %s159
      %s161 = sphi 0, %s159
      %s162 = sphi 0, %s161
      %s176 = sphi 0, %s162
      %s180 = sphi 0, %s180
      %s182 = sphi 0, %s180
      %s183 = sphi 0, %s182
      %s197 = sphi 0, %s183
      %s201 = sphi 0, %s201
      %s203 = sphi 0, %s201
      %s204 = sphi 0, %s203
      %s218 = sphi 0, %s204
      %s222 = sphi 0, %s222
      %s224 = sphi 0, %s222
      %s225 = sphi 0, %s224
      %s239 = sphi 0, %s225
      %s243 = sphi 0, %s243
      %s245 = sphi 0, %s243
      %s246 = sphi 0, %s245
      %s260 = sphi 0, %s246
      %s264 = sphi 0, %s264
      %s266 = sphi 0, %s264
      %s267 = sphi 0, %s266
      %s281 = sphi 0, %s267
      %s287 = sphi 0, %s289
      %s290 = sphi 0, %s287
      %s291 = sphi 0, %s290
      %s307 = sphi 0, %s291
    $region4: #{_lambda_.4} parent=1 // loop_header_branch
      %23 = sbr.rel (%p21) target = $region8
    $region5: #{_lambda_.4} parent=1 // loop_body
      %s25 = ssub.s32 %s20, 1
      %s26 = ssub.s32 %s20, 2
      %s27 = sadd.s32 %s20, 1
      %s29 = sadd.s32 %s28, 1
      %p32 = scmp.eq.s32.totalorder %s20, 1
      %p33 = scmp.ne.s32.totalorder %s28, %s30
      %p34 = scmp.eq.s32.totalorder %s20, 0
      %p35 = por %p33, %p34
      %p36 = scmp.ne.s32.totalorder %s28, %s30
      %p37 = scmp.eq.s32.totalorder %s25, 1
      %p38 = por %p36, %p37
      %p39 = scmp.ne.s32.totalorder %s30, %s31
      %p40 = scmp.eq.s32.totalorder %s25, 0
      %p41 = por %p39, %p40
      %p42 = scmp.ne.s32.totalorder %s30, %s31
      %p43 = scmp.eq.s32.totalorder %s26, 1
      %p44 = por %p42, %p43
      %p46 = scmp.ne.s32.totalorder %s31, %s45
      %p47 = scmp.eq.s32.totalorder %s26, 0
      %p48 = por %p46, %p47
      %s50 = sadd.s32 %s49, 1
      %p53 = scmp.eq.s32.totalorder %s20, 1
      %p54 = scmp.ne.s32.totalorder %s49, %s51
      %p55 = scmp.eq.s32.totalorder %s20, 0
      %p56 = por %p54, %p55
      %p57 = scmp.ne.s32.totalorder %s49, %s51
      %p58 = scmp.eq.s32.totalorder %s25, 1
      %p59 = por %p57, %p58
      %p60 = scmp.ne.s32.totalorder %s51, %s52
      %p61 = scmp.eq.s32.totalorder %s25, 0
      %p62 = por %p60, %p61
      %p63 = scmp.ne.s32.totalorder %s51, %s52
      %p64 = scmp.eq.s32.totalorder %s26, 1
      %p65 = por %p63, %p64
      %p67 = scmp.ne.s32.totalorder %s52, %s66
      %p68 = scmp.eq.s32.totalorder %s26, 0
      %p69 = por %p67, %p68
      %s70 = ssub.s32 %s20, %s27
      %p71 = scmp.eq.s32.totalorder %s70, 0
      %s73 = sadd.s32 %s72, 1
      %s74 = scalar_select %p71, %s72, %s73
      %p77 = pneg %p71
      %p78 = scmp.eq.s32.totalorder %s20, 1
      %p79 = por %p77, %p78
      %p80 = scmp.ne.s32.totalorder %s72, %s75
      %p81 = scmp.eq.s32.totalorder %s20, 0
      %p82 = por %p80, %p81
      %p83 = scmp.ne.s32.totalorder %s72, %s75
      %p84 = scmp.eq.s32.totalorder %s25, 1
      %p85 = por %p83, %p84
      %p86 = scmp.ne.s32.totalorder %s75, %s76
      %p87 = scmp.eq.s32.totalorder %s25, 0
      %p88 = por %p86, %p87
      %p89 = scmp.ne.s32.totalorder %s75, %s76
      %p90 = scmp.eq.s32.totalorder %s26, 1
      %p91 = por %p89, %p90
      %p93 = scmp.ne.s32.totalorder %s76, %s92
      %p94 = scmp.eq.s32.totalorder %s26, 0
      %p95 = por %p93, %p94
      %s97 = sadd.s32 %s96, 1
      %p100 = scmp.eq.s32.totalorder %s20, 1
      %p101 = scmp.ne.s32.totalorder %s96, %s98
      %p102 = scmp.eq.s32.totalorder %s20, 0
      %p103 = por %p101, %p102
      %p104 = scmp.ne.s32.totalorder %s96, %s98
      %p105 = scmp.eq.s32.totalorder %s25, 1
      %p106 = por %p104, %p105
      %p107 = scmp.ne.s32.totalorder %s98, %s99
      %p108 = scmp.eq.s32.totalorder %s25, 0
      %p109 = por %p107, %p108
      %p110 = scmp.ne.s32.totalorder %s98, %s99
      %p111 = scmp.eq.s32.totalorder %s26, 1
      %p112 = por %p110, %p111
      %p114 = scmp.ne.s32.totalorder %s99, %s113
      %p115 = scmp.eq.s32.totalorder %s26, 0
      %p116 = por %p114, %p115
      %s118 = sadd.s32 %s117, 1
      %p121 = scmp.eq.s32.totalorder %s20, 1
      %p122 = scmp.ne.s32.totalorder %s117, %s119
      %p123 = scmp.eq.s32.totalorder %s20, 0
      %p124 = por %p122, %p123
      %p125 = scmp.ne.s32.totalorder %s117, %s119
      %p126 = scmp.eq.s32.totalorder %s25, 1
      %p127 = por %p125, %p126
      %p128 = scmp.ne.s32.totalorder %s119, %s120
      %p129 = scmp.eq.s32.totalorder %s25, 0
      %p130 = por %p128, %p129
      %p131 = scmp.ne.s32.totalorder %s119, %s120
      %p132 = scmp.eq.s32.totalorder %s26, 1
      %p133 = por %p131, %p132
      %p135 = scmp.ne.s32.totalorder %s120, %s134
      %p136 = scmp.eq.s32.totalorder %s26, 0
      %p137 = por %p135, %p136
      %s139 = sadd.s32 %s138, 1
      %p142 = scmp.eq.s32.totalorder %s20, 1
      %p143 = scmp.ne.s32.totalorder %s138, %s140
      %p144 = scmp.eq.s32.totalorder %s20, 0
      %p145 = por %p143, %p144
      %p146 = scmp.ne.s32.totalorder %s138, %s140
      %p147 = scmp.eq.s32.totalorder %s25, 1
      %p148 = por %p146, %p147
      %p149 = scmp.ne.s32.totalorder %s140, %s141
      %p150 = scmp.eq.s32.totalorder %s25, 0
      %p151 = por %p149, %p150
      %p152 = scmp.ne.s32.totalorder %s140, %s141
      %p153 = scmp.eq.s32.totalorder %s26, 1
      %p154 = por %p152, %p153
      %p156 = scmp.ne.s32.totalorder %s141, %s155
      %p157 = scmp.eq.s32.totalorder %s26, 0
      %p158 = por %p156, %p157
      %s160 = sadd.s32 %s159, 1
      %p163 = scmp.eq.s32.totalorder %s20, 1
      %p164 = scmp.ne.s32.totalorder %s159, %s161
      %p165 = scmp.eq.s32.totalorder %s20, 0
      %p166 = por %p164, %p165
      %p167 = scmp.ne.s32.totalorder %s159, %s161
      %p168 = scmp.eq.s32.totalorder %s25, 1
      %p169 = por %p167, %p168
      %p170 = scmp.ne.s32.totalorder %s161, %s162
      %p171 = scmp.eq.s32.totalorder %s25, 0
      %p172 = por %p170, %p171
      %p173 = scmp.ne.s32.totalorder %s161, %s162
      %p174 = scmp.eq.s32.totalorder %s26, 1
      %p175 = por %p173, %p174
      %p177 = scmp.ne.s32.totalorder %s162, %s176
      %p178 = scmp.eq.s32.totalorder %s26, 0
      %p179 = por %p177, %p178
      %s181 = sadd.s32 %s180, 1
      %p184 = scmp.eq.s32.totalorder %s20, 1
      %p185 = scmp.ne.s32.totalorder %s180, %s182
      %p186 = scmp.eq.s32.totalorder %s20, 0
      %p187 = por %p185, %p186
      %p188 = scmp.ne.s32.totalorder %s180, %s182
      %p189 = scmp.eq.s32.totalorder %s25, 1
      %p190 = por %p188, %p189
      %p191 = scmp.ne.s32.totalorder %s182, %s183
      %p192 = scmp.eq.s32.totalorder %s25, 0
      %p193 = por %p191, %p192
      %p194 = scmp.ne.s32.totalorder %s182, %s183
      %p195 = scmp.eq.s32.totalorder %s26, 1
      %p196 = por %p194, %p195
      %p198 = scmp.ne.s32.totalorder %s183, %s197
      %p199 = scmp.eq.s32.totalorder %s26, 0
      %p200 = por %p198, %p199
      %s202 = sadd.s32 %s201, 1
      %p205 = scmp.eq.s32.totalorder %s20, 1
      %p206 = scmp.ne.s32.totalorder %s201, %s203
      %p207 = scmp.eq.s32.totalorder %s20, 0
      %p208 = por %p206, %p207
      %p209 = scmp.ne.s32.totalorder %s201, %s203
      %p210 = scmp.eq.s32.totalorder %s25, 1
      %p211 = por %p209, %p210
      %p212 = scmp.ne.s32.totalorder %s203, %s204
      %p213 = scmp.eq.s32.totalorder %s25, 0
      %p214 = por %p212, %p213
      %p215 = scmp.ne.s32.totalorder %s203, %s204
      %p216 = scmp.eq.s32.totalorder %s26, 1
      %p217 = por %p215, %p216
      %p219 = scmp.ne.s32.totalorder %s204, %s218
      %p220 = scmp.eq.s32.totalorder %s26, 0
      %p221 = por %p219, %p220
      %s223 = sadd.s32 %s222, 1
      %p226 = scmp.eq.s32.totalorder %s20, 1
      %p227 = scmp.ne.s32.totalorder %s222, %s224
      %p228 = scmp.eq.s32.totalorder %s20, 0
      %p229 = por %p227, %p228
      %p230 = scmp.ne.s32.totalorder %s222, %s224
      %p231 = scmp.eq.s32.totalorder %s25, 1
      %p232 = por %p230, %p231
      %p233 = scmp.ne.s32.totalorder %s224, %s225
      %p234 = scmp.eq.s32.totalorder %s25, 0
      %p235 = por %p233, %p234
      %p236 = scmp.ne.s32.totalorder %s224, %s225
      %p237 = scmp.eq.s32.totalorder %s26, 1
      %p238 = por %p236, %p237
      %p240 = scmp.ne.s32.totalorder %s225, %s239
      %p241 = scmp.eq.s32.totalorder %s26, 0
      %p242 = por %p240, %p241
      %s244 = sadd.s32 %s243, 1
      %p247 = scmp.eq.s32.totalorder %s20, 1
      %p248 = scmp.ne.s32.totalorder %s243, %s245
      %p249 = scmp.eq.s32.totalorder %s20, 0
      %p250 = por %p248, %p249
      %p251 = scmp.ne.s32.totalorder %s243, %s245
      %p252 = scmp.eq.s32.totalorder %s25, 1
      %p253 = por %p251, %p252
      %p254 = scmp.ne.s32.totalorder %s245, %s246
      %p255 = scmp.eq.s32.totalorder %s25, 0
      %p256 = por %p254, %p255
      %p257 = scmp.ne.s32.totalorder %s245, %s246
      %p258 = scmp.eq.s32.totalorder %s26, 1
      %p259 = por %p257, %p258
      %p261 = scmp.ne.s32.totalorder %s246, %s260
      %p262 = scmp.eq.s32.totalorder %s26, 0
      %p263 = por %p261, %p262
      %s265 = sadd.s32 %s264, 1
      %p268 = scmp.eq.s32.totalorder %s20, 1
      %p269 = scmp.ne.s32.totalorder %s264, %s266
      %p270 = scmp.eq.s32.totalorder %s20, 0
      %p271 = por %p269, %p270
      %p272 = scmp.ne.s32.totalorder %s264, %s266
      %p273 = scmp.eq.s32.totalorder %s25, 1
      %p274 = por %p272, %p273
      %p275 = scmp.ne.s32.totalorder %s266, %s267
      %p276 = scmp.eq.s32.totalorder %s25, 0
      %p277 = por %p275, %p276
      %p278 = scmp.ne.s32.totalorder %s266, %s267
      %p279 = scmp.eq.s32.totalorder %s26, 1
      %p280 = por %p278, %p279
      %p282 = scmp.ne.s32.totalorder %s267, %s281
      %p283 = scmp.eq.s32.totalorder %s26, 0
      %p284 = por %p282, %p283
      %s285 = ssub.s32 %s20, %s27
      %p286 = scmp.eq.s32.totalorder %s285, 0
      %s288 = sadd.s32 %s287, 1
      %s289 = scalar_select %p286, %s287, %s288
      %p292 = pneg %p286
      %p293 = scmp.eq.s32.totalorder %s20, 1
      %p294 = por %p292, %p293
      %p295 = scmp.ne.s32.totalorder %s287, %s290
      %p296 = scmp.eq.s32.totalorder %s20, 0
      %p297 = por %p295, %p296
      %p298 = scmp.ne.s32.totalorder %s287, %s290
      %p299 = scmp.eq.s32.totalorder %s25, 1
      %p300 = por %p298, %p299
      %p301 = scmp.ne.s32.totalorder %s290, %s291
      %p302 = scmp.eq.s32.totalorder %s25, 0
      %p303 = por %p301, %p302
      %p304 = scmp.ne.s32.totalorder %s290, %s291
      %p305 = scmp.eq.s32.totalorder %s26, 1
      %p306 = por %p304, %p305
      %p308 = scmp.ne.s32.totalorder %s291, %s307
      %p309 = scmp.eq.s32.totalorder %s26, 0
      %p310 = por %p308, %p309
      %p311 = scmp.le.s32.totalorder 1, %s20
      %p312 = scmp.lt.s32.totalorder %s20, 3
      %p313 = pnand %p311, %p312
      %p314 = pneg %p313
      // Predicated region
      $region9: #{_lambda_.4} parent=5 // pred_check
        _
      $region10: #{_lambda_.4} parent=5 // pred_check_branch
        %316 = sbr.rel (%p313) target = $region12
      $region11: #{_lambda_.4} parent=5 // pred_region
        %s317 = ssub.s32 %s20, 1
        // Predicated region
        $region13: #{_lambda_.4} parent=11 // pred_check
          %p318 = pneg %p41
        $region14: #{_lambda_.4} parent=11 // pred_check_branch
          %320 = sbr.rel (%p318) target = $region16
        $region15: #{_lambda_.4} parent=11 // pred_region
          %s322 = ssub.s32 32, 32
          %323 = vsyncadd [#allocation4], %s322
          %s325 = sshll.u32 %s0, 4
          %s326 = int_to_ptr.vmem [resolvable:$true] %s325
          %328 = dma.vmem_to_smem %s326, 32, [#allocation3], [#allocation4]
        $region16: #{_lambda_.4} parent=11 // pred_fallthru
          _
        // Predicated region
        $region17: #{_lambda_.4} parent=11 // pred_check
          %p329 = pneg %p62
        $region18: #{_lambda_.4} parent=11 // pred_check_branch
          %331 = sbr.rel (%p329) target = $region20
        $region19: #{_lambda_.4} parent=11 // pred_region
          _
        $region20: #{_lambda_.4} parent=11 // pred_fallthru
          _
        // Predicated region
        $region21: #{_lambda_.4} parent=11 // pred_check
          %p332 = pneg %p109
        $region22: #{_lambda_.4} parent=11 // pred_check_branch
          %334 = sbr.rel (%p332) target = $region24
        $region23: #{_lambda_.4} parent=11 // pred_region
          _
        $region24: #{_lambda_.4} parent=11 // pred_fallthru
          _
        // Predicated region
        $region25: #{_lambda_.4} parent=11 // pred_check
          %p335 = pneg %p130
        $region26: #{_lambda_.4} parent=11 // pred_check_branch
          %337 = sbr.rel (%p335) target = $region28
        $region27: #{_lambda_.4} parent=11 // pred_region
          _
        $region28: #{_lambda_.4} parent=11 // pred_fallthru
          _
        // Predicated region
        $region29: #{_lambda_.4} parent=11 // pred_check
          %p338 = pneg %p151
        $region30: #{_lambda_.4} parent=11 // pred_check_branch
          %340 = sbr.rel (%p338) target = $region32
        $region31: #{_lambda_.4} parent=11 // pred_region
          _
        $region32: #{_lambda_.4} parent=11 // pred_fallthru
          _
        // Predicated region
        $region33: #{_lambda_.4} parent=11 // pred_check
          %p341 = pneg %p172
        $region34: #{_lambda_.4} parent=11 // pred_check_branch
          %343 = sbr.rel (%p341) target = $region36
        $region35: #{_lambda_.4} parent=11 // pred_region
          _
        $region36: #{_lambda_.4} parent=11 // pred_fallthru
          _
        // Predicated region
        $region37: #{_lambda_.4} parent=11 // pred_check
          %p344 = pneg %p193
        $region38: #{_lambda_.4} parent=11 // pred_check_branch
          %346 = sbr.rel (%p344) target = $region40
        $region39: #{_lambda_.4} parent=11 // pred_region
          _
        $region40: #{_lambda_.4} parent=11 // pred_fallthru
          _
        // Predicated region
        $region41: #{_lambda_.4} parent=11 // pred_check
          %p347 = pneg %p214
        $region42: #{_lambda_.4} parent=11 // pred_check_branch
          %349 = sbr.rel (%p347) target = $region44
        $region43: #{_lambda_.4} parent=11 // pred_region
          _
        $region44: #{_lambda_.4} parent=11 // pred_fallthru
          _
        // Predicated region
        $region45: #{_lambda_.4} parent=11 // pred_check
          %p350 = pneg %p235
        $region46: #{_lambda_.4} parent=11 // pred_check_branch
          %352 = sbr.rel (%p350) target = $region48
        $region47: #{_lambda_.4} parent=11 // pred_region
          _
        $region48: #{_lambda_.4} parent=11 // pred_fallthru
          _
        // Predicated region
        $region49: #{_lambda_.4} parent=11 // pred_check
          %p353 = pneg %p256
        $region50: #{_lambda_.4} parent=11 // pred_check_branch
          %355 = sbr.rel (%p353) target = $region52
        $region51: #{_lambda_.4} parent=11 // pred_region
          _
        $region52: #{_lambda_.4} parent=11 // pred_fallthru
          _
        // Predicated region
        $region53: #{_lambda_.4} parent=11 // pred_check
          %p356 = pneg %p277
        $region54: #{_lambda_.4} parent=11 // pred_check_branch
          %358 = sbr.rel (%p356) target = $region56
        $region55: #{_lambda_.4} parent=11 // pred_region
          _
        $region56: #{_lambda_.4} parent=11 // pred_fallthru
          _
      $region12: #{_lambda_.4} parent=5 // pred_fallthru
        _
      %p359 = scmp.lt.s32.totalorder %s20, 2
      // Predicated region
      $region57: #{_lambda_.4} parent=5 // pred_check
        %p360 = pneg %p359
      $region58: #{_lambda_.4} parent=5 // pred_check_branch
        %362 = sbr.rel (%p360) target = $region60
      $region59: #{_lambda_.4} parent=5 // pred_region
        // Predicated region
        $region61: #{_lambda_.4} parent=59 // pred_check
          %p363 = pneg %p82
        $region62: #{_lambda_.4} parent=59 // pred_check_branch
          %365 = sbr.rel (%p363) target = $region64
        $region63: #{_lambda_.4} parent=59 // pred_region
          %s366 = smul.u32 8, %s20
          %p367 = scmp.lt.s32.totalorder %s366, 15
          %s368 = scalar_select %p367, %s366, 15
          %s369 = smul.addr %s368, 16
          %s370 = scalar_lea.vmem %s2, %s369
          %s371 = smul.u32 8, %s20
        $region64: #{_lambda_.4} parent=59 // pred_fallthru
          _
      $region60: #{_lambda_.4} parent=5 // pred_fallthru
        _
      %p372 = scmp.le.s32.totalorder 1, %s20
      %p373 = scmp.lt.s32.totalorder %s20, 3
      %p374 = pnand %p372, %p373
      %p375 = pneg %p374
      // Predicated region
      $region65: #{_lambda_.4} parent=5 // pred_check
        _
      $region66: #{_lambda_.4} parent=5 // pred_check_branch
        %377 = sbr.rel (%p374) target = $region68
      $region67: #{_lambda_.4} parent=5 // pred_region
        %s378 = ssub.s32 %s20, 1
        // Predicated region
        $region69: #{_lambda_.4} parent=67 // pred_check
          %p379 = pneg %p41
        $region70: #{_lambda_.4} parent=67 // pred_check_branch
          %381 = sbr.rel (%p379) target = $region72
        $region71: #{_lambda_.4} parent=67 // pred_region
          %382 = dma.done [#allocation4], 32
        $region72: #{_lambda_.4} parent=67 // pred_fallthru
          _
        %383 = sfence
        %p384 = pneg %p41
        %p385 = pneg %p38
        %p386 = pneg %p62
        %p387 = pneg %p59
        %s388 = smul.u32 8, %s25
        %p389 = scmp.lt.s32.totalorder %s388, 15
        %s390 = scalar_select %p389, %s388, 15
        %s391 = smul.addr %s390, 16
        %s392 = scalar_lea.vmem %s2, %s391
        %p393 = pneg %p88
        %p394 = pneg %p85
        %p395 = pneg %p109
        %p396 = pneg %p106
        %p397 = pneg %p130
        %p398 = pneg %p127
        %p399 = pneg %p151
        %p400 = pneg %p148
        %p401 = pneg %p172
        %p402 = pneg %p169
        %p403 = pneg %p193
        %p404 = pneg %p190
        %p405 = pneg %p214
        %p406 = pneg %p211
        %p407 = pneg %p235
        %p408 = pneg %p232
        %p409 = pneg %p256
        %p410 = pneg %p253
        %p411 = pneg %p277
        %p412 = pneg %p274
        %p413 = pneg %p303
        %p414 = pneg %p300
        %s415 = smul.u32 8, %s25
        %p416 = scmp.lt.s32.totalorder %s415, 15
        %s417 = scalar_select %p416, %s415, 15
        %s418 = smul.addr %s417, 4
        %s419 = scalar_lea.vmem %s12, %s418
        %s420 = smul.u32 8, %s25
        %p421 = scmp.lt.s32.totalorder %s420, 15
        %s422 = scalar_select %p421, %s420, 15
        %s423 = smul.addr %s422, 16
        %s424 = scalar_lea.vmem %s2, %s423
        %s425 = smul.u32 8, %s25
        %s426 = smul.u32 8, %s25
        %p427 = scmp.lt.s32.totalorder %s426, 15
        %s428 = scalar_select %p427, %s426, 15
        %s429 = smul.addr %s428, 4
        %s430 = scalar_lea.vmem %s12, %s429
        %s431 = smul.u32 8, %s25
        %v433 = vld [vmem:[%s424] sm:$0x1]
        %v434 = vld [vmem:[%s424 + $0x1] sm:$0x1]
        %v435 = vld [vmem:[%s424 + $0x2] sm:$0x1]
        %v436 = vld [vmem:[%s424 + $0x3] sm:$0x1]
        %v437 = vld [vmem:[%s424 + $0x4] sm:$0x1]
        %v438 = vld [vmem:[%s424 + $0x5] sm:$0x1]
        %v439 = vld [vmem:[%s424 + $0x6] sm:$0x1]
        %v440 = vld [vmem:[%s424 + $0x7] sm:$0x1]
        %v441 = vld [vmem:[%s424 + $0x8] sm:$0x1]
        %v442 = vld [vmem:[%s424 + $0x9] sm:$0x1]
        %v443 = vld [vmem:[%s424 + $0xa] sm:$0x1]
        %v444 = vld [vmem:[%s424 + $0xb] sm:$0x1]
        %v445 = vld [vmem:[%s424 + $0xc] sm:$0x1]
        %v446 = vld [vmem:[%s424 + $0xd] sm:$0x1]
        %v447 = vld [vmem:[%s424 + $0xe] sm:$0x1]
        %v448 = vld [vmem:[%s424 + $0xf] sm:$0x1]
        %v449 = vld [vmem:[%s424 + $0x10] sm:$0x1]
        %v450 = vld [vmem:[%s424 + $0x11] sm:$0x1]
        %v451 = vld [vmem:[%s424 + $0x12] sm:$0x1]
        %v452 = vld [vmem:[%s424 + $0x13] sm:$0x1]
        %v453 = vld [vmem:[%s424 + $0x14] sm:$0x1]
        %v454 = vld [vmem:[%s424 + $0x15] sm:$0x1]
        %v455 = vld [vmem:[%s424 + $0x16] sm:$0x1]
        %v456 = vld [vmem:[%s424 + $0x17] sm:$0x1]
        %v457 = vld [vmem:[%s424 + $0x18] sm:$0x1]
        %v458 = vld [vmem:[%s424 + $0x19] sm:$0x1]
        %v459 = vld [vmem:[%s424 + $0x1a] sm:$0x1]
        %v460 = vld [vmem:[%s424 + $0x1b] sm:$0x1]
        %v461 = vld [vmem:[%s424 + $0x1c] sm:$0x1]
        %v462 = vld [vmem:[%s424 + $0x1d] sm:$0x1]
        %v463 = vld [vmem:[%s424 + $0x1e] sm:$0x1]
        %v464 = vld [vmem:[%s424 + $0x1f] sm:$0x1]
        %v465 = vld [vmem:[%s424 + $0x20] sm:$0x1]
        %v466 = vld [vmem:[%s424 + $0x21] sm:$0x1]
        %v467 = vld [vmem:[%s424 + $0x22] sm:$0x1]
        %v468 = vld [vmem:[%s424 + $0x23] sm:$0x1]
        %v469 = vld [vmem:[%s424 + $0x24] sm:$0x1]
        %v470 = vld [vmem:[%s424 + $0x25] sm:$0x1]
        %v471 = vld [vmem:[%s424 + $0x26] sm:$0x1]
        %v472 = vld [vmem:[%s424 + $0x27] sm:$0x1]
        %v473 = vld [vmem:[%s424 + $0x28] sm:$0x1]
        %v474 = vld [vmem:[%s424 + $0x29] sm:$0x1]
        %v475 = vld [vmem:[%s424 + $0x2a] sm:$0x1]
        %v476 = vld [vmem:[%s424 + $0x2b] sm:$0x1]
        %v477 = vld [vmem:[%s424 + $0x2c] sm:$0x1]
        %v478 = vld [vmem:[%s424 + $0x2d] sm:$0x1]
        %v479 = vld [vmem:[%s424 + $0x2e] sm:$0x1]
        %v480 = vld [vmem:[%s424 + $0x2f] sm:$0x1]
        %v481 = vld [vmem:[%s424 + $0x30] sm:$0x1]
        %v482 = vld [vmem:[%s424 + $0x31] sm:$0x1]
        %v483 = vld [vmem:[%s424 + $0x32] sm:$0x1]
        %v484 = vld [vmem:[%s424 + $0x33] sm:$0x1]
        %v485 = vld [vmem:[%s424 + $0x34] sm:$0x1]
        %v486 = vld [vmem:[%s424 + $0x35] sm:$0x1]
        %v487 = vld [vmem:[%s424 + $0x36] sm:$0x1]
        %v488 = vld [vmem:[%s424 + $0x37] sm:$0x1]
        %v489 = vld [vmem:[%s424 + $0x38] sm:$0x1]
        %v490 = vld [vmem:[%s424 + $0x39] sm:$0x1]
        %v491 = vld [vmem:[%s424 + $0x3a] sm:$0x1]
        %v492 = vld [vmem:[%s424 + $0x3b] sm:$0x1]
        %v493 = vld [vmem:[%s424 + $0x3c] sm:$0x1]
        %v494 = vld [vmem:[%s424 + $0x3d] sm:$0x1]
        %v495 = vld [vmem:[%s424 + $0x3e] sm:$0x1]
        %v496 = vld [vmem:[%s424 + $0x3f] sm:$0x1]
        %v497 = vld [vmem:[%s424 + $0x40] sm:$0x1]
        %v498 = vld [vmem:[%s424 + $0x41] sm:$0x1]
        %v499 = vld [vmem:[%s424 + $0x42] sm:$0x1]
        %v500 = vld [vmem:[%s424 + $0x43] sm:$0x1]
        %v501 = vld [vmem:[%s424 + $0x44] sm:$0x1]
        %v502 = vld [vmem:[%s424 + $0x45] sm:$0x1]
        %v503 = vld [vmem:[%s424 + $0x46] sm:$0x1]
        %v504 = vld [vmem:[%s424 + $0x47] sm:$0x1]
        %v505 = vld [vmem:[%s424 + $0x48] sm:$0x1]
        %v506 = vld [vmem:[%s424 + $0x49] sm:$0x1]
        %v507 = vld [vmem:[%s424 + $0x4a] sm:$0x1]
        %v508 = vld [vmem:[%s424 + $0x4b] sm:$0x1]
        %v509 = vld [vmem:[%s424 + $0x4c] sm:$0x1]
        %v510 = vld [vmem:[%s424 + $0x4d] sm:$0x1]
        %v511 = vld [vmem:[%s424 + $0x4e] sm:$0x1]
        %v512 = vld [vmem:[%s424 + $0x4f] sm:$0x1]
        %v513 = vld [vmem:[%s424 + $0x50] sm:$0x1]
        %v514 = vld [vmem:[%s424 + $0x51] sm:$0x1]
        %v515 = vld [vmem:[%s424 + $0x52] sm:$0x1]
        %v516 = vld [vmem:[%s424 + $0x53] sm:$0x1]
        %v517 = vld [vmem:[%s424 + $0x54] sm:$0x1]
        %v518 = vld [vmem:[%s424 + $0x55] sm:$0x1]
        %v519 = vld [vmem:[%s424 + $0x56] sm:$0x1]
        %v520 = vld [vmem:[%s424 + $0x57] sm:$0x1]
        %v521 = vld [vmem:[%s424 + $0x58] sm:$0x1]
        %v522 = vld [vmem:[%s424 + $0x59] sm:$0x1]
        %v523 = vld [vmem:[%s424 + $0x5a] sm:$0x1]
        %v524 = vld [vmem:[%s424 + $0x5b] sm:$0x1]
        %v525 = vld [vmem:[%s424 + $0x5c] sm:$0x1]
        %v526 = vld [vmem:[%s424 + $0x5d] sm:$0x1]
        %v527 = vld [vmem:[%s424 + $0x5e] sm:$0x1]
        %v528 = vld [vmem:[%s424 + $0x5f] sm:$0x1]
        %v529 = vld [vmem:[%s424 + $0x60] sm:$0x1]
        %v530 = vld [vmem:[%s424 + $0x61] sm:$0x1]
        %v531 = vld [vmem:[%s424 + $0x62] sm:$0x1]
        %v532 = vld [vmem:[%s424 + $0x63] sm:$0x1]
        %v533 = vld [vmem:[%s424 + $0x64] sm:$0x1]
        %v534 = vld [vmem:[%s424 + $0x65] sm:$0x1]
        %v535 = vld [vmem:[%s424 + $0x66] sm:$0x1]
        %v536 = vld [vmem:[%s424 + $0x67] sm:$0x1]
        %v537 = vld [vmem:[%s424 + $0x68] sm:$0x1]
        %v538 = vld [vmem:[%s424 + $0x69] sm:$0x1]
        %v539 = vld [vmem:[%s424 + $0x6a] sm:$0x1]
        %v540 = vld [vmem:[%s424 + $0x6b] sm:$0x1]
        %v541 = vld [vmem:[%s424 + $0x6c] sm:$0x1]
        %v542 = vld [vmem:[%s424 + $0x6d] sm:$0x1]
        %v543 = vld [vmem:[%s424 + $0x6e] sm:$0x1]
        %v544 = vld [vmem:[%s424 + $0x6f] sm:$0x1]
        %v545 = vld [vmem:[%s424 + $0x70] sm:$0x1]
        %v546 = vld [vmem:[%s424 + $0x71] sm:$0x1]
        %v547 = vld [vmem:[%s424 + $0x72] sm:$0x1]
        %v548 = vld [vmem:[%s424 + $0x73] sm:$0x1]
        %v549 = vld [vmem:[%s424 + $0x74] sm:$0x1]
        %v550 = vld [vmem:[%s424 + $0x75] sm:$0x1]
        %v551 = vld [vmem:[%s424 + $0x76] sm:$0x1]
        %v552 = vld [vmem:[%s424 + $0x77] sm:$0x1]
        %v553 = vld [vmem:[%s424 + $0x78] sm:$0x1]
        %v554 = vld [vmem:[%s424 + $0x79] sm:$0x1]
        %v555 = vld [vmem:[%s424 + $0x7a] sm:$0x1]
        %v556 = vld [vmem:[%s424 + $0x7b] sm:$0x1]
        %v557 = vld [vmem:[%s424 + $0x7c] sm:$0x1]
        %v558 = vld [vmem:[%s424 + $0x7d] sm:$0x1]
        %v559 = vld [vmem:[%s424 + $0x7e] sm:$0x1]
        %v560 = vld [vmem:[%s424 + $0x7f] sm:$0x1]
        %v561 = vunpack.c.l.bf16 %v433
        %v562 = vunpack.c.l.bf16 %v434
        %v563 = vunpack.c.l.bf16 %v435
        %v564 = vunpack.c.l.bf16 %v436
        %v565 = vunpack.c.l.bf16 %v437
        %v566 = vunpack.c.l.bf16 %v438
        %v567 = vunpack.c.l.bf16 %v439
        %v568 = vunpack.c.l.bf16 %v440
        %v569 = vunpack.c.l.bf16 %v441
        %v570 = vunpack.c.l.bf16 %v442
        %v571 = vunpack.c.l.bf16 %v443
        %v572 = vunpack.c.l.bf16 %v444
        %v573 = vunpack.c.l.bf16 %v445
        %v574 = vunpack.c.l.bf16 %v446
        %v575 = vunpack.c.l.bf16 %v447
        %v576 = vunpack.c.l.bf16 %v448
        %v577 = vunpack.c.l.bf16 %v449
        %v578 = vunpack.c.l.bf16 %v450
        %v579 = vunpack.c.l.bf16 %v451
        %v580 = vunpack.c.l.bf16 %v452
        %v581 = vunpack.c.l.bf16 %v453
        %v582 = vunpack.c.l.bf16 %v454
        %v583 = vunpack.c.l.bf16 %v455
        %v584 = vunpack.c.l.bf16 %v456
        %v585 = vunpack.c.l.bf16 %v457
        %v586 = vunpack.c.l.bf16 %v458
        %v587 = vunpack.c.l.bf16 %v459
        %v588 = vunpack.c.l.bf16 %v460
        %v589 = vunpack.c.l.bf16 %v461
        %v590 = vunpack.c.l.bf16 %v462
        %v591 = vunpack.c.l.bf16 %v463
        %v592 = vunpack.c.l.bf16 %v464
        %v593 = vunpack.c.l.bf16 %v465
        %v594 = vunpack.c.l.bf16 %v466
        %v595 = vunpack.c.l.bf16 %v467
        %v596 = vunpack.c.l.bf16 %v468
        %v597 = vunpack.c.l.bf16 %v469
        %v598 = vunpack.c.l.bf16 %v470
        %v599 = vunpack.c.l.bf16 %v471
        %v600 = vunpack.c.l.bf16 %v472
        %v601 = vunpack.c.l.bf16 %v473
        %v602 = vunpack.c.l.bf16 %v474
        %v603 = vunpack.c.l.bf16 %v475
        %v604 = vunpack.c.l.bf16 %v476
        %v605 = vunpack.c.l.bf16 %v477
        %v606 = vunpack.c.l.bf16 %v478
        %v607 = vunpack.c.l.bf16 %v479
        %v608 = vunpack.c.l.bf16 %v480
        %v609 = vunpack.c.l.bf16 %v481
        %v610 = vunpack.c.l.bf16 %v482
        %v611 = vunpack.c.l.bf16 %v483
        %v612 = vunpack.c.l.bf16 %v484
        %v613 = vunpack.c.l.bf16 %v485
        %v614 = vunpack.c.l.bf16 %v486
        %v615 = vunpack.c.l.bf16 %v487
        %v616 = vunpack.c.l.bf16 %v488
        %v617 = vunpack.c.l.bf16 %v489
        %v618 = vunpack.c.l.bf16 %v490
        %v619 = vunpack.c.l.bf16 %v491
        %v620 = vunpack.c.l.bf16 %v492
        %v621 = vunpack.c.l.bf16 %v493
        %v622 = vunpack.c.l.bf16 %v494
        %v623 = vunpack.c.l.bf16 %v495
        %v624 = vunpack.c.l.bf16 %v496
        %v625 = vunpack.c.l.bf16 %v497
        %v626 = vunpack.c.l.bf16 %v498
        %v627 = vunpack.c.l.bf16 %v499
        %v628 = vunpack.c.l.bf16 %v500
        %v629 = vunpack.c.l.bf16 %v501
        %v630 = vunpack.c.l.bf16 %v502
        %v631 = vunpack.c.l.bf16 %v503
        %v632 = vunpack.c.l.bf16 %v504
        %v633 = vunpack.c.l.bf16 %v505
        %v634 = vunpack.c.l.bf16 %v506
        %v635 = vunpack.c.l.bf16 %v507
        %v636 = vunpack.c.l.bf16 %v508
        %v637 = vunpack.c.l.bf16 %v509
        %v638 = vunpack.c.l.bf16 %v510
        %v639 = vunpack.c.l.bf16 %v511
        %v640 = vunpack.c.l.bf16 %v512
        %v641 = vunpack.c.l.bf16 %v513
        %v642 = vunpack.c.l.bf16 %v514
        %v643 = vunpack.c.l.bf16 %v515
        %v644 = vunpack.c.l.bf16 %v516
        %v645 = vunpack.c.l.bf16 %v517
        %v646 = vunpack.c.l.bf16 %v518
        %v647 = vunpack.c.l.bf16 %v519
        %v648 = vunpack.c.l.bf16 %v520
        %v649 = vunpack.c.l.bf16 %v521
        %v650 = vunpack.c.l.bf16 %v522
        %v651 = vunpack.c.l.bf16 %v523
        %v652 = vunpack.c.l.bf16 %v524
        %v653 = vunpack.c.l.bf16 %v525
        %v654 = vunpack.c.l.bf16 %v526
        %v655 = vunpack.c.l.bf16 %v527
        %v656 = vunpack.c.l.bf16 %v528
        %v657 = vunpack.c.l.bf16 %v529
        %v658 = vunpack.c.l.bf16 %v530
        %v659 = vunpack.c.l.bf16 %v531
        %v660 = vunpack.c.l.bf16 %v532
        %v661 = vunpack.c.l.bf16 %v533
        %v662 = vunpack.c.l.bf16 %v534
        %v663 = vunpack.c.l.bf16 %v535
        %v664 = vunpack.c.l.bf16 %v536
        %v665 = vunpack.c.l.bf16 %v537
        %v666 = vunpack.c.l.bf16 %v538
        %v667 = vunpack.c.l.bf16 %v539
        %v668 = vunpack.c.l.bf16 %v540
        %v669 = vunpack.c.l.bf16 %v541
        %v670 = vunpack.c.l.bf16 %v542
        %v671 = vunpack.c.l.bf16 %v543
        %v672 = vunpack.c.l.bf16 %v544
        %v673 = vunpack.c.l.bf16 %v545
        %v674 = vunpack.c.l.bf16 %v546
        %v675 = vunpack.c.l.bf16 %v547
        %v676 = vunpack.c.l.bf16 %v548
        %v677 = vunpack.c.l.bf16 %v549
        %v678 = vunpack.c.l.bf16 %v550
        %v679 = vunpack.c.l.bf16 %v551
        %v680 = vunpack.c.l.bf16 %v552
        %v681 = vunpack.c.l.bf16 %v553
        %v682 = vunpack.c.l.bf16 %v554
        %v683 = vunpack.c.l.bf16 %v555
        %v684 = vunpack.c.l.bf16 %v556
        %v685 = vunpack.c.l.bf16 %v557
        %v686 = vunpack.c.l.bf16 %v558
        %v687 = vunpack.c.l.bf16 %v559
        %v688 = vunpack.c.l.bf16 %v560
        %v689 = vmax.f32 %v561, 0.0
        %v690 = vmax.f32 %v562, 0.0
        %v691 = vmax.f32 %v563, 0.0
        %v692 = vmax.f32 %v564, 0.0
        %v693 = vmax.f32 %v565, 0.0
        %v694 = vmax.f32 %v566, 0.0
        %v695 = vmax.f32 %v567, 0.0
        %v696 = vmax.f32 %v568, 0.0
        %v697 = vmax.f32 %v569, 0.0
        %v698 = vmax.f32 %v570, 0.0
        %v699 = vmax.f32 %v571, 0.0
        %v700 = vmax.f32 %v572, 0.0
        %v701 = vmax.f32 %v573, 0.0
        %v702 = vmax.f32 %v574, 0.0
        %v703 = vmax.f32 %v575, 0.0
        %v704 = vmax.f32 %v576, 0.0
        %v705 = vmax.f32 %v577, 0.0
        %v706 = vmax.f32 %v578, 0.0
        %v707 = vmax.f32 %v579, 0.0
        %v708 = vmax.f32 %v580, 0.0
        %v709 = vmax.f32 %v581, 0.0
        %v710 = vmax.f32 %v582, 0.0
        %v711 = vmax.f32 %v583, 0.0
        %v712 = vmax.f32 %v584, 0.0
        %v713 = vmax.f32 %v585, 0.0
        %v714 = vmax.f32 %v586, 0.0
        %v715 = vmax.f32 %v587, 0.0
        %v716 = vmax.f32 %v588, 0.0
        %v717 = vmax.f32 %v589, 0.0
        %v718 = vmax.f32 %v590, 0.0
        %v719 = vmax.f32 %v591, 0.0
        %v720 = vmax.f32 %v592, 0.0
        %v721 = vmax.f32 %v593, 0.0
        %v722 = vmax.f32 %v594, 0.0
        %v723 = vmax.f32 %v595, 0.0
        %v724 = vmax.f32 %v596, 0.0
        %v725 = vmax.f32 %v597, 0.0
        %v726 = vmax.f32 %v598, 0.0
        %v727 = vmax.f32 %v599, 0.0
        %v728 = vmax.f32 %v600, 0.0
        %v729 = vmax.f32 %v601, 0.0
        %v730 = vmax.f32 %v602, 0.0
        %v731 = vmax.f32 %v603, 0.0
        %v732 = vmax.f32 %v604, 0.0
        %v733 = vmax.f32 %v605, 0.0
        %v734 = vmax.f32 %v606, 0.0
        %v735 = vmax.f32 %v607, 0.0
        %v736 = vmax.f32 %v608, 0.0
        %v737 = vmax.f32 %v609, 0.0
        %v738 = vmax.f32 %v610, 0.0
        %v739 = vmax.f32 %v611, 0.0
        %v740 = vmax.f32 %v612, 0.0
        %v741 = vmax.f32 %v613, 0.0
        %v742 = vmax.f32 %v614, 0.0
        %v743 = vmax.f32 %v615, 0.0
        %v744 = vmax.f32 %v616, 0.0
        %v745 = vmax.f32 %v617, 0.0
        %v746 = vmax.f32 %v618, 0.0
        %v747 = vmax.f32 %v619, 0.0
        %v748 = vmax.f32 %v620, 0.0
        %v749 = vmax.f32 %v621, 0.0
        %v750 = vmax.f32 %v622, 0.0
        %v751 = vmax.f32 %v623, 0.0
        %v752 = vmax.f32 %v624, 0.0
        %v753 = vmax.f32 %v625, 0.0
        %v754 = vmax.f32 %v626, 0.0
        %v755 = vmax.f32 %v627, 0.0
        %v756 = vmax.f32 %v628, 0.0
        %v757 = vmax.f32 %v629, 0.0
        %v758 = vmax.f32 %v630, 0.0
        %v759 = vmax.f32 %v631, 0.0
        %v760 = vmax.f32 %v632, 0.0
        %v761 = vmax.f32 %v633, 0.0
        %v762 = vmax.f32 %v634, 0.0
        %v763 = vmax.f32 %v635, 0.0
        %v764 = vmax.f32 %v636, 0.0
        %v765 = vmax.f32 %v637, 0.0
        %v766 = vmax.f32 %v638, 0.0
        %v767 = vmax.f32 %v639, 0.0
        %v768 = vmax.f32 %v640, 0.0
        %v769 = vmax.f32 %v641, 0.0
        %v770 = vmax.f32 %v642, 0.0
        %v771 = vmax.f32 %v643, 0.0
        %v772 = vmax.f32 %v644, 0.0
        %v773 = vmax.f32 %v645, 0.0
        %v774 = vmax.f32 %v646, 0.0
        %v775 = vmax.f32 %v647, 0.0
        %v776 = vmax.f32 %v648, 0.0
        %v777 = vmax.f32 %v649, 0.0
        %v778 = vmax.f32 %v650, 0.0
        %v779 = vmax.f32 %v651, 0.0
        %v780 = vmax.f32 %v652, 0.0
        %v781 = vmax.f32 %v653, 0.0
        %v782 = vmax.f32 %v654, 0.0
        %v783 = vmax.f32 %v655, 0.0
        %v784 = vmax.f32 %v656, 0.0
        %v785 = vmax.f32 %v657, 0.0
        %v786 = vmax.f32 %v658, 0.0
        %v787 = vmax.f32 %v659, 0.0
        %v788 = vmax.f32 %v660, 0.0
        %v789 = vmax.f32 %v661, 0.0
        %v790 = vmax.f32 %v662, 0.0
        %v791 = vmax.f32 %v663, 0.0
        %v792 = vmax.f32 %v664, 0.0
        %v793 = vmax.f32 %v665, 0.0
        %v794 = vmax.f32 %v666, 0.0
        %v795 = vmax.f32 %v667, 0.0
        %v796 = vmax.f32 %v668, 0.0
        %v797 = vmax.f32 %v669, 0.0
        %v798 = vmax.f32 %v670, 0.0
        %v799 = vmax.f32 %v671, 0.0
        %v800 = vmax.f32 %v672, 0.0
        %v801 = vmax.f32 %v673, 0.0
        %v802 = vmax.f32 %v674, 0.0
        %v803 = vmax.f32 %v675, 0.0
        %v804 = vmax.f32 %v676, 0.0
        %v805 = vmax.f32 %v677, 0.0
        %v806 = vmax.f32 %v678, 0.0
        %v807 = vmax.f32 %v679, 0.0
        %v808 = vmax.f32 %v680, 0.0
        %v809 = vmax.f32 %v681, 0.0
        %v810 = vmax.f32 %v682, 0.0
        %v811 = vmax.f32 %v683, 0.0
        %v812 = vmax.f32 %v684, 0.0
        %v813 = vmax.f32 %v685, 0.0
        %v814 = vmax.f32 %v686, 0.0
        %v815 = vmax.f32 %v687, 0.0
        %v816 = vmax.f32 %v688, 0.0
        %v881 = vrot.slane %v689, 7
        %v882 = vrot.slane %v881, 2
        %v883 = vrot.slane %v690, 7
        %v884 = vrot.slane %v883, 2
        %v885 = vrot.slane %v691, 7
        %v886 = vrot.slane %v885, 2
        %v887 = vrot.slane %v692, 7
        %v888 = vrot.slane %v887, 2
        %v889 = vrot.slane %v693, 7
        %v890 = vrot.slane %v889, 2
        %v891 = vrot.slane %v694, 7
        %v892 = vrot.slane %v891, 2
        %v893 = vrot.slane %v695, 7
        %v894 = vrot.slane %v893, 2
        %v895 = vrot.slane %v696, 7
        %v896 = vrot.slane %v895, 2
        %v897 = vrot.slane %v705, 7
        %v898 = vrot.slane %v897, 2
        %v899 = vrot.slane %v706, 7
        %v900 = vrot.slane %v899, 2
        %v901 = vrot.slane %v707, 7
        %v902 = vrot.slane %v901, 2
        %v903 = vrot.slane %v708, 7
        %v904 = vrot.slane %v903, 2
        %v905 = vrot.slane %v709, 7
        %v906 = vrot.slane %v905, 2
        %v907 = vrot.slane %v710, 7
        %v908 = vrot.slane %v907, 2
        %v909 = vrot.slane %v711, 7
        %v910 = vrot.slane %v909, 2
        %v911 = vrot.slane %v712, 7
        %v912 = vrot.slane %v911, 2
        %v913 = vrot.slane %v721, 7
        %v914 = vrot.slane %v913, 2
        %v915 = vrot.slane %v722, 7
        %v916 = vrot.slane %v915, 2
        %v917 = vrot.slane %v723, 7
        %v918 = vrot.slane %v917, 2
        %v919 = vrot.slane %v724, 7
        %v920 = vrot.slane %v919, 2
        %v921 = vrot.slane %v725, 7
        %v922 = vrot.slane %v921, 2
        %v923 = vrot.slane %v726, 7
        %v924 = vrot.slane %v923, 2
        %v925 = vrot.slane %v727, 7
        %v926 = vrot.slane %v925, 2
        %v927 = vrot.slane %v728, 7
        %v928 = vrot.slane %v927, 2
        %v929 = vrot.slane %v737, 7
        %v930 = vrot.slane %v929, 2
        %v931 = vrot.slane %v738, 7
        %v932 = vrot.slane %v931, 2
        %v933 = vrot.slane %v739, 7
        %v934 = vrot.slane %v933, 2
        %v935 = vrot.slane %v740, 7
        %v936 = vrot.slane %v935, 2
        %v937 = vrot.slane %v741, 7
        %v938 = vrot.slane %v937, 2
        %v939 = vrot.slane %v742, 7
        %v940 = vrot.slane %v939, 2
        %v941 = vrot.slane %v743, 7
        %v942 = vrot.slane %v941, 2
        %v943 = vrot.slane %v744, 7
        %v944 = vrot.slane %v943, 2
        %v945 = vrot.slane %v753, 7
        %v946 = vrot.slane %v945, 2
        %v947 = vrot.slane %v754, 7
        %v948 = vrot.slane %v947, 2
        %v949 = vrot.slane %v755, 7
        %v950 = vrot.slane %v949, 2
        %v951 = vrot.slane %v756, 7
        %v952 = vrot.slane %v951, 2
        %v953 = vrot.slane %v757, 7
        %v954 = vrot.slane %v953, 2
        %v955 = vrot.slane %v758, 7
        %v956 = vrot.slane %v955, 2
        %v957 = vrot.slane %v759, 7
        %v958 = vrot.slane %v957, 2
        %v959 = vrot.slane %v760, 7
        %v960 = vrot.slane %v959, 2
        %v961 = vrot.slane %v769, 7
        %v962 = vrot.slane %v961, 2
        %v963 = vrot.slane %v770, 7
        %v964 = vrot.slane %v963, 2
        %v965 = vrot.slane %v771, 7
        %v966 = vrot.slane %v965, 2
        %v967 = vrot.slane %v772, 7
        %v968 = vrot.slane %v967, 2
        %v969 = vrot.slane %v773, 7
        %v970 = vrot.slane %v969, 2
        %v971 = vrot.slane %v774, 7
        %v972 = vrot.slane %v971, 2
        %v973 = vrot.slane %v775, 7
        %v974 = vrot.slane %v973, 2
        %v975 = vrot.slane %v776, 7
        %v976 = vrot.slane %v975, 2
        %v977 = vrot.slane %v785, 7
        %v978 = vrot.slane %v977, 2
        %v979 = vrot.slane %v786, 7
        %v980 = vrot.slane %v979, 2
        %v981 = vrot.slane %v787, 7
        %v982 = vrot.slane %v981, 2
        %v983 = vrot.slane %v788, 7
        %v984 = vrot.slane %v983, 2
        %v985 = vrot.slane %v789, 7
        %v986 = vrot.slane %v985, 2
        %v987 = vrot.slane %v790, 7
        %v988 = vrot.slane %v987, 2
        %v989 = vrot.slane %v791, 7
        %v990 = vrot.slane %v989, 2
        %v991 = vrot.slane %v792, 7
        %v992 = vrot.slane %v991, 2
        %v993 = vrot.slane %v801, 7
        %v994 = vrot.slane %v993, 2
        %v995 = vrot.slane %v802, 7
        %v996 = vrot.slane %v995, 2
        %v997 = vrot.slane %v803, 7
        %v998 = vrot.slane %v997, 2
        %v999 = vrot.slane %v804, 7
        %v1000 = vrot.slane %v999, 2
        %v1001 = vrot.slane %v805, 7
        %v1002 = vrot.slane %v1001, 2
        %v1003 = vrot.slane %v806, 7
        %v1004 = vrot.slane %v1003, 2
        %v1005 = vrot.slane %v807, 7
        %v1006 = vrot.slane %v1005, 2
        %v1007 = vrot.slane %v808, 7
        %v1008 = vrot.slane %v1007, 2
        %v1073 = vadd.f32 %v689, %v882
        %v1074 = vadd.f32 %v690, %v884
        %v1075 = vadd.f32 %v691, %v886
        %v1076 = vadd.f32 %v692, %v888
        %v1077 = vadd.f32 %v693, %v890
        %v1078 = vadd.f32 %v694, %v892
        %v1079 = vadd.f32 %v695, %v894
        %v1080 = vadd.f32 %v696, %v896
        %v1081 = vadd.f32 %v705, %v898
        %v1082 = vadd.f32 %v706, %v900
        %v1083 = vadd.f32 %v707, %v902
        %v1084 = vadd.f32 %v708, %v904
        %v1085 = vadd.f32 %v709, %v906
        %v1086 = vadd.f32 %v710, %v908
        %v1087 = vadd.f32 %v711, %v910
        %v1088 = vadd.f32 %v712, %v912
        %v1089 = vadd.f32 %v721, %v914
        %v1090 = vadd.f32 %v722, %v916
        %v1091 = vadd.f32 %v723, %v918
        %v1092 = vadd.f32 %v724, %v920
        %v1093 = vadd.f32 %v725, %v922
        %v1094 = vadd.f32 %v726, %v924
        %v1095 = vadd.f32 %v727, %v926
        %v1096 = vadd.f32 %v728, %v928
        %v1097 = vadd.f32 %v737, %v930
        %v1098 = vadd.f32 %v738, %v932
        %v1099 = vadd.f32 %v739, %v934
        %v1100 = vadd.f32 %v740, %v936
        %v1101 = vadd.f32 %v741, %v938
        %v1102 = vadd.f32 %v742, %v940
        %v1103 = vadd.f32 %v743, %v942
        %v1104 = vadd.f32 %v744, %v944
        %v1105 = vadd.f32 %v753, %v946
        %v1106 = vadd.f32 %v754, %v948
        %v1107 = vadd.f32 %v755, %v950
        %v1108 = vadd.f32 %v756, %v952
        %v1109 = vadd.f32 %v757, %v954
        %v1110 = vadd.f32 %v758, %v956
        %v1111 = vadd.f32 %v759, %v958
        %v1112 = vadd.f32 %v760, %v960
        %v1113 = vadd.f32 %v769, %v962
        %v1114 = vadd.f32 %v770, %v964
        %v1115 = vadd.f32 %v771, %v966
        %v1116 = vadd.f32 %v772, %v968
        %v1117 = vadd.f32 %v773, %v970
        %v1118 = vadd.f32 %v774, %v972
        %v1119 = vadd.f32 %v775, %v974
        %v1120 = vadd.f32 %v776, %v976
        %v1121 = vadd.f32 %v785, %v978
        %v1122 = vadd.f32 %v786, %v980
        %v1123 = vadd.f32 %v787, %v982
        %v1124 = vadd.f32 %v788, %v984
        %v1125 = vadd.f32 %v789, %v986
        %v1126 = vadd.f32 %v790, %v988
        %v1127 = vadd.f32 %v791, %v990
        %v1128 = vadd.f32 %v792, %v992
        %v1129 = vadd.f32 %v801, %v994
        %v1130 = vadd.f32 %v802, %v996
        %v1131 = vadd.f32 %v803, %v998
        %v1132 = vadd.f32 %v804, %v1000
        %v1133 = vadd.f32 %v805, %v1002
        %v1134 = vadd.f32 %v806, %v1004
        %v1135 = vadd.f32 %v807, %v1006
        %v1136 = vadd.f32 %v808, %v1008
        %v1137 = vadd.f32 %v1073, %v697
        %v1138 = vadd.f32 %v1074, %v698
        %v1139 = vadd.f32 %v1075, %v699
        %v1140 = vadd.f32 %v1076, %v700
        %v1141 = vadd.f32 %v1077, %v701
        %v1142 = vadd.f32 %v1078, %v702
        %v1143 = vadd.f32 %v1079, %v703
        %v1144 = vadd.f32 %v1080, %v704
        %v1145 = vadd.f32 %v1081, %v713
        %v1146 = vadd.f32 %v1082, %v714
        %v1147 = vadd.f32 %v1083, %v715
        %v1148 = vadd.f32 %v1084, %v716
        %v1149 = vadd.f32 %v1085, %v717
        %v1150 = vadd.f32 %v1086, %v718
        %v1151 = vadd.f32 %v1087, %v719
        %v1152 = vadd.f32 %v1088, %v720
        %v1153 = vadd.f32 %v1089, %v729
        %v1154 = vadd.f32 %v1090, %v730
        %v1155 = vadd.f32 %v1091, %v731
        %v1156 = vadd.f32 %v1092, %v732
        %v1157 = vadd.f32 %v1093, %v733
        %v1158 = vadd.f32 %v1094, %v734
        %v1159 = vadd.f32 %v1095, %v735
        %v1160 = vadd.f32 %v1096, %v736
        %v1161 = vadd.f32 %v1097, %v745
        %v1162 = vadd.f32 %v1098, %v746
        %v1163 = vadd.f32 %v1099, %v747
        %v1164 = vadd.f32 %v1100, %v748
        %v1165 = vadd.f32 %v1101, %v749
        %v1166 = vadd.f32 %v1102, %v750
        %v1167 = vadd.f32 %v1103, %v751
        %v1168 = vadd.f32 %v1104, %v752
        %v1169 = vadd.f32 %v1105, %v761
        %v1170 = vadd.f32 %v1106, %v762
        %v1171 = vadd.f32 %v1107, %v763
        %v1172 = vadd.f32 %v1108, %v764
        %v1173 = vadd.f32 %v1109, %v765
        %v1174 = vadd.f32 %v1110, %v766
        %v1175 = vadd.f32 %v1111, %v767
        %v1176 = vadd.f32 %v1112, %v768
        %v1177 = vadd.f32 %v1113, %v777
        %v1178 = vadd.f32 %v1114, %v778
        %v1179 = vadd.f32 %v1115, %v779
        %v1180 = vadd.f32 %v1116, %v780
        %v1181 = vadd.f32 %v1117, %v781
        %v1182 = vadd.f32 %v1118, %v782
        %v1183 = vadd.f32 %v1119, %v783
        %v1184 = vadd.f32 %v1120, %v784
        %v1185 = vadd.f32 %v1121, %v793
        %v1186 = vadd.f32 %v1122, %v794
        %v1187 = vadd.f32 %v1123, %v795
        %v1188 = vadd.f32 %v1124, %v796
        %v1189 = vadd.f32 %v1125, %v797
        %v1190 = vadd.f32 %v1126, %v798
        %v1191 = vadd.f32 %v1127, %v799
        %v1192 = vadd.f32 %v1128, %v800
        %v1193 = vadd.f32 %v1129, %v809
        %v1194 = vadd.f32 %v1130, %v810
        %v1195 = vadd.f32 %v1131, %v811
        %v1196 = vadd.f32 %v1132, %v812
        %v1197 = vadd.f32 %v1133, %v813
        %v1198 = vadd.f32 %v1134, %v814
        %v1199 = vadd.f32 %v1135, %v815
        %v1200 = vadd.f32 %v1136, %v816
        %v1265 = vrot.slane %v697, 7
        %v1266 = vrot.slane %v1265, 2
        %v1267 = vrot.slane %v698, 7
        %v1268 = vrot.slane %v1267, 2
        %v1269 = vrot.slane %v699, 7
        %v1270 = vrot.slane %v1269, 2
        %v1271 = vrot.slane %v700, 7
        %v1272 = vrot.slane %v1271, 2
        %v1273 = vrot.slane %v701, 7
        %v1274 = vrot.slane %v1273, 2
        %v1275 = vrot.slane %v702, 7
        %v1276 = vrot.slane %v1275, 2
        %v1277 = vrot.slane %v703, 7
        %v1278 = vrot.slane %v1277, 2
        %v1279 = vrot.slane %v704, 7
        %v1280 = vrot.slane %v1279, 2
        %v1281 = vrot.slane %v713, 7
        %v1282 = vrot.slane %v1281, 2
        %v1283 = vrot.slane %v714, 7
        %v1284 = vrot.slane %v1283, 2
        %v1285 = vrot.slane %v715, 7
        %v1286 = vrot.slane %v1285, 2
        %v1287 = vrot.slane %v716, 7
        %v1288 = vrot.slane %v1287, 2
        %v1289 = vrot.slane %v717, 7
        %v1290 = vrot.slane %v1289, 2
        %v1291 = vrot.slane %v718, 7
        %v1292 = vrot.slane %v1291, 2
        %v1293 = vrot.slane %v719, 7
        %v1294 = vrot.slane %v1293, 2
        %v1295 = vrot.slane %v720, 7
        %v1296 = vrot.slane %v1295, 2
        %v1297 = vrot.slane %v729, 7
        %v1298 = vrot.slane %v1297, 2
        %v1299 = vrot.slane %v730, 7
        %v1300 = vrot.slane %v1299, 2
        %v1301 = vrot.slane %v731, 7
        %v1302 = vrot.slane %v1301, 2
        %v1303 = vrot.slane %v732, 7
        %v1304 = vrot.slane %v1303, 2
        %v1305 = vrot.slane %v733, 7
        %v1306 = vrot.slane %v1305, 2
        %v1307 = vrot.slane %v734, 7
        %v1308 = vrot.slane %v1307, 2
        %v1309 = vrot.slane %v735, 7
        %v1310 = vrot.slane %v1309, 2
        %v1311 = vrot.slane %v736, 7
        %v1312 = vrot.slane %v1311, 2
        %v1313 = vrot.slane %v745, 7
        %v1314 = vrot.slane %v1313, 2
        %v1315 = vrot.slane %v746, 7
        %v1316 = vrot.slane %v1315, 2
        %v1317 = vrot.slane %v747, 7
        %v1318 = vrot.slane %v1317, 2
        %v1319 = vrot.slane %v748, 7
        %v1320 = vrot.slane %v1319, 2
        %v1321 = vrot.slane %v749, 7
        %v1322 = vrot.slane %v1321, 2
        %v1323 = vrot.slane %v750, 7
        %v1324 = vrot.slane %v1323, 2
        %v1325 = vrot.slane %v751, 7
        %v1326 = vrot.slane %v1325, 2
        %v1327 = vrot.slane %v752, 7
        %v1328 = vrot.slane %v1327, 2
        %v1329 = vrot.slane %v761, 7
        %v1330 = vrot.slane %v1329, 2
        %v1331 = vrot.slane %v762, 7
        %v1332 = vrot.slane %v1331, 2
        %v1333 = vrot.slane %v763, 7
        %v1334 = vrot.slane %v1333, 2
        %v1335 = vrot.slane %v764, 7
        %v1336 = vrot.slane %v1335, 2
        %v1337 = vrot.slane %v765, 7
        %v1338 = vrot.slane %v1337, 2
        %v1339 = vrot.slane %v766, 7
        %v1340 = vrot.slane %v1339, 2
        %v1341 = vrot.slane %v767, 7
        %v1342 = vrot.slane %v1341, 2
        %v1343 = vrot.slane %v768, 7
        %v1344 = vrot.slane %v1343, 2
        %v1345 = vrot.slane %v777, 7
        %v1346 = vrot.slane %v1345, 2
        %v1347 = vrot.slane %v778, 7
        %v1348 = vrot.slane %v1347, 2
        %v1349 = vrot.slane %v779, 7
        %v1350 = vrot.slane %v1349, 2
        %v1351 = vrot.slane %v780, 7
        %v1352 = vrot.slane %v1351, 2
        %v1353 = vrot.slane %v781, 7
        %v1354 = vrot.slane %v1353, 2
        %v1355 = vrot.slane %v782, 7
        %v1356 = vrot.slane %v1355, 2
        %v1357 = vrot.slane %v783, 7
        %v1358 = vrot.slane %v1357, 2
        %v1359 = vrot.slane %v784, 7
        %v1360 = vrot.slane %v1359, 2
        %v1361 = vrot.slane %v793, 7
        %v1362 = vrot.slane %v1361, 2
        %v1363 = vrot.slane %v794, 7
        %v1364 = vrot.slane %v1363, 2
        %v1365 = vrot.slane %v795, 7
        %v1366 = vrot.slane %v1365, 2
        %v1367 = vrot.slane %v796, 7
        %v1368 = vrot.slane %v1367, 2
        %v1369 = vrot.slane %v797, 7
        %v1370 = vrot.slane %v1369, 2
        %v1371 = vrot.slane %v798, 7
        %v1372 = vrot.slane %v1371, 2
        %v1373 = vrot.slane %v799, 7
        %v1374 = vrot.slane %v1373, 2
        %v1375 = vrot.slane %v800, 7
        %v1376 = vrot.slane %v1375, 2
        %v1377 = vrot.slane %v809, 7
        %v1378 = vrot.slane %v1377, 2
        %v1379 = vrot.slane %v810, 7
        %v1380 = vrot.slane %v1379, 2
        %v1381 = vrot.slane %v811, 7
        %v1382 = vrot.slane %v1381, 2
        %v1383 = vrot.slane %v812, 7
        %v1384 = vrot.slane %v1383, 2
        %v1385 = vrot.slane %v813, 7
        %v1386 = vrot.slane %v1385, 2
        %v1387 = vrot.slane %v814, 7
        %v1388 = vrot.slane %v1387, 2
        %v1389 = vrot.slane %v815, 7
        %v1390 = vrot.slane %v1389, 2
        %v1391 = vrot.slane %v816, 7
        %v1392 = vrot.slane %v1391, 2
        %v1457 = vadd.f32 %v1137, %v1266
        %v1458 = vadd.f32 %v1138, %v1268
        %v1459 = vadd.f32 %v1139, %v1270
        %v1460 = vadd.f32 %v1140, %v1272
        %v1461 = vadd.f32 %v1141, %v1274
        %v1462 = vadd.f32 %v1142, %v1276
        %v1463 = vadd.f32 %v1143, %v1278
        %v1464 = vadd.f32 %v1144, %v1280
        %v1465 = vadd.f32 %v1145, %v1282
        %v1466 = vadd.f32 %v1146, %v1284
        %v1467 = vadd.f32 %v1147, %v1286
        %v1468 = vadd.f32 %v1148, %v1288
        %v1469 = vadd.f32 %v1149, %v1290
        %v1470 = vadd.f32 %v1150, %v1292
        %v1471 = vadd.f32 %v1151, %v1294
        %v1472 = vadd.f32 %v1152, %v1296
        %v1473 = vadd.f32 %v1153, %v1298
        %v1474 = vadd.f32 %v1154, %v1300
        %v1475 = vadd.f32 %v1155, %v1302
        %v1476 = vadd.f32 %v1156, %v1304
        %v1477 = vadd.f32 %v1157, %v1306
        %v1478 = vadd.f32 %v1158, %v1308
        %v1479 = vadd.f32 %v1159, %v1310
        %v1480 = vadd.f32 %v1160, %v1312
        %v1481 = vadd.f32 %v1161, %v1314
        %v1482 = vadd.f32 %v1162, %v1316
        %v1483 = vadd.f32 %v1163, %v1318
        %v1484 = vadd.f32 %v1164, %v1320
        %v1485 = vadd.f32 %v1165, %v1322
        %v1486 = vadd.f32 %v1166, %v1324
        %v1487 = vadd.f32 %v1167, %v1326
        %v1488 = vadd.f32 %v1168, %v1328
        %v1489 = vadd.f32 %v1169, %v1330
        %v1490 = vadd.f32 %v1170, %v1332
        %v1491 = vadd.f32 %v1171, %v1334
        %v1492 = vadd.f32 %v1172, %v1336
        %v1493 = vadd.f32 %v1173, %v1338
        %v1494 = vadd.f32 %v1174, %v1340
        %v1495 = vadd.f32 %v1175, %v1342
        %v1496 = vadd.f32 %v1176, %v1344
        %v1497 = vadd.f32 %v1177, %v1346
        %v1498 = vadd.f32 %v1178, %v1348
        %v1499 = vadd.f32 %v1179, %v1350
        %v1500 = vadd.f32 %v1180, %v1352
        %v1501 = vadd.f32 %v1181, %v1354
        %v1502 = vadd.f32 %v1182, %v1356
        %v1503 = vadd.f32 %v1183, %v1358
        %v1504 = vadd.f32 %v1184, %v1360
        %v1505 = vadd.f32 %v1185, %v1362
        %v1506 = vadd.f32 %v1186, %v1364
        %v1507 = vadd.f32 %v1187, %v1366
        %v1508 = vadd.f32 %v1188, %v1368
        %v1509 = vadd.f32 %v1189, %v1370
        %v1510 = vadd.f32 %v1190, %v1372
        %v1511 = vadd.f32 %v1191, %v1374
        %v1512 = vadd.f32 %v1192, %v1376
        %v1513 = vadd.f32 %v1193, %v1378
        %v1514 = vadd.f32 %v1194, %v1380
        %v1515 = vadd.f32 %v1195, %v1382
        %v1516 = vadd.f32 %v1196, %v1384
        %v1517 = vadd.f32 %v1197, %v1386
        %v1518 = vadd.f32 %v1198, %v1388
        %v1519 = vadd.f32 %v1199, %v1390
        %v1520 = vadd.f32 %v1200, %v1392
        %v1521 = vpack.c.bf16 %v1457, %v1457
        %v1522 = vpack.c.bf16 %v1458, %v1458
        %v1523 = vpack.c.bf16 %v1459, %v1459
        %v1524 = vpack.c.bf16 %v1460, %v1460
        %v1525 = vpack.c.bf16 %v1461, %v1461
        %v1526 = vpack.c.bf16 %v1462, %v1462
        %v1527 = vpack.c.bf16 %v1463, %v1463
        %v1528 = vpack.c.bf16 %v1464, %v1464
        %v1529 = vpack.c.bf16 %v1465, %v1465
        %v1530 = vpack.c.bf16 %v1466, %v1466
        %v1531 = vpack.c.bf16 %v1467, %v1467
        %v1532 = vpack.c.bf16 %v1468, %v1468
        %v1533 = vpack.c.bf16 %v1469, %v1469
        %v1534 = vpack.c.bf16 %v1470, %v1470
        %v1535 = vpack.c.bf16 %v1471, %v1471
        %v1536 = vpack.c.bf16 %v1472, %v1472
        %v1537 = vpack.c.bf16 %v1473, %v1473
        %v1538 = vpack.c.bf16 %v1474, %v1474
        %v1539 = vpack.c.bf16 %v1475, %v1475
        %v1540 = vpack.c.bf16 %v1476, %v1476
        %v1541 = vpack.c.bf16 %v1477, %v1477
        %v1542 = vpack.c.bf16 %v1478, %v1478
        %v1543 = vpack.c.bf16 %v1479, %v1479
        %v1544 = vpack.c.bf16 %v1480, %v1480
        %v1545 = vpack.c.bf16 %v1481, %v1481
        %v1546 = vpack.c.bf16 %v1482, %v1482
        %v1547 = vpack.c.bf16 %v1483, %v1483
        %v1548 = vpack.c.bf16 %v1484, %v1484
        %v1549 = vpack.c.bf16 %v1485, %v1485
        %v1550 = vpack.c.bf16 %v1486, %v1486
        %v1551 = vpack.c.bf16 %v1487, %v1487
        %v1552 = vpack.c.bf16 %v1488, %v1488
        %v1553 = vpack.c.bf16 %v1489, %v1489
        %v1554 = vpack.c.bf16 %v1490, %v1490
        %v1555 = vpack.c.bf16 %v1491, %v1491
        %v1556 = vpack.c.bf16 %v1492, %v1492
        %v1557 = vpack.c.bf16 %v1493, %v1493
        %v1558 = vpack.c.bf16 %v1494, %v1494
        %v1559 = vpack.c.bf16 %v1495, %v1495
        %v1560 = vpack.c.bf16 %v1496, %v1496
        %v1561 = vpack.c.bf16 %v1497, %v1497
        %v1562 = vpack.c.bf16 %v1498, %v1498
        %v1563 = vpack.c.bf16 %v1499, %v1499
        %v1564 = vpack.c.bf16 %v1500, %v1500
        %v1565 = vpack.c.bf16 %v1501, %v1501
        %v1566 = vpack.c.bf16 %v1502, %v1502
        %v1567 = vpack.c.bf16 %v1503, %v1503
        %v1568 = vpack.c.bf16 %v1504, %v1504
        %v1569 = vpack.c.bf16 %v1505, %v1505
        %v1570 = vpack.c.bf16 %v1506, %v1506
        %v1571 = vpack.c.bf16 %v1507, %v1507
        %v1572 = vpack.c.bf16 %v1508, %v1508
        %v1573 = vpack.c.bf16 %v1509, %v1509
        %v1574 = vpack.c.bf16 %v1510, %v1510
        %v1575 = vpack.c.bf16 %v1511, %v1511
        %v1576 = vpack.c.bf16 %v1512, %v1512
        %v1577 = vpack.c.bf16 %v1513, %v1513
        %v1578 = vpack.c.bf16 %v1514, %v1514
        %v1579 = vpack.c.bf16 %v1515, %v1515
        %v1580 = vpack.c.bf16 %v1516, %v1516
        %v1581 = vpack.c.bf16 %v1517, %v1517
        %v1582 = vpack.c.bf16 %v1518, %v1518
        %v1583 = vpack.c.bf16 %v1519, %v1519
        %v1584 = vpack.c.bf16 %v1520, %v1520
        %v1585 = vld [vmem:[%s3] sm:$0xf]
        %v1586 = vld [vmem:[%s3 + $0x4] sm:$0xf]
        %v1587 = vld [vmem:[%s3 + $0x8] sm:$0xf]
        %v1588 = vld [vmem:[%s3 + $0xc] sm:$0xf]
        %v1589 = vld [vmem:[%s3 + $0x10] sm:$0xf]
        %v1590 = vld [vmem:[%s3 + $0x14] sm:$0xf]
        %v1591 = vld [vmem:[%s3 + $0x18] sm:$0xf]
        %v1592 = vld [vmem:[%s3 + $0x1c] sm:$0xf]
        %v1593 = vld [vmem:[%s3 + $0x20] sm:$0xf]
        %v1594 = vld [vmem:[%s3 + $0x24] sm:$0xf]
        %v1595 = vld [vmem:[%s3 + $0x28] sm:$0xf]
        %v1596 = vld [vmem:[%s3 + $0x2c] sm:$0xf]
        %v1597 = vld [vmem:[%s3 + $0x30] sm:$0xf]
        %v1598 = vld [vmem:[%s3 + $0x34] sm:$0xf]
        %v1599 = vld [vmem:[%s3 + $0x38] sm:$0xf]
        %v1600 = vld [vmem:[%s3 + $0x3c] sm:$0xf]
        %v1665 = vunpack.c.l.b16 %v1521
        %v1666 = vunpack.c.l.b16 %v1522
        %v1667 = vunpack.c.l.b16 %v1523
        %v1668 = vunpack.c.l.b16 %v1524
        %v1669 = vunpack.c.l.b16 %v1525
        %v1670 = vunpack.c.l.b16 %v1526
        %v1671 = vunpack.c.l.b16 %v1527
        %v1672 = vunpack.c.l.b16 %v1528
        %v1673 = vunpack.c.l.b16 %v1529
        %v1674 = vunpack.c.l.b16 %v1530
        %v1675 = vunpack.c.l.b16 %v1531
        %v1676 = vunpack.c.l.b16 %v1532
        %v1677 = vunpack.c.l.b16 %v1533
        %v1678 = vunpack.c.l.b16 %v1534
        %v1679 = vunpack.c.l.b16 %v1535
        %v1680 = vunpack.c.l.b16 %v1536
        %v1681 = vunpack.c.l.b16 %v1537
        %v1682 = vunpack.c.l.b16 %v1538
        %v1683 = vunpack.c.l.b16 %v1539
        %v1684 = vunpack.c.l.b16 %v1540
        %v1685 = vunpack.c.l.b16 %v1541
        %v1686 = vunpack.c.l.b16 %v1542
        %v1687 = vunpack.c.l.b16 %v1543
        %v1688 = vunpack.c.l.b16 %v1544
        %v1689 = vunpack.c.l.b16 %v1545
        %v1690 = vunpack.c.l.b16 %v1546
        %v1691 = vunpack.c.l.b16 %v1547
        %v1692 = vunpack.c.l.b16 %v1548
        %v1693 = vunpack.c.l.b16 %v1549
        %v1694 = vunpack.c.l.b16 %v1550
        %v1695 = vunpack.c.l.b16 %v1551
        %v1696 = vunpack.c.l.b16 %v1552
        %v1697 = vunpack.c.l.b16 %v1553
        %v1698 = vunpack.c.l.b16 %v1554
        %v1699 = vunpack.c.l.b16 %v1555
        %v1700 = vunpack.c.l.b16 %v1556
        %v1701 = vunpack.c.l.b16 %v1557
        %v1702 = vunpack.c.l.b16 %v1558
        %v1703 = vunpack.c.l.b16 %v1559
        %v1704 = vunpack.c.l.b16 %v1560
        %v1705 = vunpack.c.l.b16 %v1561
        %v1706 = vunpack.c.l.b16 %v1562
        %v1707 = vunpack.c.l.b16 %v1563
        %v1708 = vunpack.c.l.b16 %v1564
        %v1709 = vunpack.c.l.b16 %v1565
        %v1710 = vunpack.c.l.b16 %v1566
        %v1711 = vunpack.c.l.b16 %v1567
        %v1712 = vunpack.c.l.b16 %v1568
        %v1713 = vunpack.c.l.b16 %v1569
        %v1714 = vunpack.c.l.b16 %v1570
        %v1715 = vunpack.c.l.b16 %v1571
        %v1716 = vunpack.c.l.b16 %v1572
        %v1717 = vunpack.c.l.b16 %v1573
        %v1718 = vunpack.c.l.b16 %v1574
        %v1719 = vunpack.c.l.b16 %v1575
        %v1720 = vunpack.c.l.b16 %v1576
        %v1721 = vunpack.c.l.b16 %v1577
        %v1722 = vunpack.c.l.b16 %v1578
        %v1723 = vunpack.c.l.b16 %v1579
        %v1724 = vunpack.c.l.b16 %v1580
        %v1725 = vunpack.c.l.b16 %v1581
        %v1726 = vunpack.c.l.b16 %v1582
        %v1727 = vunpack.c.l.b16 %v1583
        %v1728 = vunpack.c.l.b16 %v1584
        %v1729 = vrot.slane %v1666, 7
        %vm1730 = vcmask 1041409
        %v1731 = vsel %vm1730, %v1729, %v1665
        %v1732 = vrot.slane %v1667, 6
        %vm1733 = vcmask 1042434
        %v1734 = vsel %vm1733, %v1732, %v1731
        %v1735 = vrot.slane %v1668, 5
        %vm1736 = vcmask 1043459
        %v1737 = vsel %vm1736, %v1735, %v1734
        %v1738 = vrot.slane %v1669, 4
        %vm1739 = vcmask 1044484
        %v1740 = vsel %vm1739, %v1738, %v1737
        %v1741 = vrot.slane %v1670, 3
        %vm1742 = vcmask 1045509
        %v1743 = vsel %vm1742, %v1741, %v1740
        %v1744 = vrot.slane %v1671, 2
        %vm1745 = vcmask 1046534
        %v1746 = vsel %vm1745, %v1744, %v1743
        %v1747 = vrot.slane %v1672, 1
        %vm1748 = vcmask 1047559
        %v1749 = vsel %vm1748, %v1747, %v1746
        %v1750 = vrot.slane %v1674, 7
        %v1751 = vsel %vm1730, %v1750, %v1673
        %v1752 = vrot.slane %v1675, 6
        %v1753 = vsel %vm1733, %v1752, %v1751
        %v1754 = vrot.slane %v1676, 5
        %v1755 = vsel %vm1736, %v1754, %v1753
        %v1756 = vrot.slane %v1677, 4
        %v1757 = vsel %vm1739, %v1756, %v1755
        %v1758 = vrot.slane %v1678, 3
        %v1759 = vsel %vm1742, %v1758, %v1757
        %v1760 = vrot.slane %v1679, 2
        %v1761 = vsel %vm1745, %v1760, %v1759
        %v1762 = vrot.slane %v1680, 1
        %v1763 = vsel %vm1748, %v1762, %v1761
        %v1764 = vrot.slane %v1682, 7
        %v1765 = vsel %vm1730, %v1764, %v1681
        %v1766 = vrot.slane %v1683, 6
        %v1767 = vsel %vm1733, %v1766, %v1765
        %v1768 = vrot.slane %v1684, 5
        %v1769 = vsel %vm1736, %v1768, %v1767
        %v1770 = vrot.slane %v1685, 4
        %v1771 = vsel %vm1739, %v1770, %v1769
        %v1772 = vrot.slane %v1686, 3
        %v1773 = vsel %vm1742, %v1772, %v1771
        %v1774 = vrot.slane %v1687, 2
        %v1775 = vsel %vm1745, %v1774, %v1773
        %v1776 = vrot.slane %v1688, 1
        %v1777 = vsel %vm1748, %v1776, %v1775
        %v1778 = vrot.slane %v1690, 7
        %v1779 = vsel %vm1730, %v1778, %v1689
        %v1780 = vrot.slane %v1691, 6
        %v1781 = vsel %vm1733, %v1780, %v1779
        %v1782 = vrot.slane %v1692, 5
        %v1783 = vsel %vm1736, %v1782, %v1781
        %v1784 = vrot.slane %v1693, 4
        %v1785 = vsel %vm1739, %v1784, %v1783
        %v1786 = vrot.slane %v1694, 3
        %v1787 = vsel %vm1742, %v1786, %v1785
        %v1788 = vrot.slane %v1695, 2
        %v1789 = vsel %vm1745, %v1788, %v1787
        %v1790 = vrot.slane %v1696, 1
        %v1791 = vsel %vm1748, %v1790, %v1789
        %v1792 = vrot.slane %v1698, 7
        %v1793 = vsel %vm1730, %v1792, %v1697
        %v1794 = vrot.slane %v1699, 6
        %v1795 = vsel %vm1733, %v1794, %v1793
        %v1796 = vrot.slane %v1700, 5
        %v1797 = vsel %vm1736, %v1796, %v1795
        %v1798 = vrot.slane %v1701, 4
        %v1799 = vsel %vm1739, %v1798, %v1797
        %v1800 = vrot.slane %v1702, 3
        %v1801 = vsel %vm1742, %v1800, %v1799
        %v1802 = vrot.slane %v1703, 2
        %v1803 = vsel %vm1745, %v1802, %v1801
        %v1804 = vrot.slane %v1704, 1
        %v1805 = vsel %vm1748, %v1804, %v1803
        %v1806 = vrot.slane %v1706, 7
        %v1807 = vsel %vm1730, %v1806, %v1705
        %v1808 = vrot.slane %v1707, 6
        %v1809 = vsel %vm1733, %v1808, %v1807
        %v1810 = vrot.slane %v1708, 5
        %v1811 = vsel %vm1736, %v1810, %v1809
        %v1812 = vrot.slane %v1709, 4
        %v1813 = vsel %vm1739, %v1812, %v1811
        %v1814 = vrot.slane %v1710, 3
        %v1815 = vsel %vm1742, %v1814, %v1813
        %v1816 = vrot.slane %v1711, 2
        %v1817 = vsel %vm1745, %v1816, %v1815
        %v1818 = vrot.slane %v1712, 1
        %v1819 = vsel %vm1748, %v1818, %v1817
        %v1820 = vrot.slane %v1714, 7
        %v1821 = vsel %vm1730, %v1820, %v1713
        %v1822 = vrot.slane %v1715, 6
        %v1823 = vsel %vm1733, %v1822, %v1821
        %v1824 = vrot.slane %v1716, 5
        %v1825 = vsel %vm1736, %v1824, %v1823
        %v1826 = vrot.slane %v1717, 4
        %v1827 = vsel %vm1739, %v1826, %v1825
        %v1828 = vrot.slane %v1718, 3
        %v1829 = vsel %vm1742, %v1828, %v1827
        %v1830 = vrot.slane %v1719, 2
        %v1831 = vsel %vm1745, %v1830, %v1829
        %v1832 = vrot.slane %v1720, 1
        %v1833 = vsel %vm1748, %v1832, %v1831
        %v1834 = vrot.slane %v1722, 7
        %v1835 = vsel %vm1730, %v1834, %v1721
        %v1836 = vrot.slane %v1723, 6
        %v1837 = vsel %vm1733, %v1836, %v1835
        %v1838 = vrot.slane %v1724, 5
        %v1839 = vsel %vm1736, %v1838, %v1837
        %v1840 = vrot.slane %v1725, 4
        %v1841 = vsel %vm1739, %v1840, %v1839
        %v1842 = vrot.slane %v1726, 3
        %v1843 = vsel %vm1742, %v1842, %v1841
        %v1844 = vrot.slane %v1727, 2
        %v1845 = vsel %vm1745, %v1844, %v1843
        %v1846 = vrot.slane %v1728, 1
        %v1847 = vsel %vm1748, %v1846, %v1845
        %v1848 = vpack.c.b16 %v1763, %v1749
        %v1849 = vpack.c.b16 %v1791, %v1777
        %v1850 = vpack.c.b16 %v1819, %v1805
        %v1851 = vpack.c.b16 %v1847, %v1833
        %v1872 = vunpack.c.l.b16 %v1585
        %v1873 = vunpack.c.l.b16 %v1586
        %v1874 = vunpack.c.l.b16 %v1587
        %v1875 = vunpack.c.l.b16 %v1588
        %v1876 = vunpack.c.l.b16 %v1589
        %v1877 = vunpack.c.l.b16 %v1590
        %v1878 = vunpack.c.l.b16 %v1591
        %v1879 = vunpack.c.l.b16 %v1592
        %v1880 = vunpack.c.l.b16 %v1593
        %v1881 = vunpack.c.l.b16 %v1594
        %v1882 = vunpack.c.l.b16 %v1595
        %v1883 = vunpack.c.l.b16 %v1596
        %v1884 = vunpack.c.l.b16 %v1597
        %v1885 = vunpack.c.l.b16 %v1598
        %v1886 = vunpack.c.l.b16 %v1599
        %v1887 = vunpack.c.l.b16 %v1600
        %v1888 = vpack.c.b16 %v1873, %v1872
        %v1889 = vpack.c.b16 %v1875, %v1874
        %v1890 = vpack.c.b16 %v1877, %v1876
        %v1891 = vpack.c.b16 %v1879, %v1878
        %v1892 = vpack.c.b16 %v1881, %v1880
        %v1893 = vpack.c.b16 %v1883, %v1882
        %v1894 = vpack.c.b16 %v1885, %v1884
        %v1895 = vpack.c.b16 %v1887, %v1886
        %1904 = vmatprep.subr.bf16.mxu0 0
        %1905 = vmatpush1.bf16.msra.mxu0 %v1895
        %1906 = vmatprep.subr.bf16.mxu0 0
        %1907 = vmatpush1.bf16.msra.mxu0 %v1894
        %1908 = vmatprep.subr.bf16.mxu0 0
        %1909 = vmatpush1.bf16.msra.mxu0 %v1893
        %1910 = vmatprep.subr.bf16.mxu0 0
        %1911 = vmatpush1.bf16.msra.mxu0 %v1892
        %1912 = vmatprep.subr.bf16.mxu0 0
        %1913 = vmatpush1.bf16.msra.mxu0 %v1891
        %1914 = vmatprep.subr.bf16.mxu0 0
        %1915 = vmatpush1.bf16.msra.mxu0 %v1890
        %1916 = vmatprep.subr.bf16.mxu0 0
        %1917 = vmatpush1.bf16.msra.mxu0 %v1889
        %1918 = vmatprep.subr.bf16.mxu0 0
        %1919 = vmatpush1.bf16.msra.mxu0 %v1888
        %1920 = vmatprep.subr.bf16.mxu0 0
        %1921 = vmatpush2.bf16.msra.mxu0 0
        %1922 = vmatprep.subr.bf16.mxu0 0
        %1923 = vmatpush2.bf16.msra.mxu0 0
        %1924 = vmatprep.subr.bf16.mxu0 0
        %1925 = vmatpush2.bf16.msra.mxu0 0
        %1926 = vmatprep.subr.bf16.mxu0 0
        %1927 = vmatpush2.bf16.msra.mxu0 0
        %1928 = vmatprep.subr.bf16.mxu0 0
        %1929 = vmatpush2.bf16.msra.mxu0 0
        %1930 = vmatprep.subr.bf16.mxu0 0
        %1931 = vmatpush2.bf16.msra.mxu0 0
        %1932 = vmatprep.subr.bf16.mxu0 0
        %1933 = vmatpush2.bf16.msra.mxu0 0
        %1934 = vmatprep.subr.bf16.mxu0 0
        %1935 = vmatpush2.bf16.msra.mxu0 0
        %1936 = vmatprep.mubr.bf16.mxu0 0
        %1937 = vmatmul.mubr.bf16.gmra.mxu0 %v1848
        %v1938 = vpop.f32.mrf.mxu0
        %v1939 = vadd.f32 0.0, %v1938
        %v1940 = vpop.f32.mrf.mxu0
        %v1941 = vpop.f32.mrf.mxu0
        %v1942 = vadd.f32 0.0, %v1941
        %v1943 = vpop.f32.mrf.mxu0
        %1944 = vmatprep.mubr.bf16.mxu0 0
        %1945 = vmatmul.mubr.bf16.gmra.mxu0 %v1849
        %v1946 = vpop.f32.mrf.mxu0
        %v1947 = vadd.f32 0.0, %v1946
        %v1948 = vpop.f32.mrf.mxu0
        %v1949 = vpop.f32.mrf.mxu0
        %v1950 = vadd.f32 0.0, %v1949
        %v1951 = vpop.f32.mrf.mxu0
        %1952 = vmatprep.mubr.bf16.mxu0 0
        %1953 = vmatmul.mubr.bf16.gmra.mxu0 %v1850
        %v1954 = vpop.f32.mrf.mxu0
        %v1955 = vadd.f32 0.0, %v1954
        %v1956 = vpop.f32.mrf.mxu0
        %v1957 = vpop.f32.mrf.mxu0
        %v1958 = vadd.f32 0.0, %v1957
        %v1959 = vpop.f32.mrf.mxu0
        %1960 = vmatprep.mubr.bf16.mxu0 0
        %1961 = vmatmul.mubr.bf16.gmra.mxu0 %v1851
        %v1962 = vpop.f32.mrf.mxu0
        %v1963 = vadd.f32 0.0, %v1962
        %v1964 = vpop.f32.mrf.mxu0
        %v1965 = vpop.f32.mrf.mxu0
        %v1966 = vadd.f32 0.0, %v1965
        %v1967 = vpop.f32.mrf.mxu0
        %1968 = vdwg.mxu0
        %v1969 = vld [vmem:[%s4] sm:$0x1]
        %v1971 = vlaneseq
        %v1972 = vshrl.u32 %v1971, 7
        %v1973 = vsub.s32 0, %v1972
        %v1974 = vrot.slane %v1969, %v1973
        %v1976 = vmul.f32 %v1939, %v1974
        %v1977 = vmul.f32 %v1942, %v1974
        %v1978 = vmul.f32 %v1947, %v1974
        %v1979 = vmul.f32 %v1950, %v1974
        %v1980 = vmul.f32 %v1955, %v1974
        %v1981 = vmul.f32 %v1958, %v1974
        %v1982 = vmul.f32 %v1963, %v1974
        %v1983 = vmul.f32 %v1966, %v1974
        %v1984 = vld [vmem:[%s5] sm:$0x1]
        %v1986 = vlaneseq
        %v1987 = vshrl.u32 %v1986, 7
        %v1988 = vsub.s32 0, %v1987
        %v1989 = vrot.slane %v1984, %v1988
        %v1991 = vadd.f32 %v1976, %v1989
        %v1992 = vadd.f32 %v1977, %v1989
        %v1993 = vadd.f32 %v1978, %v1989
        %v1994 = vadd.f32 %v1979, %v1989
        %v1995 = vadd.f32 %v1980, %v1989
        %v1996 = vadd.f32 %v1981, %v1989
        %v1997 = vadd.f32 %v1982, %v1989
        %v1998 = vadd.f32 %v1983, %v1989
        %s1999 = sld [smem:[#allocation3]]
        %v2000 = vstv %s1999
        %v2001 = vmul.f32 %v2000, %v1991
        %v2002 = vmul.f32 %v2000, %v1992
        %v2003 = vmul.f32 %v2000, %v1993
        %v2004 = vmul.f32 %v2000, %v1994
        %v2005 = vmul.f32 %v2000, %v1995
        %v2006 = vmul.f32 %v2000, %v1996
        %v2007 = vmul.f32 %v2000, %v1997
        %v2008 = vmul.f32 %v2000, %v1998
        %s2009 = sld [smem:[#allocation3 + $0x1]]
        %v2010 = vstv %s2009
        %v2011 = vmul.f32 %v2010, %v1991
        %v2012 = vmul.f32 %v2010, %v1992
        %v2013 = vmul.f32 %v2010, %v1993
        %v2014 = vmul.f32 %v2010, %v1994
        %v2015 = vmul.f32 %v2010, %v1995
        %v2016 = vmul.f32 %v2010, %v1996
        %v2017 = vmul.f32 %v2010, %v1997
        %v2018 = vmul.f32 %v2010, %v1998
        %v2019 = vadd.f32 %v2001, %v2011
        %v2020 = vadd.f32 %v2002, %v2012
        %v2021 = vadd.f32 %v2003, %v2013
        %v2022 = vadd.f32 %v2004, %v2014
        %v2023 = vadd.f32 %v2005, %v2015
        %v2024 = vadd.f32 %v2006, %v2016
        %v2025 = vadd.f32 %v2007, %v2017
        %v2026 = vadd.f32 %v2008, %v2018
        %v2027 = vmax.f32 %v2019, 0.0
        %v2028 = vmax.f32 %v2020, 0.0
        %v2029 = vmax.f32 %v2021, 0.0
        %v2030 = vmax.f32 %v2022, 0.0
        %v2031 = vmax.f32 %v2023, 0.0
        %v2032 = vmax.f32 %v2024, 0.0
        %v2033 = vmax.f32 %v2025, 0.0
        %v2034 = vmax.f32 %v2026, 0.0
        %v2035 = vpack.c.bf16 %v2028, %v2027
        %v2036 = vpack.c.bf16 %v2030, %v2029
        %v2037 = vpack.c.bf16 %v2032, %v2031
        %v2038 = vpack.c.bf16 %v2034, %v2033
        %v2039 = vld [vmem:[%s6] sm:$0xf]
        %v2040 = vld [vmem:[%s6 + $0x4] sm:$0xf]
        %v2041 = vld [vmem:[%s6 + $0x8] sm:$0xf]
        %v2042 = vld [vmem:[%s6 + $0xc] sm:$0xf]
        %v2043 = vld [vmem:[%s6 + $0x10] sm:$0xf]
        %v2044 = vld [vmem:[%s6 + $0x14] sm:$0xf]
        %v2045 = vld [vmem:[%s6 + $0x18] sm:$0xf]
        %v2046 = vld [vmem:[%s6 + $0x1c] sm:$0xf]
        %v2047 = vld [vmem:[%s6 + $0x20] sm:$0xf]
        %v2048 = vld [vmem:[%s6 + $0x24] sm:$0xf]
        %v2049 = vld [vmem:[%s6 + $0x28] sm:$0xf]
        %v2050 = vld [vmem:[%s6 + $0x2c] sm:$0xf]
        %v2051 = vld [vmem:[%s6 + $0x30] sm:$0xf]
        %v2052 = vld [vmem:[%s6 + $0x34] sm:$0xf]
        %v2053 = vld [vmem:[%s6 + $0x38] sm:$0xf]
        %v2054 = vld [vmem:[%s6 + $0x3c] sm:$0xf]
        %v2071 = vunpack.c.l.b16 %v2039
        %v2072 = vunpack.c.l.b16 %v2040
        %v2073 = vunpack.c.l.b16 %v2041
        %v2074 = vunpack.c.l.b16 %v2042
        %v2075 = vunpack.c.l.b16 %v2043
        %v2076 = vunpack.c.l.b16 %v2044
        %v2077 = vunpack.c.l.b16 %v2045
        %v2078 = vunpack.c.l.b16 %v2046
        %v2079 = vunpack.c.l.b16 %v2047
        %v2080 = vunpack.c.l.b16 %v2048
        %v2081 = vunpack.c.l.b16 %v2049
        %v2082 = vunpack.c.l.b16 %v2050
        %v2083 = vunpack.c.l.b16 %v2051
        %v2084 = vunpack.c.l.b16 %v2052
        %v2085 = vunpack.c.l.b16 %v2053
        %v2086 = vunpack.c.l.b16 %v2054
        %v2087 = vpack.c.b16 %v2072, %v2071
        %v2088 = vpack.c.b16 %v2074, %v2073
        %v2089 = vpack.c.b16 %v2076, %v2075
        %v2090 = vpack.c.b16 %v2078, %v2077
        %v2091 = vpack.c.b16 %v2080, %v2079
        %v2092 = vpack.c.b16 %v2082, %v2081
        %v2093 = vpack.c.b16 %v2084, %v2083
        %v2094 = vpack.c.b16 %v2086, %v2085
        %2103 = vmatprep.subr.bf16.mxu0 0
        %2104 = vmatpush1.bf16.msra.mxu0 %v2094
        %2105 = vmatprep.subr.bf16.mxu0 0
        %2106 = vmatpush1.bf16.msra.mxu0 %v2093
        %2107 = vmatprep.subr.bf16.mxu0 0
        %2108 = vmatpush1.bf16.msra.mxu0 %v2092
        %2109 = vmatprep.subr.bf16.mxu0 0
        %2110 = vmatpush1.bf16.msra.mxu0 %v2091
        %2111 = vmatprep.subr.bf16.mxu0 0
        %2112 = vmatpush1.bf16.msra.mxu0 %v2090
        %2113 = vmatprep.subr.bf16.mxu0 0
        %2114 = vmatpush1.bf16.msra.mxu0 %v2089
        %2115 = vmatprep.subr.bf16.mxu0 0
        %2116 = vmatpush1.bf16.msra.mxu0 %v2088
        %2117 = vmatprep.subr.bf16.mxu0 0
        %2118 = vmatpush1.bf16.msra.mxu0 %v2087
        %2119 = vmatprep.subr.bf16.mxu0 0
        %2120 = vmatpush2.bf16.msra.mxu0 0
        %2121 = vmatprep.subr.bf16.mxu0 0
        %2122 = vmatpush2.bf16.msra.mxu0 0
        %2123 = vmatprep.subr.bf16.mxu0 0
        %2124 = vmatpush2.bf16.msra.mxu0 0
        %2125 = vmatprep.subr.bf16.mxu0 0
        %2126 = vmatpush2.bf16.msra.mxu0 0
        %2127 = vmatprep.subr.bf16.mxu0 0
        %2128 = vmatpush2.bf16.msra.mxu0 0
        %2129 = vmatprep.subr.bf16.mxu0 0
        %2130 = vmatpush2.bf16.msra.mxu0 0
        %2131 = vmatprep.subr.bf16.mxu0 0
        %2132 = vmatpush2.bf16.msra.mxu0 0
        %2133 = vmatprep.subr.bf16.mxu0 0
        %2134 = vmatpush2.bf16.msra.mxu0 0
        %2135 = vmatprep.mubr.bf16.mxu0 0
        %2136 = vmatmul.mubr.bf16.gmra.mxu0 %v2035
        %v2137 = vpop.f32.mrf.mxu0
        %v2138 = vadd.f32 0.0, %v2137
        %v2139 = vpop.f32.mrf.mxu0
        %v2140 = vpop.f32.mrf.mxu0
        %v2141 = vadd.f32 0.0, %v2140
        %v2142 = vpop.f32.mrf.mxu0
        %2143 = vmatprep.mubr.bf16.mxu0 0
        %2144 = vmatmul.mubr.bf16.gmra.mxu0 %v2036
        %v2145 = vpop.f32.mrf.mxu0
        %v2146 = vadd.f32 0.0, %v2145
        %v2147 = vpop.f32.mrf.mxu0
        %v2148 = vpop.f32.mrf.mxu0
        %v2149 = vadd.f32 0.0, %v2148
        %v2150 = vpop.f32.mrf.mxu0
        %2151 = vmatprep.mubr.bf16.mxu0 0
        %2152 = vmatmul.mubr.bf16.gmra.mxu0 %v2037
        %v2153 = vpop.f32.mrf.mxu0
        %v2154 = vadd.f32 0.0, %v2153
        %v2155 = vpop.f32.mrf.mxu0
        %v2156 = vpop.f32.mrf.mxu0
        %v2157 = vadd.f32 0.0, %v2156
        %v2158 = vpop.f32.mrf.mxu0
        %2159 = vmatprep.mubr.bf16.mxu0 0
        %2160 = vmatmul.mubr.bf16.gmra.mxu0 %v2038
        %v2161 = vpop.f32.mrf.mxu0
        %v2162 = vadd.f32 0.0, %v2161
        %v2163 = vpop.f32.mrf.mxu0
        %v2164 = vpop.f32.mrf.mxu0
        %v2165 = vadd.f32 0.0, %v2164
        %v2166 = vpop.f32.mrf.mxu0
        %2167 = vdwg.mxu0
        %v2168 = vld [vmem:[%s7] sm:$0x1]
        %v2170 = vlaneseq
        %v2171 = vshrl.u32 %v2170, 7
        %v2172 = vsub.s32 0, %v2171
        %v2173 = vrot.slane %v2168, %v2172
        %v2175 = vmul.f32 %v2138, %v2173
        %v2176 = vmul.f32 %v2141, %v2173
        %v2177 = vmul.f32 %v2146, %v2173
        %v2178 = vmul.f32 %v2149, %v2173
        %v2179 = vmul.f32 %v2154, %v2173
        %v2180 = vmul.f32 %v2157, %v2173
        %v2181 = vmul.f32 %v2162, %v2173
        %v2182 = vmul.f32 %v2165, %v2173
        %v2183 = vld [vmem:[%s8] sm:$0x1]
        %v2185 = vlaneseq
        %v2186 = vshrl.u32 %v2185, 7
        %v2187 = vsub.s32 0, %v2186
        %v2188 = vrot.slane %v2183, %v2187
        %v2190 = vadd.f32 %v2175, %v2188
        %v2191 = vadd.f32 %v2176, %v2188
        %v2192 = vadd.f32 %v2177, %v2188
        %v2193 = vadd.f32 %v2178, %v2188
        %v2194 = vadd.f32 %v2179, %v2188
        %v2195 = vadd.f32 %v2180, %v2188
        %v2196 = vadd.f32 %v2181, %v2188
        %v2197 = vadd.f32 %v2182, %v2188
        %s2198 = sld [smem:[#allocation3 + $0x80]]
        %v2199 = vstv %s2198
        %v2200 = vmul.f32 %v2199, %v1991
        %v2201 = vmul.f32 %v2199, %v1992
        %v2202 = vmul.f32 %v2199, %v1993
        %v2203 = vmul.f32 %v2199, %v1994
        %v2204 = vmul.f32 %v2199, %v1995
        %v2205 = vmul.f32 %v2199, %v1996
        %v2206 = vmul.f32 %v2199, %v1997
        %v2207 = vmul.f32 %v2199, %v1998
        %s2208 = sld [smem:[#allocation3 + $0x81]]
        %v2209 = vstv %s2208
        %v2210 = vmul.f32 %v2209, %v1991
        %v2211 = vmul.f32 %v2209, %v1992
        %v2212 = vmul.f32 %v2209, %v1993
        %v2213 = vmul.f32 %v2209, %v1994
        %v2214 = vmul.f32 %v2209, %v1995
        %v2215 = vmul.f32 %v2209, %v1996
        %v2216 = vmul.f32 %v2209, %v1997
        %v2217 = vmul.f32 %v2209, %v1998
        %v2218 = vadd.f32 %v2200, %v2210
        %v2219 = vadd.f32 %v2201, %v2211
        %v2220 = vadd.f32 %v2202, %v2212
        %v2221 = vadd.f32 %v2203, %v2213
        %v2222 = vadd.f32 %v2204, %v2214
        %v2223 = vadd.f32 %v2205, %v2215
        %v2224 = vadd.f32 %v2206, %v2216
        %v2225 = vadd.f32 %v2207, %v2217
        %s2226 = sld [smem:[#allocation3 + $0x82]]
        %v2227 = vstv %s2226
        %v2228 = vmul.f32 %v2227, %v2190
        %v2229 = vmul.f32 %v2227, %v2191
        %v2230 = vmul.f32 %v2227, %v2192
        %v2231 = vmul.f32 %v2227, %v2193
        %v2232 = vmul.f32 %v2227, %v2194
        %v2233 = vmul.f32 %v2227, %v2195
        %v2234 = vmul.f32 %v2227, %v2196
        %v2235 = vmul.f32 %v2227, %v2197
        %v2236 = vadd.f32 %v2218, %v2228
        %v2237 = vadd.f32 %v2219, %v2229
        %v2238 = vadd.f32 %v2220, %v2230
        %v2239 = vadd.f32 %v2221, %v2231
        %v2240 = vadd.f32 %v2222, %v2232
        %v2241 = vadd.f32 %v2223, %v2233
        %v2242 = vadd.f32 %v2224, %v2234
        %v2243 = vadd.f32 %v2225, %v2235
        %v2244 = vmax.f32 %v2236, 0.0
        %v2245 = vmax.f32 %v2237, 0.0
        %v2246 = vmax.f32 %v2238, 0.0
        %v2247 = vmax.f32 %v2239, 0.0
        %v2248 = vmax.f32 %v2240, 0.0
        %v2249 = vmax.f32 %v2241, 0.0
        %v2250 = vmax.f32 %v2242, 0.0
        %v2251 = vmax.f32 %v2243, 0.0
        %v2252 = vpack.c.bf16 %v2245, %v2244
        %v2253 = vpack.c.bf16 %v2247, %v2246
        %v2254 = vpack.c.bf16 %v2249, %v2248
        %v2255 = vpack.c.bf16 %v2251, %v2250
        %v2256 = vld [vmem:[%s9] sm:$0xf]
        %v2257 = vld [vmem:[%s9 + $0x4] sm:$0xf]
        %v2258 = vld [vmem:[%s9 + $0x8] sm:$0xf]
        %v2259 = vld [vmem:[%s9 + $0xc] sm:$0xf]
        %v2260 = vld [vmem:[%s9 + $0x10] sm:$0xf]
        %v2261 = vld [vmem:[%s9 + $0x14] sm:$0xf]
        %v2262 = vld [vmem:[%s9 + $0x18] sm:$0xf]
        %v2263 = vld [vmem:[%s9 + $0x1c] sm:$0xf]
        %v2264 = vld [vmem:[%s9 + $0x20] sm:$0xf]
        %v2265 = vld [vmem:[%s9 + $0x24] sm:$0xf]
        %v2266 = vld [vmem:[%s9 + $0x28] sm:$0xf]
        %v2267 = vld [vmem:[%s9 + $0x2c] sm:$0xf]
        %v2268 = vld [vmem:[%s9 + $0x30] sm:$0xf]
        %v2269 = vld [vmem:[%s9 + $0x34] sm:$0xf]
        %v2270 = vld [vmem:[%s9 + $0x38] sm:$0xf]
        %v2271 = vld [vmem:[%s9 + $0x3c] sm:$0xf]
        %v2288 = vunpack.c.l.b16 %v2256
        %v2289 = vunpack.c.l.b16 %v2257
        %v2290 = vunpack.c.l.b16 %v2258
        %v2291 = vunpack.c.l.b16 %v2259
        %v2292 = vunpack.c.l.b16 %v2260
        %v2293 = vunpack.c.l.b16 %v2261
        %v2294 = vunpack.c.l.b16 %v2262
        %v2295 = vunpack.c.l.b16 %v2263
        %v2296 = vunpack.c.l.b16 %v2264
        %v2297 = vunpack.c.l.b16 %v2265
        %v2298 = vunpack.c.l.b16 %v2266
        %v2299 = vunpack.c.l.b16 %v2267
        %v2300 = vunpack.c.l.b16 %v2268
        %v2301 = vunpack.c.l.b16 %v2269
        %v2302 = vunpack.c.l.b16 %v2270
        %v2303 = vunpack.c.l.b16 %v2271
        %v2304 = vpack.c.b16 %v2289, %v2288
        %v2305 = vpack.c.b16 %v2291, %v2290
        %v2306 = vpack.c.b16 %v2293, %v2292
        %v2307 = vpack.c.b16 %v2295, %v2294
        %v2308 = vpack.c.b16 %v2297, %v2296
        %v2309 = vpack.c.b16 %v2299, %v2298
        %v2310 = vpack.c.b16 %v2301, %v2300
        %v2311 = vpack.c.b16 %v2303, %v2302
        %2320 = vmatprep.subr.bf16.mxu0 0
        %2321 = vmatpush1.bf16.msra.mxu0 %v2311
        %2322 = vmatprep.subr.bf16.mxu0 0
        %2323 = vmatpush1.bf16.msra.mxu0 %v2310
        %2324 = vmatprep.subr.bf16.mxu0 0
        %2325 = vmatpush1.bf16.msra.mxu0 %v2309
        %2326 = vmatprep.subr.bf16.mxu0 0
        %2327 = vmatpush1.bf16.msra.mxu0 %v2308
        %2328 = vmatprep.subr.bf16.mxu0 0
        %2329 = vmatpush1.bf16.msra.mxu0 %v2307
        %2330 = vmatprep.subr.bf16.mxu0 0
        %2331 = vmatpush1.bf16.msra.mxu0 %v2306
        %2332 = vmatprep.subr.bf16.mxu0 0
        %2333 = vmatpush1.bf16.msra.mxu0 %v2305
        %2334 = vmatprep.subr.bf16.mxu0 0
        %2335 = vmatpush1.bf16.msra.mxu0 %v2304
        %2336 = vmatprep.subr.bf16.mxu0 0
        %2337 = vmatpush2.bf16.msra.mxu0 0
        %2338 = vmatprep.subr.bf16.mxu0 0
        %2339 = vmatpush2.bf16.msra.mxu0 0
        %2340 = vmatprep.subr.bf16.mxu0 0
        %2341 = vmatpush2.bf16.msra.mxu0 0
        %2342 = vmatprep.subr.bf16.mxu0 0
        %2343 = vmatpush2.bf16.msra.mxu0 0
        %2344 = vmatprep.subr.bf16.mxu0 0
        %2345 = vmatpush2.bf16.msra.mxu0 0
        %2346 = vmatprep.subr.bf16.mxu0 0
        %2347 = vmatpush2.bf16.msra.mxu0 0
        %2348 = vmatprep.subr.bf16.mxu0 0
        %2349 = vmatpush2.bf16.msra.mxu0 0
        %2350 = vmatprep.subr.bf16.mxu0 0
        %2351 = vmatpush2.bf16.msra.mxu0 0
        %2352 = vmatprep.mubr.bf16.mxu0 0
        %2353 = vmatmul.mubr.bf16.gmra.mxu0 %v2252
        %v2354 = vpop.f32.mrf.mxu0
        %v2355 = vadd.f32 0.0, %v2354
        %v2356 = vpop.f32.mrf.mxu0
        %v2357 = vpop.f32.mrf.mxu0
        %v2358 = vadd.f32 0.0, %v2357
        %v2359 = vpop.f32.mrf.mxu0
        %2360 = vmatprep.mubr.bf16.mxu0 0
        %2361 = vmatmul.mubr.bf16.gmra.mxu0 %v2253
        %v2362 = vpop.f32.mrf.mxu0
        %v2363 = vadd.f32 0.0, %v2362
        %v2364 = vpop.f32.mrf.mxu0
        %v2365 = vpop.f32.mrf.mxu0
        %v2366 = vadd.f32 0.0, %v2365
        %v2367 = vpop.f32.mrf.mxu0
        %2368 = vmatprep.mubr.bf16.mxu0 0
        %2369 = vmatmul.mubr.bf16.gmra.mxu0 %v2254
        %v2370 = vpop.f32.mrf.mxu0
        %v2371 = vadd.f32 0.0, %v2370
        %v2372 = vpop.f32.mrf.mxu0
        %v2373 = vpop.f32.mrf.mxu0
        %v2374 = vadd.f32 0.0, %v2373
        %v2375 = vpop.f32.mrf.mxu0
        %2376 = vmatprep.mubr.bf16.mxu0 0
        %2377 = vmatmul.mubr.bf16.gmra.mxu0 %v2255
        %v2378 = vpop.f32.mrf.mxu0
        %v2379 = vadd.f32 0.0, %v2378
        %v2380 = vpop.f32.mrf.mxu0
        %v2381 = vpop.f32.mrf.mxu0
        %v2382 = vadd.f32 0.0, %v2381
        %v2383 = vpop.f32.mrf.mxu0
        %2384 = vdwg.mxu0
        %v2385 = vld [vmem:[%s10] sm:$0x1]
        %v2387 = vlaneseq
        %v2388 = vshrl.u32 %v2387, 7
        %v2389 = vsub.s32 0, %v2388
        %v2390 = vrot.slane %v2385, %v2389
        %v2392 = vmul.f32 %v2355, %v2390
        %v2393 = vmul.f32 %v2358, %v2390
        %v2394 = vmul.f32 %v2363, %v2390
        %v2395 = vmul.f32 %v2366, %v2390
        %v2396 = vmul.f32 %v2371, %v2390
        %v2397 = vmul.f32 %v2374, %v2390
        %v2398 = vmul.f32 %v2379, %v2390
        %v2399 = vmul.f32 %v2382, %v2390
        %v2400 = vld [vmem:[%s11] sm:$0x1]
        %v2402 = vlaneseq
        %v2403 = vshrl.u32 %v2402, 7
        %v2404 = vsub.s32 0, %v2403
        %v2405 = vrot.slane %v2400, %v2404
        %v2407 = vadd.f32 %v2392, %v2405
        %v2408 = vadd.f32 %v2393, %v2405
        %v2409 = vadd.f32 %v2394, %v2405
        %v2410 = vadd.f32 %v2395, %v2405
        %v2411 = vadd.f32 %v2396, %v2405
        %v2412 = vadd.f32 %v2397, %v2405
        %v2413 = vadd.f32 %v2398, %v2405
        %v2414 = vadd.f32 %v2399, %v2405
        %s2415 = sld [smem:[#allocation2]]
        %v2416 = vstv %s2415
        %v2417 = vmul.f32 %v2416, %v2190
        %v2418 = vmul.f32 %v2416, %v2191
        %v2419 = vmul.f32 %v2416, %v2192
        %v2420 = vmul.f32 %v2416, %v2193
        %v2421 = vmul.f32 %v2416, %v2194
        %v2422 = vmul.f32 %v2416, %v2195
        %v2423 = vmul.f32 %v2416, %v2196
        %v2424 = vmul.f32 %v2416, %v2197
        %v2425 = vadd.f32 %v2417, %v2407
        %v2426 = vadd.f32 %v2418, %v2408
        %v2427 = vadd.f32 %v2419, %v2409
        %v2428 = vadd.f32 %v2420, %v2410
        %v2429 = vadd.f32 %v2421, %v2411
        %v2430 = vadd.f32 %v2422, %v2412
        %v2431 = vadd.f32 %v2423, %v2413
        %v2432 = vadd.f32 %v2424, %v2414
        %v2433 = vpack.c.bf16 %v2426, %v2425
        %v2434 = vpack.c.bf16 %v2428, %v2427
        %v2435 = vpack.c.bf16 %v2430, %v2429
        %v2436 = vpack.c.bf16 %v2432, %v2431
        %v2441 = vunpack.c.l.b16 %v2433
        %v2442 = vunpack.c.h.b16 %v2433
        %v2443 = vunpack.c.l.b16 %v2434
        %v2444 = vunpack.c.h.b16 %v2434
        %v2445 = vunpack.c.l.b16 %v2435
        %v2446 = vunpack.c.h.b16 %v2435
        %v2447 = vunpack.c.l.b16 %v2436
        %v2448 = vunpack.c.h.b16 %v2436
        %v2449 = vpack.c.b16 %v2441, %v2441
        %v2450 = vpack.c.b16 %v2442, %v2442
        %v2451 = vpack.c.b16 %v2443, %v2443
        %v2452 = vpack.c.b16 %v2444, %v2444
        %v2453 = vpack.c.b16 %v2445, %v2445
        %v2454 = vpack.c.b16 %v2446, %v2446
        %v2455 = vpack.c.b16 %v2447, %v2447
        %v2456 = vpack.c.b16 %v2448, %v2448
        %2465 = vst [vmem:[%s430] sm:$0xf] %v2449
        %2466 = vst [vmem:[%s430 + $0x4] sm:$0xf] %v2450
        %2467 = vst [vmem:[%s430 + $0x8] sm:$0xf] %v2451
        %2468 = vst [vmem:[%s430 + $0xc] sm:$0xf] %v2452
        %2469 = vst [vmem:[%s430 + $0x10] sm:$0xf] %v2453
        %2470 = vst [vmem:[%s430 + $0x14] sm:$0xf] %v2454
        %2471 = vst [vmem:[%s430 + $0x18] sm:$0xf] %v2455
        %2472 = vst [vmem:[%s430 + $0x1c] sm:$0xf] %v2456
        %s2473 = smul.u32 8, %s25
        %p2474 = scmp.lt.s32.totalorder %s2473, 15
        %s2475 = scalar_select %p2474, %s2473, 15
        %s2476 = smul.addr %s2475, 4
        %s2477 = scalar_lea.vmem %s12, %s2476
        // Predicated region
        $region73: #{_lambda_.4} parent=67 // pred_check
          %p2478 = pneg %p300
        $region74: #{_lambda_.4} parent=67 // pred_check_branch
          %2480 = sbr.rel (%p2478) target = $region76
        $region75: #{_lambda_.4} parent=67 // pred_region
          %s2481 = smul.u32 8, %s25
        $region76: #{_lambda_.4} parent=67 // pred_fallthru
          _
      $region68: #{_lambda_.4} parent=5 // pred_fallthru
        _
      %p2482 = scmp.le.s32.totalorder 2, %s20
      // Predicated region
      $region77: #{_lambda_.4} parent=5 // pred_check
        %p2483 = pneg %p2482
      $region78: #{_lambda_.4} parent=5 // pred_check_branch
        %2485 = sbr.rel (%p2483) target = $region80
      $region79: #{_lambda_.4} parent=5 // pred_region
        %s2486 = ssub.s32 %s20, 2
        // Predicated region
        $region81: #{_lambda_.4} parent=79 // pred_check
          %p2487 = pneg %p306
        $region82: #{_lambda_.4} parent=79 // pred_check_branch
          %2489 = sbr.rel (%p2487) target = $region84
        $region83: #{_lambda_.4} parent=79 // pred_region
          %s2490 = smul.u32 8, %s26
          %p2491 = scmp.lt.s32.totalorder %s2490, 15
          %s2492 = scalar_select %p2491, %s2490, 15
          %s2493 = smul.addr %s2492, 4
          %s2494 = scalar_lea.vmem %s12, %s2493
        $region84: #{_lambda_.4} parent=79 // pred_fallthru
          _
      $region80: #{_lambda_.4} parent=5 // pred_fallthru
        _
    $region6: #{_lambda_.4} parent=1 // loop_footer
      %s24 = sadd.s32 1, %s20
    $region7: #{_lambda_.4} parent=1 // loop_footer_branch
      %19 = sbr.rel target = $region3
    $region8: #{_lambda_.4} parent=1 // loop_exit
      _
    %2495 = vsyncpa [#allocation4], 1
    %s2496 = scalar_lea.sflag [#allocation4], 1
    %2497 = vsyncpa %s2496, 1

</llo_original>
